<compile_context>
chip_gen: v6e
topology: v6e:2x2x1
jax: 0.10.0
libtpu: 0.0.40
codegen_flags: <defaults>
</compile_context>

<pallas_src>
import functools

import numpy as np
import jax
import jax.numpy as jnp
from jax.experimental import pallas as pl
from jax.experimental.pallas import tpu as pltpu


# ----------------------------------------------------------------------------
# Parameters: raw conv weights + one-time packing into the kernel-ready form
# ----------------------------------------------------------------------------
def init_params(key, c_in=1, c1=8, c2=32):
    """Raw weights of the synthetic encoder: two conv3d(k=3, s=2, p=1) layers."""
    k1, k2, k3, k4 = jax.random.split(key, 4)
    s1 = 1.0 / jnp.sqrt(27.0 * c_in)
    s2 = 1.0 / jnp.sqrt(27.0 * c1)
    return {
        "w1": jax.random.normal(k1, (3, 3, 3, c_in, c1), jnp.float32) * s1,  # (kD,kH,kW,I,O)
        "b1": jax.random.normal(k2, (c1,), jnp.float32) * 0.01,
        "w2": jax.random.normal(k3, (3, 3, 3, c1, c2), jnp.float32) * s2,
        "b2": jax.random.normal(k4, (c2,), jnp.float32) * 0.01,
    }


def _fold_hw(w, h_in, w_in, h_out, w_out, flip_h):
    """Fold stride-2/pad-1 H and W taps of a 3x3x3 conv into dense per-D-tap matrices.

    w: (kD=3, kH=3, kW=3, Cin, Cout).  If flip_h, the input-H flip of the original module is
    folded into the H selection (reads h = H - 2*ho - kh instead of 2*ho + kh - 1).
    Returns (3, h_in*w_in*Cin, h_out*w_out*Cout); out-of-range (pad) taps are zero rows.
    """
    kk = jnp.arange(3)
    if flip_h:
        h_tgt = h_in - 2 * jnp.arange(h_out)[None, None, :] - kk[:, None, None]
    else:
        h_tgt = 2 * jnp.arange(h_out)[None, None, :] + kk[:, None, None] - 1
    sh = (jnp.arange(h_in)[None, :, None] == h_tgt).astype(w.dtype)          # (3, Hin, Hout)
    w_tgt = 2 * jnp.arange(w_out)[None, None, :] + kk[:, None, None] - 1
    sw = (jnp.arange(w_in)[None, :, None] == w_tgt).astype(w.dtype)          # (3, Win, Wout)
    big = jnp.einsum("dabic,aqh,bpw->dqpihwc", w, sh, sw)
    cin, cout = w.shape[3], w.shape[4]
    return big.reshape(3, h_in * w_in * cin, h_out * w_out * cout)


def pack_params(params, x_shape, out_lanes=128):
    """One-time packing: lane-dense, stride/pad/flip-folded, tap-concatenated bf16 matrices."""
    _, cin, s2, s3, s4 = x_shape
    d, h, w = s4, s3, s2
    assert d % 4 == 0 and h % 4 == 0 and w % 4 == 0, "spatial dims must be multiples of 4"
    c1 = params["w1"].shape[-1]
    c2 = params["w2"].shape[-1]
    assert c2 <= out_lanes
    h1o, w1o = h // 2, w // 2
    h2o, w2o = h1o // 2, w1o // 2
    l0 = h * w * cin
    l1 = h1o * w1o * c1
    l2 = h2o * w2o * c2

    w1f = _fold_hw(params["w1"], h, w, h1o, w1o, flip_h=True)        # (3, l0, l1) H-flip folded
    w2f = _fold_hw(params["w2"], h1o, w1o, h2o, w2o, flip_h=False)   # (3, l1, l2)
    w1cat = w1f.reshape(3 * l0, l1)                                   # taps stacked along K
    w2cat = jnp.transpose(w2f, (1, 0, 2)).reshape(l1, 3 * l2)         # taps stacked along N

    b1big = jnp.tile(params["b1"][None, None, :], (h1o, w1o, 1)).reshape(1, l1)
    b2big = jnp.tile(params["b2"][None, None, :], (h2o, w2o, 1)).reshape(1, l2)

    pool = jnp.tile(jnp.eye(c2, dtype=jnp.float32), (h2o * w2o, 1))   # (l2, c2)
    pool = jnp.pad(pool, ((0, 0), (0, out_lanes - c2)))               # lane-dense (l2, 128)

    # TODO(synk): quantize w1cat/w2cat (int8 on v5e/v6e, fp8 on v7x) to cut the weight-DMA floor.
    return {
        "w1cat": w1cat.astype(jnp.bfloat16),
        "b1big": b1big.astype(jnp.float32),
        "w2cat": w2cat.astype(jnp.bfloat16),
        "b2big": b2big.astype(jnp.float32),
        "pool": pool.astype(jnp.float32),
    }


# ----------------------------------------------------------------------------
# Fused Pallas kernel: conv1 + conv2 + global average pool, tb batch elements / grid step
# ----------------------------------------------------------------------------
def _make_kernel(do1, tb, l0, l2):
    m1 = tb * do1

    def kernel(xph_ref, w1_ref, b1_ref, w2_ref, b2_ref, sel_ref, rsum_ref, pool_ref, o_ref):
        f32 = jnp.float32

        # ---- conv1 (3x3x3, s=2, p=1) + bias + ReLU: all 3 D-taps in ONE MXU matmul ----
        # D-flip is realized by the mirrored tap->(phase,row) mapping; output D order is
        # reversed, which the global average pool absorbs.
        a0 = xph_ref[0, :, 1:1 + do1, :]          # tap kd=0: phase 0, rows t'+1   (tb, do1, l0)
        a1 = xph_ref[1, :, 0:do1, :]              # tap kd=1: phase 1, rows t'
        a2 = xph_ref[0, :, 0:do1, :]              # tap kd=2: phase 0, rows t'
        acat = jnp.concatenate([a0, a1, a2], axis=-1).reshape(m1, 3 * l0)       # (m1, 3*l0) bf16
        pre1 = jnp.dot(acat, w1_ref[...], preferred_element_type=f32)           # (m1, l1)
        h1 = jnp.maximum(pre1 + b1_ref[...], 0.0).astype(w2_ref.dtype)          # (m1, l1) bf16

        # ---- conv2 (3x3x3, s=2, p=1): taps merged along N + one 0/1 selection matmul ----
        prod = jnp.dot(h1, w2_ref[...], preferred_element_type=f32)             # (m1, 3*l2)
        hstk = jnp.concatenate(
            [prod[:, 0:l2], prod[:, l2:2 * l2], prod[:, 2 * l2:3 * l2]], axis=0)  # (3*m1, l2)
        pre2 = jnp.dot(sel_ref[...], hstk, preferred_element_type=f32)          # (m2, l2)
        h2 = jnp.maximum(pre2 + b2_ref[...], 0.0)                               # f32 epilogue

        # ---- AdaptiveAvgPool3d((1,1,1)) + Flatten: row-sum matmul + pooling matmul ----
        red = jnp.dot(rsum_ref[...], h2, preferred_element_type=f32)            # (tb, l2), scaled
        emb = jnp.dot(red, pool_ref[...], preferred_element_type=f32)           # (tb, 128)
        o_ref[...] = emb.astype(o_ref.dtype)                                    # lane-dense store

    return kernel


@functools.partial(jax.jit, static_argnames=("c2", "batch_blocks"))
def embedding_forward(packed, x, c2, batch_blocks=1):
    """x: (N, C, s2, s3, s4) float32 (PyTorch NCDHW-style) -> (N, c2) float32 embedding.

    batch_blocks: number of grid steps the batch is split into (1 = one fat step; use 2 on v7x
    so the 'parallel' axis shards across both TensorCores).
    """
    n, cin, s2, s3, s4 = x.shape
    d, h, w = s4, s3, s2
    do1, do2 = d // 2, d // 4
    dq = d // 2 + 1
    l0 = h * w * cin
    l1 = packed["w1cat"].shape[1]
    l2 = packed["w2cat"].shape[1] // 3
    out_lanes = packed["pool"].shape[1]
    assert packed["w1cat"].shape[0] == 3 * l0
    assert l2 % c2 == 0

    nb = max(1, min(batch_blocks, n))
    tb = -(-n // nb)                     # ceil(n / nb)
    n_pad = nb * tb

    # Input prep: permute only (flips folded into weights/taps), right-pad D, 2-phase
    # space-to-depth so every in-kernel access is a static unit-stride slice.
    v = jnp.transpose(x, (0, 4, 3, 2, 1))                                   # (N, D, H, W, C)
    v = jnp.pad(v, ((0, n_pad - n), (0, 2), (0, 0), (0, 0), (0, 0)))        # pad batch + D
    xph = jnp.transpose(v.reshape(n_pad, dq, 2, l0), (2, 0, 1, 3))          # (2, Np, dq, l0)
    xph = xph.astype(jnp.bfloat16)

    # Constant conv2 D-tap selection matrix (stride-2 + zero-pad + per-batch block-diag)
    # and the per-batch D2 row-sum matrix with the pooling scale folded in.
    m1, m2 = tb * do1, tb * do2
    sel_np = np.zeros((m2, 3 * m1), np.float32)
    for b in range(tb):
        for j in range(do2):
            for kd in range(3):
                q = 2 * j + 2 - kd
                if 0 <= q < do1:
                    sel_np[b * do2 + j, kd * m1 + b * do1 + q] = 1.0
    sel = jnp.asarray(sel_np)

    inv = 1.0 / float(do2 * (l2 // c2))                                      # 1 / (D2*H2*W2)
    rsum_np = np.zeros((tb, m2), np.float32)
    for b in range(tb):
        rsum_np[b, b * do2:(b + 1) * do2] = inv
    rsum = jnp.asarray(rsum_np)

    out = pl.pallas_call(
        _make_kernel(do1, tb, l0, l2),
        out_shape=jax.ShapeDtypeStruct((n_pad, out_lanes), jnp.float32),
        grid_spec=pltpu.PrefetchScalarGridSpec(
            num_scalar_prefetch=0,
            grid=(nb,),                                                # batch blocks
            in_specs=[
                pl.BlockSpec((2, tb, dq, l0), lambda i: (0, i, 0, 0)),     # phased input volume
                pl.BlockSpec((3 * l0, l1), lambda i: (0, 0)),              # w1 (taps along K)
                pl.BlockSpec((1, l1), lambda i: (0, 0)),                   # b1
                pl.BlockSpec((l1, 3 * l2), lambda i: (0, 0)),              # w2 (taps along N)
                pl.BlockSpec((1, l2), lambda i: (0, 0)),                   # b2
                pl.BlockSpec((m2, 3 * m1), lambda i: (0, 0)),              # conv2 tap selection
                pl.BlockSpec((tb, m2), lambda i: (0, 0)),                  # per-batch D2 row-sum
                pl.BlockSpec((l2, out_lanes), lambda i: (0, 0)),           # pooling matrix (128)
            ],
            out_specs=pl.BlockSpec((tb, out_lanes), lambda i: (i, 0)),     # lane-dense slab
        ),
        compiler_params=pltpu.CompilerParams(
            dimension_semantics=("parallel",),
        ),
    )(xph, packed["w1cat"], packed["b1big"], packed["w2cat"], packed["b2big"],
      sel, rsum, packed["pool"])
    return out[:n, :c2]


# ----------------------------------------------------------------------------
# Pure-JAX reference (same semantics as the PyTorch module) for a correctness check
# ----------------------------------------------------------------------------
def _reference_forward(params, x):
    v = jnp.transpose(x, (0, 4, 3, 2, 1))          # NCDHW view of permute(0,1,4,3,2) -> NDHWC
    v = jnp.flip(v, axis=(1, 2))                   # == x.flip(2).flip(3)
    dn = ("NDHWC", "DHWIO", "NDHWC")
    h1 = jax.lax.conv_general_dilated(
        v, params["w1"], window_strides=(2, 2, 2), padding=((1, 1), (1, 1), (1, 1)),
        dimension_numbers=dn, precision=jax.lax.Precision.HIGHEST)
    h1 = jnp.maximum(h1 + params["b1"], 0.0)
    h2 = jax.lax.conv_general_dilated(
        h1, params["w2"], window_strides=(2, 2, 2), padding=((1, 1), (1, 1), (1, 1)),
        dimension_numbers=dn, precision=jax.lax.Precision.HIGHEST)
    h2 = jnp.maximum(h2 + params["b2"], 0.0)
    return jnp.mean(h2, axis=(1, 2, 3))            # AdaptiveAvgPool3d((1,1,1)) + Flatten


if __name__ == "__main__":
    key = jax.random.PRNGKey(0)
    pkey, xkey = jax.random.split(key)

    params = init_params(pkey)

    # small CT-like volume: batch=2, 1 channel, 16^3 spatial
    x = jax.random.normal(xkey, (2, 1, 16, 16, 16), dtype=jnp.float32)

    packed = pack_params(params, x.shape)          # one-time weight packing (init-time)

    emb = embedding_forward(packed, x, c2=32)      # v7x: pass batch_blocks=2 for 2-TC sharding
    emb = jax.block_until_ready(emb)

    assert emb.shape == (2, 32), emb.shape
    assert emb.dtype == jnp.float32
    assert bool(jnp.all(jnp.isfinite(emb)))

    # correctness check against the plain-JAX f32 reference (kernel uses bf16 matmul inputs)
    ref = _reference_forward(params, x)
    err = float(jnp.max(jnp.abs(emb - ref)))
    assert err < 6e-2, f"max abs err vs reference: {err}"

    print("KERNEL_OK")
</pallas_src>

<mosaic_0001>
module attributes {stable_mosaic.version = 11 : i64} {
  func.func @kernel(%arg0: i32, %arg1: memref<2x2x9x256xbf16, #tpu.memory_space<vmem>>, %arg2: memref<768x512xbf16, #tpu.memory_space<vmem>>, %arg3: memref<1x512xf32, #tpu.memory_space<vmem>>, %arg4: memref<512x1536xbf16, #tpu.memory_space<vmem>>, %arg5: memref<1x512xf32, #tpu.memory_space<vmem>>, %arg6: memref<8x48xf32, #tpu.memory_space<vmem>>, %arg7: memref<2x8xf32, #tpu.memory_space<vmem>>, %arg8: memref<512x128xf32, #tpu.memory_space<vmem>>, %arg9: memref<2x128xf32, #tpu.memory_space<vmem>>) attributes {dimension_semantics = [#tpu.dimension_semantics<parallel>], iteration_bounds = array<i64: 1>, scalar_prefetch = 0 : i64, scratch_operands = 0 : i64, tpu.core_type = #tpu.core_type<tc>, window_params = [{transform_indices = @transform_0, window_bounds = array<i64: 2, 2, 9, 256>}, {pipeline_mode = #tpu.pipeline_mode<synchronous>, transform_indices = @transform_1, window_bounds = array<i64: 768, 512>}, {pipeline_mode = #tpu.pipeline_mode<synchronous>, transform_indices = @transform_2, window_bounds = array<i64: 1, 512>}, {pipeline_mode = #tpu.pipeline_mode<synchronous>, transform_indices = @transform_3, window_bounds = array<i64: 512, 1536>}, {pipeline_mode = #tpu.pipeline_mode<synchronous>, transform_indices = @transform_4, window_bounds = array<i64: 1, 512>}, {pipeline_mode = #tpu.pipeline_mode<synchronous>, transform_indices = @transform_5, window_bounds = array<i64: 8, 48>}, {pipeline_mode = #tpu.pipeline_mode<synchronous>, transform_indices = @transform_6, window_bounds = array<i64: 2, 8>}, {pipeline_mode = #tpu.pipeline_mode<synchronous>, transform_indices = @transform_7, window_bounds = array<i64: 512, 128>}, {transform_indices = @transform_8, window_bounds = array<i64: 2, 128>}]} {
    %c0 = arith.constant 0 : index
    %c0_0 = arith.constant 0 : index
    %c1 = arith.constant 1 : index
    %c0_1 = arith.constant 0 : index
    %0 = vector.load %arg1[%c0, %c0_0, %c1, %c0_1] : memref<2x2x9x256xbf16, #tpu.memory_space<vmem>>, vector<1x2x8x256xbf16>
    %1 = vector.shape_cast %0 : vector<1x2x8x256xbf16> to vector<2x8x256xbf16>
    %c1_2 = arith.constant 1 : index
    %c0_3 = arith.constant 0 : index
    %c0_4 = arith.constant 0 : index
    %c0_5 = arith.constant 0 : index
    %2 = vector.load %arg1[%c1_2, %c0_3, %c0_4, %c0_5] : memref<2x2x9x256xbf16, #tpu.memory_space<vmem>>, vector<1x2x8x256xbf16>
    %3 = vector.shape_cast %2 : vector<1x2x8x256xbf16> to vector<2x8x256xbf16>
    %c0_6 = arith.constant 0 : index
    %c0_7 = arith.constant 0 : index
    %c0_8 = arith.constant 0 : index
    %c0_9 = arith.constant 0 : index
    %4 = vector.load %arg1[%c0_6, %c0_7, %c0_8, %c0_9] : memref<2x2x9x256xbf16, #tpu.memory_space<vmem>>, vector<1x2x8x256xbf16>
    %5 = vector.shape_cast %4 : vector<1x2x8x256xbf16> to vector<2x8x256xbf16>
    %6 = tpu.concatenate %1, %3, %5 in 2 : vector<2x8x256xbf16>, vector<2x8x256xbf16>, vector<2x8x256xbf16> -> vector<2x8x768xbf16>
    %7 = vector.shape_cast %6 : vector<2x8x768xbf16> to vector<16x768xbf16>
    %c0_10 = arith.constant 0 : index
    %c0_11 = arith.constant 0 : index
    %8 = vector.load %arg2[%c0_10, %c0_11] : memref<768x512xbf16, #tpu.memory_space<vmem>>, vector<768x512xbf16>
    %cst = arith.constant dense<0.000000e+00> : vector<16x512xf32>
    %9 = tpu.matmul %7, %8, %cst {dimension_numbers = #tpu.dot_dimension_numbers<[1], [0], [0], [1], [0, 0, 1, 1], [], []>} : vector<16x768xbf16>, vector<768x512xbf16>, vector<16x512xf32> -> vector<16x512xf32>
    %c0_12 = arith.constant 0 : index
    %c0_13 = arith.constant 0 : index
    %10 = vector.load %arg3[%c0_12, %c0_13] : memref<1x512xf32, #tpu.memory_space<vmem>>, vector<1x512xf32>
    %11 = vector.broadcast %10 : vector<1x512xf32> to vector<16x512xf32>
    %12 = arith.addf %9, %11 : vector<16x512xf32>
    %cst_14 = arith.constant 0.000000e+00 : f32
    %13 = vector.broadcast %cst_14 : f32 to vector<16x512xf32>
    %14 = arith.maximumf %12, %13 : vector<16x512xf32>
    %15 = arith.truncf %14 : vector<16x512xf32> to vector<16x512xbf16>
    %c0_15 = arith.constant 0 : index
    %c0_16 = arith.constant 0 : index
    %16 = vector.load %arg4[%c0_15, %c0_16] : memref<512x1536xbf16, #tpu.memory_space<vmem>>, vector<512x1536xbf16>
    %cst_17 = arith.constant dense<0.000000e+00> : vector<16x1536xf32>
    %17 = tpu.matmul %15, %16, %cst_17 {dimension_numbers = #tpu.dot_dimension_numbers<[1], [0], [0], [1], [0, 0, 1, 1], [], []>} : vector<16x512xbf16>, vector<512x1536xbf16>, vector<16x1536xf32> -> vector<16x1536xf32>
    %18 = vector.extract_strided_slice %17 {offsets = [0, 0], sizes = [16, 512], strides = [1, 1]} : vector<16x1536xf32> to vector<16x512xf32>
    %19 = vector.extract_strided_slice %17 {offsets = [0, 512], sizes = [16, 512], strides = [1, 1]} : vector<16x1536xf32> to vector<16x512xf32>
    %20 = vector.extract_strided_slice %17 {offsets = [0, 1024], sizes = [16, 512], strides = [1, 1]} : vector<16x1536xf32> to vector<16x512xf32>
    %21 = tpu.concatenate %18, %19, %20 in 0 : vector<16x512xf32>, vector<16x512xf32>, vector<16x512xf32> -> vector<48x512xf32>
    %c0_18 = arith.constant 0 : index
    %c0_19 = arith.constant 0 : index
    %22 = vector.load %arg6[%c0_18, %c0_19] : memref<8x48xf32, #tpu.memory_space<vmem>>, vector<8x48xf32>
    %cst_20 = arith.constant dense<0.000000e+00> : vector<8x512xf32>
    %23 = tpu.matmul %22, %21, %cst_20 {dimension_numbers = #tpu.dot_dimension_numbers<[1], [0], [0], [1], [0, 0, 1, 1], [], []>} : vector<8x48xf32>, vector<48x512xf32>, vector<8x512xf32> -> vector<8x512xf32>
    %c0_21 = arith.constant 0 : index
    %c0_22 = arith.constant 0 : index
    %24 = vector.load %arg5[%c0_21, %c0_22] : memref<1x512xf32, #tpu.memory_space<vmem>>, vector<1x512xf32>
    %25 = vector.broadcast %24 : vector<1x512xf32> to vector<8x512xf32>
    %26 = arith.addf %23, %25 : vector<8x512xf32>
    %cst_23 = arith.constant 0.000000e+00 : f32
    %27 = vector.broadcast %cst_23 : f32 to vector<8x512xf32>
    %28 = arith.maximumf %26, %27 : vector<8x512xf32>
    %c0_24 = arith.constant 0 : index
    %c0_25 = arith.constant 0 : index
    %29 = vector.load %arg7[%c0_24, %c0_25] : memref<2x8xf32, #tpu.memory_space<vmem>>, vector<2x8xf32>
    %cst_26 = arith.constant dense<0.000000e+00> : vector<2x512xf32>
    %30 = tpu.matmul %29, %28, %cst_26 {dimension_numbers = #tpu.dot_dimension_numbers<[1], [0], [0], [1], [0, 0, 1, 1], [], []>} : vector<2x8xf32>, vector<8x512xf32>, vector<2x512xf32> -> vector<2x512xf32>
    %c0_27 = arith.constant 0 : index
    %c0_28 = arith.constant 0 : index
    %31 = vector.load %arg8[%c0_27, %c0_28] : memref<512x128xf32, #tpu.memory_space<vmem>>, vector<512x128xf32>
    %cst_29 = arith.constant dense<0.000000e+00> : vector<2x128xf32>
    %32 = tpu.matmul %30, %31, %cst_29 {dimension_numbers = #tpu.dot_dimension_numbers<[1], [0], [0], [1], [0, 0, 1, 1], [], []>} : vector<2x512xf32>, vector<512x128xf32>, vector<2x128xf32> -> vector<2x128xf32>
    %c0_30 = arith.constant 0 : index
    %c0_31 = arith.constant 0 : index
    %33 = vector.load %arg9[%c0_30, %c0_31] : memref<2x128xf32, #tpu.memory_space<vmem>>, vector<2x128xf32>
    tpu.vector_store %arg9[%c0_30, %c0_31], %32 {strides = array<i32>} : memref<2x128xf32, #tpu.memory_space<vmem>>, vector<2x128xf32>,
    return
  }
  func.func @transform_0(%arg0: i32) -> (i32, i32, i32, i32) {
    %c0_i32 = arith.constant 0 : i32
    %c0_i32_0 = arith.constant 0 : i32
    %c0_i32_1 = arith.constant 0 : i32
    %c0_i32_2 = arith.constant 0 : i32
    return %c0_i32, %arg0, %c0_i32_0, %c0_i32_1 : i32, i32, i32, i32
  }
  func.func @transform_1(%arg0: i32) -> (i32, i32) {
    %c0_i32 = arith.constant 0 : i32
    %c0_i32_0 = arith.constant 0 : i32
    %c0_i32_1 = arith.constant 0 : i32
    return %c0_i32, %c0_i32_0 : i32, i32
  }
  func.func @transform_2(%arg0: i32) -> (i32, i32) {
    %c0_i32 = arith.constant 0 : i32
    %c0_i32_0 = arith.constant 0 : i32
    %c0_i32_1 = arith.constant 0 : i32
    return %c0_i32, %c0_i32_0 : i32, i32
  }
  func.func @transform_3(%arg0: i32) -> (i32, i32) {
    %c0_i32 = arith.constant 0 : i32
    %c0_i32_0 = arith.constant 0 : i32
    %c0_i32_1 = arith.constant 0 : i32
    return %c0_i32, %c0_i32_0 : i32, i32
  }
  func.func @transform_4(%arg0: i32) -> (i32, i32) {
    %c0_i32 = arith.constant 0 : i32
    %c0_i32_0 = arith.constant 0 : i32
    %c0_i32_1 = arith.constant 0 : i32
    return %c0_i32, %c0_i32_0 : i32, i32
  }
  func.func @transform_5(%arg0: i32) -> (i32, i32) {
    %c0_i32 = arith.constant 0 : i32
    %c0_i32_0 = arith.constant 0 : i32
    %c0_i32_1 = arith.constant 0 : i32
    return %c0_i32, %c0_i32_0 : i32, i32
  }
  func.func @transform_6(%arg0: i32) -> (i32, i32) {
    %c0_i32 = arith.constant 0 : i32
    %c0_i32_0 = arith.constant 0 : i32
    %c0_i32_1 = arith.constant 0 : i32
    return %c0_i32, %c0_i32_0 : i32, i32
  }
  func.func @transform_7(%arg0: i32) -> (i32, i32) {
    %c0_i32 = arith.constant 0 : i32
    %c0_i32_0 = arith.constant 0 : i32
    %c0_i32_1 = arith.constant 0 : i32
    return %c0_i32, %c0_i32_0 : i32, i32
  }
  func.func @transform_8(%arg0: i32) -> (i32, i32) {
    %c0_i32 = arith.constant 0 : i32
    %c0_i32_0 = arith.constant 0 : i32
    return %arg0, %c0_i32 : i32, i32
  }
}

</mosaic_0001>

<llo_original>
// kernel: embedding_forward.1
$region0: #{embedding_forward.1}
  #allocation0 [shape = 'u32[]', space=smem, size = 0x4, offset = 0x4, fixed_abs, tag = 'smem constant byte address 0x4 - core index']
  #allocation1 [shape = 'u32[144,128]{1,0:T(1,128)}', space=vmem, size = 0x12000, scoped, tag = 'internal scratch']
  %s0 = inlined_call_operand.vmem [shape: bf16[2,2,9,256], index: 0, kind: input, shape index: {}]
  %s1 = inlined_call_operand.vmem [shape: bf16[768,512], index: 1, kind: input, shape index: {}]
  %s2 = inlined_call_operand.hbm [shape: f32[1,512], index: 2, kind: input, shape index: {}]
  %s3 = inlined_call_operand.hbm [shape: bf16[512,1536], index: 3, kind: input, shape index: {}]
  %s4 = inlined_call_operand.hbm [shape: f32[1,512], index: 4, kind: input, shape index: {}]
  %s5 = inlined_call_operand.hbm [shape: f32[8,48], index: 5, kind: input, shape index: {}]
  %s6 = inlined_call_operand.hbm [shape: f32[2,8], index: 6, kind: input, shape index: {}]
  %s7 = inlined_call_operand.hbm [shape: f32[512,128], index: 7, kind: input, shape index: {}]
  %s8 = inlined_call_operand.hbm [shape: f32[2,128], index: 8, kind: output, shape index: {}]
  %s9 = sld [smem:[#allocation0]]
  $region66: #{embedding_forward.1} parent=0
    _
  %s11 = ssub.s32 1, %s9
  %s12 = scalar_select 0, %s11, %s9
  $region1: #{embedding_forward.1} parent=0
    #allocation2 [shape = 'u8[2048]{0}', space=vmem, size = 0x800, scoped, tag = 'input window, operand 2, single buffered']
    #allocation3 [shape = 's32[1]{0}', space=sflag, size = 0x4, scoped, tag = 'scoped memory for embedding_forward.1']
    #allocation4 [shape = 's32[1]{0}', space=sflag, size = 0x4, scoped, tag = 'scoped memory for embedding_forward.1']
    #allocation5 [shape = 'u8[1572864]{0}', space=vmem, size = 0x180000, scoped, tag = 'input window, operand 3, single buffered']
    #allocation6 [shape = 's32[1]{0}', space=sflag, size = 0x4, scoped, tag = 'scoped memory for embedding_forward.1']
    #allocation7 [shape = 'u8[2048]{0}', space=vmem, size = 0x800, scoped, tag = 'input window, operand 4, single buffered']
    #allocation8 [shape = 'u8[4096]{0}', space=vmem, size = 0x1000, scoped, tag = 'input window, operand 5, single buffered']
    #allocation9 [shape = 's32[1]{0}', space=sflag, size = 0x4, scoped, tag = 'scoped memory for embedding_forward.1']
    #allocation10 [shape = 'u8[1024]{0}', space=vmem, size = 0x400, scoped, tag = 'input window, operand 6, single buffered']
    #allocation11 [shape = 'u8[262144]{0}', space=vmem, size = 0x40000, scoped, tag = 'input window, operand 7, single buffered']
    #allocation12 [shape = 's32[1]{0}', space=sflag, size = 0x4, scoped, tag = 'scoped memory for embedding_forward.1']
    #allocation13 [shape = 'u8[1024]{0}', space=vmem, size = 0x400, scoped, tag = 'output window, operand 0, single buffered']
    %13 = vsyncpa [#allocation3], 0
    %14 = vsyncpa [#allocation6], 0
    %15 = vsyncpa [#allocation9], 0
    %16 = vsyncpa [#allocation12], 0
    %17 = vsyncpa [#allocation4], 0
    // Predicated region
    $region2: #{embedding_forward.1} parent=1 // pred_check
      _
    $region3: #{embedding_forward.1} parent=1 // pred_check_branch
      %19 = sbr.rel (0) target = $region5
    $region4: #{embedding_forward.1} parent=1 // pred_region
      _
    $region5: #{embedding_forward.1} parent=1 // pred_fallthru
      _
    // Predicated region
    $region6: #{embedding_forward.1} parent=1 // pred_check
      _
    $region7: #{embedding_forward.1} parent=1 // pred_check_branch
      %21 = sbr.rel (0) target = $region9
    $region8: #{embedding_forward.1} parent=1 // pred_region
      _
    $region9: #{embedding_forward.1} parent=1 // pred_fallthru
      _
    // Predicated region
    $region10: #{embedding_forward.1} parent=1 // pred_check
      _
    $region11: #{embedding_forward.1} parent=1 // pred_check_branch
      %23 = sbr.rel (0) target = $region13
    $region12: #{embedding_forward.1} parent=1 // pred_region
      %s25 = ssub.s32 64, 64
      %26 = vsyncadd [#allocation3], %s25
      %s28 = sshll.u32 [#allocation2], 4
      %s29 = int_to_ptr.vmem [resolvable:$true] %s28
      %31 = dma.hbm_to_vmem [thread:$0]  %s2, 64, %s29, [#allocation3]
    $region13: #{embedding_forward.1} parent=1 // pred_fallthru
      _
    // Predicated region
    $region14: #{embedding_forward.1} parent=1 // pred_check
      _
    $region15: #{embedding_forward.1} parent=1 // pred_check_branch
      %33 = sbr.rel (0) target = $region17
    $region16: #{embedding_forward.1} parent=1 // pred_region
      %s35 = ssub.s32 49152, 49152
      %36 = vsyncadd [#allocation6], %s35
      %s37 = sshll.u32 [#allocation5], 4
      %s38 = int_to_ptr.vmem [resolvable:$true] %s37
      %43 = dma.hbm_to_vmem [thread:$0]  %s3, 49152, %s38, [#allocation6], 768, 768, 48
    $region17: #{embedding_forward.1} parent=1 // pred_fallthru
      _
    // Predicated region
    $region18: #{embedding_forward.1} parent=1 // pred_check
      _
    $region19: #{embedding_forward.1} parent=1 // pred_check_branch
      %45 = sbr.rel (0) target = $region21
    $region20: #{embedding_forward.1} parent=1 // pred_region
      %s47 = ssub.s32 64, 64
      %48 = vsyncadd [#allocation6], %s47
      %s50 = sshll.u32 [#allocation7], 4
      %s51 = int_to_ptr.vmem [resolvable:$true] %s50
      %53 = dma.hbm_to_vmem [thread:$0]  %s4, 64, %s51, [#allocation6]
    $region21: #{embedding_forward.1} parent=1 // pred_fallthru
      _
    // Predicated region
    $region22: #{embedding_forward.1} parent=1 // pred_check
      _
    $region23: #{embedding_forward.1} parent=1 // pred_check_branch
      %55 = sbr.rel (0) target = $region25
    $region24: #{embedding_forward.1} parent=1 // pred_region
      %s57 = ssub.s32 128, 128
      %58 = vsyncadd [#allocation9], %s57
      %s60 = sshll.u32 [#allocation8], 4
      %s61 = int_to_ptr.vmem [resolvable:$true] %s60
      %63 = dma.hbm_to_vmem [thread:$0]  %s5, 128, %s61, [#allocation9]
    $region25: #{embedding_forward.1} parent=1 // pred_fallthru
      _
    // Predicated region
    $region26: #{embedding_forward.1} parent=1 // pred_check
      _
    $region27: #{embedding_forward.1} parent=1 // pred_check_branch
      %65 = sbr.rel (0) target = $region29
    $region28: #{embedding_forward.1} parent=1 // pred_region
      %s67 = ssub.s32 32, 32
      %68 = vsyncadd [#allocation9], %s67
      %s70 = sshll.u32 [#allocation10], 4
      %s71 = int_to_ptr.vmem [resolvable:$true] %s70
      %73 = dma.hbm_to_vmem [thread:$0]  %s6, 32, %s71, [#allocation9]
    $region29: #{embedding_forward.1} parent=1 // pred_fallthru
      _
    // Predicated region
    $region30: #{embedding_forward.1} parent=1 // pred_check
      _
    $region31: #{embedding_forward.1} parent=1 // pred_check_branch
      %75 = sbr.rel (0) target = $region33
    $region32: #{embedding_forward.1} parent=1 // pred_region
      %s77 = ssub.s32 8192, 8192
      %78 = vsyncadd [#allocation12], %s77
      %s79 = sshll.u32 [#allocation11], 4
      %s80 = int_to_ptr.vmem [resolvable:$true] %s79
      %85 = dma.hbm_to_vmem [thread:$0]  %s7, 8192, %s80, [#allocation12], 128, 128, 8
    $region33: #{embedding_forward.1} parent=1 // pred_fallthru
      _
    // Predicated region
    $region34: #{embedding_forward.1} parent=1 // pred_check
      _
    $region35: #{embedding_forward.1} parent=1 // pred_check_branch
      %87 = sbr.rel (0) target = $region37
    $region36: #{embedding_forward.1} parent=1 // pred_region
      %88 = dma.done [#allocation3], 64
    $region37: #{embedding_forward.1} parent=1 // pred_fallthru
      _
    // Predicated region
    $region38: #{embedding_forward.1} parent=1 // pred_check
      _
    $region39: #{embedding_forward.1} parent=1 // pred_check_branch
      %90 = sbr.rel (0) target = $region41
    $region40: #{embedding_forward.1} parent=1 // pred_region
      %91 = dma.done [#allocation6], 49152
    $region41: #{embedding_forward.1} parent=1 // pred_fallthru
      _
    // Predicated region
    $region42: #{embedding_forward.1} parent=1 // pred_check
      _
    $region43: #{embedding_forward.1} parent=1 // pred_check_branch
      %93 = sbr.rel (0) target = $region45
    $region44: #{embedding_forward.1} parent=1 // pred_region
      %94 = dma.done [#allocation6], 64
    $region45: #{embedding_forward.1} parent=1 // pred_fallthru
      _
    // Predicated region
    $region46: #{embedding_forward.1} parent=1 // pred_check
      _
    $region47: #{embedding_forward.1} parent=1 // pred_check_branch
      %96 = sbr.rel (0) target = $region49
    $region48: #{embedding_forward.1} parent=1 // pred_region
      %97 = dma.done [#allocation9], 128
    $region49: #{embedding_forward.1} parent=1 // pred_fallthru
      _
    // Predicated region
    $region50: #{embedding_forward.1} parent=1 // pred_check
      _
    $region51: #{embedding_forward.1} parent=1 // pred_check_branch
      %99 = sbr.rel (0) target = $region53
    $region52: #{embedding_forward.1} parent=1 // pred_region
      %100 = dma.done [#allocation9], 32
    $region53: #{embedding_forward.1} parent=1 // pred_fallthru
      _
    // Predicated region
    $region54: #{embedding_forward.1} parent=1 // pred_check
      _
    $region55: #{embedding_forward.1} parent=1 // pred_check_branch
      %102 = sbr.rel (0) target = $region57
    $region56: #{embedding_forward.1} parent=1 // pred_region
      %103 = dma.done [#allocation12], 8192
    $region57: #{embedding_forward.1} parent=1 // pred_fallthru
      _
    %v104 = vld [vmem:[%s0] sm:$0xff]
    %v105 = vld [vmem:[%s0 + $0x8] sm:$0x11]
    %v106 = vld [vmem:[%s0 + $0x10] sm:$0xff]
    %v107 = vld [vmem:[%s0 + $0x18] sm:$0x11]
    %s108 = scalar_lea.vmem %s0, 32
    %v109 = vld [vmem:[%s108] sm:$0xff]
    %v110 = vld [vmem:[%s108 + $0x10] sm:$0xff]
    %v115 = vunpack.c.l.b16 %v104
    %v116 = vunpack.c.h.b16 %v104
    %v117 = vunpack.c.l.b16 %v105
    %v118 = vunpack.c.h.b16 %v105
    %v119 = vunpack.c.l.b16 %v106
    %v120 = vunpack.c.h.b16 %v106
    %v121 = vunpack.c.l.b16 %v107
    %v122 = vunpack.c.h.b16 %v107
    %v125 = vunpack.c.l.b16 %v109
    %v126 = vunpack.c.h.b16 %v109
    %v127 = vunpack.c.l.b16 %v110
    %v128 = vunpack.c.h.b16 %v110
    %v129 = vpack.c.b16 %v125, %v125
    %v130 = vpack.c.b16 %v126, %v126
    %v131 = vpack.c.b16 %v127, %v127
    %v132 = vpack.c.b16 %v128, %v128
    %v134 = vshrl.u32 %v129, 16
    %v136 = vrot.slane %v134, 7
    %v137 = vshll.u32 %v129, 16
    %v139 = vor.u32 %v136, %v137
    %v141 = vshrl.u32 %v130, 16
    %v143 = vrot.slane %v141, 7
    %v144 = vshll.u32 %v130, 16
    %v146 = vor.u32 %v143, %v144
    %v148 = vshrl.u32 %v131, 16
    %v150 = vrot.slane %v148, 7
    %v151 = vshll.u32 %v131, 16
    %v153 = vor.u32 %v150, %v151
    %v155 = vshrl.u32 %v132, 16
    %v157 = vrot.slane %v155, 7
    %v158 = vshll.u32 %v132, 16
    %v160 = vor.u32 %v157, %v158
    %v161 = vpack.c.b16 %v115, %v115
    %v162 = vpack.c.b16 %v116, %v116
    %v163 = vpack.c.b16 %v119, %v119
    %v164 = vpack.c.b16 %v120, %v120
    %v166 = vshrl.u32 %v161, 16
    %v168 = vrot.slane %v166, 7
    %v169 = vshll.u32 %v161, 16
    %v171 = vor.u32 %v168, %v169
    %v173 = vshrl.u32 %v162, 16
    %v175 = vrot.slane %v173, 7
    %v176 = vshll.u32 %v162, 16
    %v178 = vor.u32 %v175, %v176
    %v180 = vshrl.u32 %v163, 16
    %v182 = vrot.slane %v180, 7
    %v183 = vshll.u32 %v163, 16
    %v185 = vor.u32 %v182, %v183
    %v187 = vshrl.u32 %v164, 16
    %v189 = vrot.slane %v187, 7
    %v190 = vshll.u32 %v164, 16
    %v192 = vor.u32 %v189, %v190
    %v193 = vunpack.c.l.b16 %v139
    %v194 = vunpack.c.l.b16 %v146
    %v195 = vunpack.c.l.b16 %v171
    %v196 = vunpack.c.l.b16 %v178
    %v197 = vunpack.c.h.b16 %v139
    %v198 = vunpack.c.h.b16 %v146
    %v199 = vunpack.c.h.b16 %v171
    %v200 = vunpack.c.h.b16 %v178
    %v201 = vunpack.c.l.b16 %v153
    %v202 = vunpack.c.l.b16 %v160
    %v203 = vunpack.c.l.b16 %v185
    %v204 = vunpack.c.l.b16 %v192
    %v205 = vunpack.c.h.b16 %v153
    %v206 = vunpack.c.h.b16 %v160
    %v207 = vunpack.c.h.b16 %v185
    %v208 = vunpack.c.h.b16 %v192
    %v209 = vpack.c.b16 %v116, %v115
    %v210 = vpack.c.b16 %v194, %v193
    %v211 = vpack.c.b16 %v196, %v195
    %v212 = vpack.c.b16 %v118, %v117
    %v213 = vpack.c.b16 %v198, %v197
    %v214 = vpack.c.b16 %v200, %v199
    %v215 = vpack.c.b16 %v120, %v119
    %v216 = vpack.c.b16 %v202, %v201
    %v217 = vpack.c.b16 %v204, %v203
    %v218 = vpack.c.b16 %v122, %v121
    %v219 = vpack.c.b16 %v206, %v205
    %v220 = vpack.c.b16 %v208, %v207
    %vm221 = vsmask.f32 3328
    %vm222 = vsmask.f32 7440
    %vm223 = vmor %vm221, %vm222
    %v225 = vshrl.u32 %v209, 16
    %v227 = vrot.slane %v225, 4
    %v228 = vshll.u32 %v209, 16
    %v230 = vrot.slane %v228, 5
    %v231 = vor.u32 %v227, %v230
    %v232 = vrot.slane %v231, 4
    %v234 = vshll.u32 %v212, 16
    %v236 = vrot.slane %v234, 5
    %v237 = vsel %vm223, %v232, %v236
    %v239 = vshrl.u32 %v210, 16
    %v241 = vrot.slane %v239, 4
    %v242 = vshll.u32 %v210, 16
    %v244 = vrot.slane %v242, 5
    %v245 = vor.u32 %v241, %v244
    %v246 = vrot.slane %v245, 4
    %v248 = vshll.u32 %v213, 16
    %v250 = vrot.slane %v248, 5
    %v251 = vsel %vm223, %v246, %v250
    %v253 = vshrl.u32 %v211, 16
    %v255 = vrot.slane %v253, 4
    %v256 = vshll.u32 %v211, 16
    %v258 = vrot.slane %v256, 5
    %v259 = vor.u32 %v255, %v258
    %v260 = vrot.slane %v259, 4
    %v262 = vshll.u32 %v214, 16
    %v264 = vrot.slane %v262, 5
    %v265 = vsel %vm223, %v260, %v264
    %v267 = vshrl.u32 %v215, 16
    %v269 = vrot.slane %v267, 4
    %v270 = vshll.u32 %v215, 16
    %v272 = vrot.slane %v270, 5
    %v273 = vor.u32 %v269, %v272
    %v274 = vrot.slane %v273, 4
    %v276 = vshll.u32 %v218, 16
    %v278 = vrot.slane %v276, 5
    %v279 = vsel %vm223, %v274, %v278
    %v281 = vshrl.u32 %v216, 16
    %v283 = vrot.slane %v281, 4
    %v284 = vshll.u32 %v216, 16
    %v286 = vrot.slane %v284, 5
    %v287 = vor.u32 %v283, %v286
    %v288 = vrot.slane %v287, 4
    %v290 = vshll.u32 %v219, 16
    %v292 = vrot.slane %v290, 5
    %v293 = vsel %vm223, %v288, %v292
    %v295 = vshrl.u32 %v217, 16
    %v297 = vrot.slane %v295, 4
    %v298 = vshll.u32 %v217, 16
    %v300 = vrot.slane %v298, 5
    %v301 = vor.u32 %v297, %v300
    %v302 = vrot.slane %v301, 4
    %v304 = vshll.u32 %v220, 16
    %v306 = vrot.slane %v304, 5
    %v307 = vsel %vm223, %v302, %v306
    %v308 = vld [vmem:[%s1] sm:$0xff]
    %v309 = vld [vmem:[%s1 + $0x8] sm:$0xff]
    %v310 = vld [vmem:[%s1 + $0x10] sm:$0xff]
    %v311 = vld [vmem:[%s1 + $0x18] sm:$0xff]
    %v312 = vld [vmem:[%s1 + $0x20] sm:$0xff]
    %v313 = vld [vmem:[%s1 + $0x28] sm:$0xff]
    %v314 = vld [vmem:[%s1 + $0x30] sm:$0xff]
    %v315 = vld [vmem:[%s1 + $0x38] sm:$0xff]
    %v316 = vld [vmem:[%s1 + $0x40] sm:$0xff]
    %v317 = vld [vmem:[%s1 + $0x48] sm:$0xff]
    %v318 = vld [vmem:[%s1 + $0x50] sm:$0xff]
    %v319 = vld [vmem:[%s1 + $0x58] sm:$0xff]
    %v320 = vld [vmem:[%s1 + $0x60] sm:$0xff]
    %v321 = vld [vmem:[%s1 + $0x68] sm:$0xff]
    %v322 = vld [vmem:[%s1 + $0x70] sm:$0xff]
    %v323 = vld [vmem:[%s1 + $0x78] sm:$0xff]
    %v324 = vld [vmem:[%s1 + $0x80] sm:$0xff]
    %v325 = vld [vmem:[%s1 + $0x88] sm:$0xff]
    %v326 = vld [vmem:[%s1 + $0x90] sm:$0xff]
    %v327 = vld [vmem:[%s1 + $0x98] sm:$0xff]
    %v328 = vld [vmem:[%s1 + $0xa0] sm:$0xff]
    %v329 = vld [vmem:[%s1 + $0xa8] sm:$0xff]
    %v330 = vld [vmem:[%s1 + $0xb0] sm:$0xff]
    %v331 = vld [vmem:[%s1 + $0xb8] sm:$0xff]
    %v332 = vld [vmem:[%s1 + $0xc0] sm:$0xff]
    %v333 = vld [vmem:[%s1 + $0xc8] sm:$0xff]
    %v334 = vld [vmem:[%s1 + $0xd0] sm:$0xff]
    %v335 = vld [vmem:[%s1 + $0xd8] sm:$0xff]
    %v336 = vld [vmem:[%s1 + $0xe0] sm:$0xff]
    %v337 = vld [vmem:[%s1 + $0xe8] sm:$0xff]
    %v338 = vld [vmem:[%s1 + $0xf0] sm:$0xff]
    %v339 = vld [vmem:[%s1 + $0xf8] sm:$0xff]
    %v340 = vld [vmem:[%s1 + $0x100] sm:$0xff]
    %v341 = vld [vmem:[%s1 + $0x108] sm:$0xff]
    %v342 = vld [vmem:[%s1 + $0x110] sm:$0xff]
    %v343 = vld [vmem:[%s1 + $0x118] sm:$0xff]
    %v344 = vld [vmem:[%s1 + $0x120] sm:$0xff]
    %v345 = vld [vmem:[%s1 + $0x128] sm:$0xff]
    %v346 = vld [vmem:[%s1 + $0x130] sm:$0xff]
    %v347 = vld [vmem:[%s1 + $0x138] sm:$0xff]
    %v348 = vld [vmem:[%s1 + $0x140] sm:$0xff]
    %v349 = vld [vmem:[%s1 + $0x148] sm:$0xff]
    %v350 = vld [vmem:[%s1 + $0x150] sm:$0xff]
    %v351 = vld [vmem:[%s1 + $0x158] sm:$0xff]
    %v352 = vld [vmem:[%s1 + $0x160] sm:$0xff]
    %v353 = vld [vmem:[%s1 + $0x168] sm:$0xff]
    %v354 = vld [vmem:[%s1 + $0x170] sm:$0xff]
    %v355 = vld [vmem:[%s1 + $0x178] sm:$0xff]
    %v356 = vld [vmem:[%s1 + $0x180] sm:$0xff]
    %v357 = vld [vmem:[%s1 + $0x188] sm:$0xff]
    %v358 = vld [vmem:[%s1 + $0x190] sm:$0xff]
    %v359 = vld [vmem:[%s1 + $0x198] sm:$0xff]
    %v360 = vld [vmem:[%s1 + $0x1a0] sm:$0xff]
    %v361 = vld [vmem:[%s1 + $0x1a8] sm:$0xff]
    %v362 = vld [vmem:[%s1 + $0x1b0] sm:$0xff]
    %v363 = vld [vmem:[%s1 + $0x1b8] sm:$0xff]
    %v364 = vld [vmem:[%s1 + $0x1c0] sm:$0xff]
    %v365 = vld [vmem:[%s1 + $0x1c8] sm:$0xff]
    %v366 = vld [vmem:[%s1 + $0x1d0] sm:$0xff]
    %v367 = vld [vmem:[%s1 + $0x1d8] sm:$0xff]
    %v368 = vld [vmem:[%s1 + $0x1e0] sm:$0xff]
    %v369 = vld [vmem:[%s1 + $0x1e8] sm:$0xff]
    %v370 = vld [vmem:[%s1 + $0x1f0] sm:$0xff]
    %v371 = vld [vmem:[%s1 + $0x1f8] sm:$0xff]
    %v372 = vld [vmem:[%s1 + $0x200] sm:$0xff]
    %v373 = vld [vmem:[%s1 + $0x208] sm:$0xff]
    %v374 = vld [vmem:[%s1 + $0x210] sm:$0xff]
    %v375 = vld [vmem:[%s1 + $0x218] sm:$0xff]
    %v376 = vld [vmem:[%s1 + $0x220] sm:$0xff]
    %v377 = vld [vmem:[%s1 + $0x228] sm:$0xff]
    %v378 = vld [vmem:[%s1 + $0x230] sm:$0xff]
    %v379 = vld [vmem:[%s1 + $0x238] sm:$0xff]
    %v380 = vld [vmem:[%s1 + $0x240] sm:$0xff]
    %v381 = vld [vmem:[%s1 + $0x248] sm:$0xff]
    %v382 = vld [vmem:[%s1 + $0x250] sm:$0xff]
    %v383 = vld [vmem:[%s1 + $0x258] sm:$0xff]
    %v384 = vld [vmem:[%s1 + $0x260] sm:$0xff]
    %v385 = vld [vmem:[%s1 + $0x268] sm:$0xff]
    %v386 = vld [vmem:[%s1 + $0x270] sm:$0xff]
    %v387 = vld [vmem:[%s1 + $0x278] sm:$0xff]
    %v388 = vld [vmem:[%s1 + $0x280] sm:$0xff]
    %v389 = vld [vmem:[%s1 + $0x288] sm:$0xff]
    %v390 = vld [vmem:[%s1 + $0x290] sm:$0xff]
    %v391 = vld [vmem:[%s1 + $0x298] sm:$0xff]
    %v392 = vld [vmem:[%s1 + $0x2a0] sm:$0xff]
    %v393 = vld [vmem:[%s1 + $0x2a8] sm:$0xff]
    %v394 = vld [vmem:[%s1 + $0x2b0] sm:$0xff]
    %v395 = vld [vmem:[%s1 + $0x2b8] sm:$0xff]
    %v396 = vld [vmem:[%s1 + $0x2c0] sm:$0xff]
    %v397 = vld [vmem:[%s1 + $0x2c8] sm:$0xff]
    %v398 = vld [vmem:[%s1 + $0x2d0] sm:$0xff]
    %v399 = vld [vmem:[%s1 + $0x2d8] sm:$0xff]
    %v400 = vld [vmem:[%s1 + $0x2e0] sm:$0xff]
    %v401 = vld [vmem:[%s1 + $0x2e8] sm:$0xff]
    %v402 = vld [vmem:[%s1 + $0x2f0] sm:$0xff]
    %v403 = vld [vmem:[%s1 + $0x2f8] sm:$0xff]
    %v404 = vld [vmem:[%s1 + $0x300] sm:$0xff]
    %v405 = vld [vmem:[%s1 + $0x308] sm:$0xff]
    %v406 = vld [vmem:[%s1 + $0x310] sm:$0xff]
    %v407 = vld [vmem:[%s1 + $0x318] sm:$0xff]
    %v408 = vld [vmem:[%s1 + $0x320] sm:$0xff]
    %v409 = vld [vmem:[%s1 + $0x328] sm:$0xff]
    %v410 = vld [vmem:[%s1 + $0x330] sm:$0xff]
    %v411 = vld [vmem:[%s1 + $0x338] sm:$0xff]
    %v412 = vld [vmem:[%s1 + $0x340] sm:$0xff]
    %v413 = vld [vmem:[%s1 + $0x348] sm:$0xff]
    %v414 = vld [vmem:[%s1 + $0x350] sm:$0xff]
    %v415 = vld [vmem:[%s1 + $0x358] sm:$0xff]
    %v416 = vld [vmem:[%s1 + $0x360] sm:$0xff]
    %v417 = vld [vmem:[%s1 + $0x368] sm:$0xff]
    %v418 = vld [vmem:[%s1 + $0x370] sm:$0xff]
    %v419 = vld [vmem:[%s1 + $0x378] sm:$0xff]
    %v420 = vld [vmem:[%s1 + $0x380] sm:$0xff]
    %v421 = vld [vmem:[%s1 + $0x388] sm:$0xff]
    %v422 = vld [vmem:[%s1 + $0x390] sm:$0xff]
    %v423 = vld [vmem:[%s1 + $0x398] sm:$0xff]
    %v424 = vld [vmem:[%s1 + $0x3a0] sm:$0xff]
    %v425 = vld [vmem:[%s1 + $0x3a8] sm:$0xff]
    %v426 = vld [vmem:[%s1 + $0x3b0] sm:$0xff]
    %v427 = vld [vmem:[%s1 + $0x3b8] sm:$0xff]
    %v428 = vld [vmem:[%s1 + $0x3c0] sm:$0xff]
    %v429 = vld [vmem:[%s1 + $0x3c8] sm:$0xff]
    %v430 = vld [vmem:[%s1 + $0x3d0] sm:$0xff]
    %v431 = vld [vmem:[%s1 + $0x3d8] sm:$0xff]
    %v432 = vld [vmem:[%s1 + $0x3e0] sm:$0xff]
    %v433 = vld [vmem:[%s1 + $0x3e8] sm:$0xff]
    %v434 = vld [vmem:[%s1 + $0x3f0] sm:$0xff]
    %v435 = vld [vmem:[%s1 + $0x3f8] sm:$0xff]
    %v436 = vld [vmem:[%s1 + $0x400] sm:$0xff]
    %v437 = vld [vmem:[%s1 + $0x408] sm:$0xff]
    %v438 = vld [vmem:[%s1 + $0x410] sm:$0xff]
    %v439 = vld [vmem:[%s1 + $0x418] sm:$0xff]
    %v440 = vld [vmem:[%s1 + $0x420] sm:$0xff]
    %v441 = vld [vmem:[%s1 + $0x428] sm:$0xff]
    %v442 = vld [vmem:[%s1 + $0x430] sm:$0xff]
    %v443 = vld [vmem:[%s1 + $0x438] sm:$0xff]
    %v444 = vld [vmem:[%s1 + $0x440] sm:$0xff]
    %v445 = vld [vmem:[%s1 + $0x448] sm:$0xff]
    %v446 = vld [vmem:[%s1 + $0x450] sm:$0xff]
    %v447 = vld [vmem:[%s1 + $0x458] sm:$0xff]
    %v448 = vld [vmem:[%s1 + $0x460] sm:$0xff]
    %v449 = vld [vmem:[%s1 + $0x468] sm:$0xff]
    %v450 = vld [vmem:[%s1 + $0x470] sm:$0xff]
    %v451 = vld [vmem:[%s1 + $0x478] sm:$0xff]
    %v452 = vld [vmem:[%s1 + $0x480] sm:$0xff]
    %v453 = vld [vmem:[%s1 + $0x488] sm:$0xff]
    %v454 = vld [vmem:[%s1 + $0x490] sm:$0xff]
    %v455 = vld [vmem:[%s1 + $0x498] sm:$0xff]
    %v456 = vld [vmem:[%s1 + $0x4a0] sm:$0xff]
    %v457 = vld [vmem:[%s1 + $0x4a8] sm:$0xff]
    %v458 = vld [vmem:[%s1 + $0x4b0] sm:$0xff]
    %v459 = vld [vmem:[%s1 + $0x4b8] sm:$0xff]
    %v460 = vld [vmem:[%s1 + $0x4c0] sm:$0xff]
    %v461 = vld [vmem:[%s1 + $0x4c8] sm:$0xff]
    %v462 = vld [vmem:[%s1 + $0x4d0] sm:$0xff]
    %v463 = vld [vmem:[%s1 + $0x4d8] sm:$0xff]
    %v464 = vld [vmem:[%s1 + $0x4e0] sm:$0xff]
    %v465 = vld [vmem:[%s1 + $0x4e8] sm:$0xff]
    %v466 = vld [vmem:[%s1 + $0x4f0] sm:$0xff]
    %v467 = vld [vmem:[%s1 + $0x4f8] sm:$0xff]
    %v468 = vld [vmem:[%s1 + $0x500] sm:$0xff]
    %v469 = vld [vmem:[%s1 + $0x508] sm:$0xff]
    %v470 = vld [vmem:[%s1 + $0x510] sm:$0xff]
    %v471 = vld [vmem:[%s1 + $0x518] sm:$0xff]
    %v472 = vld [vmem:[%s1 + $0x520] sm:$0xff]
    %v473 = vld [vmem:[%s1 + $0x528] sm:$0xff]
    %v474 = vld [vmem:[%s1 + $0x530] sm:$0xff]
    %v475 = vld [vmem:[%s1 + $0x538] sm:$0xff]
    %v476 = vld [vmem:[%s1 + $0x540] sm:$0xff]
    %v477 = vld [vmem:[%s1 + $0x548] sm:$0xff]
    %v478 = vld [vmem:[%s1 + $0x550] sm:$0xff]
    %v479 = vld [vmem:[%s1 + $0x558] sm:$0xff]
    %v480 = vld [vmem:[%s1 + $0x560] sm:$0xff]
    %v481 = vld [vmem:[%s1 + $0x568] sm:$0xff]
    %v482 = vld [vmem:[%s1 + $0x570] sm:$0xff]
    %v483 = vld [vmem:[%s1 + $0x578] sm:$0xff]
    %v484 = vld [vmem:[%s1 + $0x580] sm:$0xff]
    %v485 = vld [vmem:[%s1 + $0x588] sm:$0xff]
    %v486 = vld [vmem:[%s1 + $0x590] sm:$0xff]
    %v487 = vld [vmem:[%s1 + $0x598] sm:$0xff]
    %v488 = vld [vmem:[%s1 + $0x5a0] sm:$0xff]
    %v489 = vld [vmem:[%s1 + $0x5a8] sm:$0xff]
    %v490 = vld [vmem:[%s1 + $0x5b0] sm:$0xff]
    %v491 = vld [vmem:[%s1 + $0x5b8] sm:$0xff]
    %v492 = vld [vmem:[%s1 + $0x5c0] sm:$0xff]
    %v493 = vld [vmem:[%s1 + $0x5c8] sm:$0xff]
    %v494 = vld [vmem:[%s1 + $0x5d0] sm:$0xff]
    %v495 = vld [vmem:[%s1 + $0x5d8] sm:$0xff]
    %v496 = vld [vmem:[%s1 + $0x5e0] sm:$0xff]
    %v497 = vld [vmem:[%s1 + $0x5e8] sm:$0xff]
    %v498 = vld [vmem:[%s1 + $0x5f0] sm:$0xff]
    %v499 = vld [vmem:[%s1 + $0x5f8] sm:$0xff]
    %v500 = vld [vmem:[#allocation2] sm:$0xf]
    %v502 = vlaneseq
    %v503 = vshrl.u32 %v502, 7
    %v504 = vsub.s32 0, %v503
    %v505 = vrot.slane %v500, %v504
    %v506 = vlaneseq
    %v507 = vshrl.u32 %v506, 7
    %v508 = vsub.s32 1, %v507
    %v509 = vrot.slane %v500, %v508
    %v510 = vlaneseq
    %v511 = vshrl.u32 %v510, 7
    %v512 = vsub.s32 2, %v511
    %v513 = vrot.slane %v500, %v512
    %v514 = vlaneseq
    %v515 = vshrl.u32 %v514, 7
    %v516 = vsub.s32 3, %v515
    %v517 = vrot.slane %v500, %v516
    %v522 = vunpack.c.l.b16 %v237
    %v523 = vunpack.c.h.b16 %v237
    %v524 = vunpack.c.l.b16 %v251
    %v525 = vunpack.c.h.b16 %v251
    %v526 = vunpack.c.l.b16 %v265
    %v527 = vunpack.c.h.b16 %v265
    %v528 = vunpack.c.l.b16 %v279
    %v529 = vunpack.c.h.b16 %v279
    %v530 = vunpack.c.l.b16 %v293
    %v531 = vunpack.c.h.b16 %v293
    %v532 = vunpack.c.l.b16 %v307
    %v533 = vunpack.c.h.b16 %v307
    %v534 = vpack.c.b16 %v528, %v522
    %v535 = vpack.c.b16 %v529, %v523
    %v536 = vpack.c.b16 %v530, %v524
    %v537 = vpack.c.b16 %v531, %v525
    %v538 = vpack.c.b16 %v532, %v526
    %v539 = vpack.c.b16 %v533, %v527
    %v738 = vunpack.c.l.b16 %v308
    %v739 = vunpack.c.h.b16 %v308
    %v740 = vunpack.c.l.b16 %v309
    %v741 = vunpack.c.h.b16 %v309
    %v742 = vunpack.c.l.b16 %v310
    %v743 = vunpack.c.h.b16 %v310
    %v744 = vunpack.c.l.b16 %v311
    %v745 = vunpack.c.h.b16 %v311
    %v746 = vunpack.c.l.b16 %v312
    %v747 = vunpack.c.h.b16 %v312
    %v748 = vunpack.c.l.b16 %v313
    %v749 = vunpack.c.h.b16 %v313
    %v750 = vunpack.c.l.b16 %v314
    %v751 = vunpack.c.h.b16 %v314
    %v752 = vunpack.c.l.b16 %v315
    %v753 = vunpack.c.h.b16 %v315
    %v754 = vunpack.c.l.b16 %v316
    %v755 = vunpack.c.h.b16 %v316
    %v756 = vunpack.c.l.b16 %v317
    %v757 = vunpack.c.h.b16 %v317
    %v758 = vunpack.c.l.b16 %v318
    %v759 = vunpack.c.h.b16 %v318
    %v760 = vunpack.c.l.b16 %v319
    %v761 = vunpack.c.h.b16 %v319
    %v762 = vunpack.c.l.b16 %v320
    %v763 = vunpack.c.h.b16 %v320
    %v764 = vunpack.c.l.b16 %v321
    %v765 = vunpack.c.h.b16 %v321
    %v766 = vunpack.c.l.b16 %v322
    %v767 = vunpack.c.h.b16 %v322
    %v768 = vunpack.c.l.b16 %v323
    %v769 = vunpack.c.h.b16 %v323
    %v770 = vunpack.c.l.b16 %v324
    %v771 = vunpack.c.h.b16 %v324
    %v772 = vunpack.c.l.b16 %v325
    %v773 = vunpack.c.h.b16 %v325
    %v774 = vunpack.c.l.b16 %v326
    %v775 = vunpack.c.h.b16 %v326
    %v776 = vunpack.c.l.b16 %v327
    %v777 = vunpack.c.h.b16 %v327
    %v778 = vunpack.c.l.b16 %v328
    %v779 = vunpack.c.h.b16 %v328
    %v780 = vunpack.c.l.b16 %v329
    %v781 = vunpack.c.h.b16 %v329
    %v782 = vunpack.c.l.b16 %v330
    %v783 = vunpack.c.h.b16 %v330
    %v784 = vunpack.c.l.b16 %v331
    %v785 = vunpack.c.h.b16 %v331
    %v786 = vunpack.c.l.b16 %v332
    %v787 = vunpack.c.h.b16 %v332
    %v788 = vunpack.c.l.b16 %v333
    %v789 = vunpack.c.h.b16 %v333
    %v790 = vunpack.c.l.b16 %v334
    %v791 = vunpack.c.h.b16 %v334
    %v792 = vunpack.c.l.b16 %v335
    %v793 = vunpack.c.h.b16 %v335
    %v794 = vunpack.c.l.b16 %v336
    %v795 = vunpack.c.h.b16 %v336
    %v796 = vunpack.c.l.b16 %v337
    %v797 = vunpack.c.h.b16 %v337
    %v798 = vunpack.c.l.b16 %v338
    %v799 = vunpack.c.h.b16 %v338
    %v800 = vunpack.c.l.b16 %v339
    %v801 = vunpack.c.h.b16 %v339
    %v802 = vunpack.c.l.b16 %v340
    %v803 = vunpack.c.h.b16 %v340
    %v804 = vunpack.c.l.b16 %v341
    %v805 = vunpack.c.h.b16 %v341
    %v806 = vunpack.c.l.b16 %v342
    %v807 = vunpack.c.h.b16 %v342
    %v808 = vunpack.c.l.b16 %v343
    %v809 = vunpack.c.h.b16 %v343
    %v810 = vunpack.c.l.b16 %v344
    %v811 = vunpack.c.h.b16 %v344
    %v812 = vunpack.c.l.b16 %v345
    %v813 = vunpack.c.h.b16 %v345
    %v814 = vunpack.c.l.b16 %v346
    %v815 = vunpack.c.h.b16 %v346
    %v816 = vunpack.c.l.b16 %v347
    %v817 = vunpack.c.h.b16 %v347
    %v818 = vunpack.c.l.b16 %v348
    %v819 = vunpack.c.h.b16 %v348
    %v820 = vunpack.c.l.b16 %v349
    %v821 = vunpack.c.h.b16 %v349
    %v822 = vunpack.c.l.b16 %v350
    %v823 = vunpack.c.h.b16 %v350
    %v824 = vunpack.c.l.b16 %v351
    %v825 = vunpack.c.h.b16 %v351
    %v826 = vunpack.c.l.b16 %v352
    %v827 = vunpack.c.h.b16 %v352
    %v828 = vunpack.c.l.b16 %v353
    %v829 = vunpack.c.h.b16 %v353
    %v830 = vunpack.c.l.b16 %v354
    %v831 = vunpack.c.h.b16 %v354
    %v832 = vunpack.c.l.b16 %v355
    %v833 = vunpack.c.h.b16 %v355
    %v834 = vunpack.c.l.b16 %v356
    %v835 = vunpack.c.h.b16 %v356
    %v836 = vunpack.c.l.b16 %v357
    %v837 = vunpack.c.h.b16 %v357
    %v838 = vunpack.c.l.b16 %v358
    %v839 = vunpack.c.h.b16 %v358
    %v840 = vunpack.c.l.b16 %v359
    %v841 = vunpack.c.h.b16 %v359
    %v842 = vunpack.c.l.b16 %v360
    %v843 = vunpack.c.h.b16 %v360
    %v844 = vunpack.c.l.b16 %v361
    %v845 = vunpack.c.h.b16 %v361
    %v846 = vunpack.c.l.b16 %v362
    %v847 = vunpack.c.h.b16 %v362
    %v848 = vunpack.c.l.b16 %v363
    %v849 = vunpack.c.h.b16 %v363
    %v850 = vunpack.c.l.b16 %v364
    %v851 = vunpack.c.h.b16 %v364
    %v852 = vunpack.c.l.b16 %v365
    %v853 = vunpack.c.h.b16 %v365
    %v854 = vunpack.c.l.b16 %v366
    %v855 = vunpack.c.h.b16 %v366
    %v856 = vunpack.c.l.b16 %v367
    %v857 = vunpack.c.h.b16 %v367
    %v858 = vunpack.c.l.b16 %v368
    %v859 = vunpack.c.h.b16 %v368
    %v860 = vunpack.c.l.b16 %v369
    %v861 = vunpack.c.h.b16 %v369
    %v862 = vunpack.c.l.b16 %v370
    %v863 = vunpack.c.h.b16 %v370
    %v864 = vunpack.c.l.b16 %v371
    %v865 = vunpack.c.h.b16 %v371
    %v866 = vunpack.c.l.b16 %v372
    %v867 = vunpack.c.h.b16 %v372
    %v868 = vunpack.c.l.b16 %v373
    %v869 = vunpack.c.h.b16 %v373
    %v870 = vunpack.c.l.b16 %v374
    %v871 = vunpack.c.h.b16 %v374
    %v872 = vunpack.c.l.b16 %v375
    %v873 = vunpack.c.h.b16 %v375
    %v874 = vunpack.c.l.b16 %v376
    %v875 = vunpack.c.h.b16 %v376
    %v876 = vunpack.c.l.b16 %v377
    %v877 = vunpack.c.h.b16 %v377
    %v878 = vunpack.c.l.b16 %v378
    %v879 = vunpack.c.h.b16 %v378
    %v880 = vunpack.c.l.b16 %v379
    %v881 = vunpack.c.h.b16 %v379
    %v882 = vunpack.c.l.b16 %v380
    %v883 = vunpack.c.h.b16 %v380
    %v884 = vunpack.c.l.b16 %v381
    %v885 = vunpack.c.h.b16 %v381
    %v886 = vunpack.c.l.b16 %v382
    %v887 = vunpack.c.h.b16 %v382
    %v888 = vunpack.c.l.b16 %v383
    %v889 = vunpack.c.h.b16 %v383
    %v890 = vunpack.c.l.b16 %v384
    %v891 = vunpack.c.h.b16 %v384
    %v892 = vunpack.c.l.b16 %v385
    %v893 = vunpack.c.h.b16 %v385
    %v894 = vunpack.c.l.b16 %v386
    %v895 = vunpack.c.h.b16 %v386
    %v896 = vunpack.c.l.b16 %v387
    %v897 = vunpack.c.h.b16 %v387
    %v898 = vunpack.c.l.b16 %v388
    %v899 = vunpack.c.h.b16 %v388
    %v900 = vunpack.c.l.b16 %v389
    %v901 = vunpack.c.h.b16 %v389
    %v902 = vunpack.c.l.b16 %v390
    %v903 = vunpack.c.h.b16 %v390
    %v904 = vunpack.c.l.b16 %v391
    %v905 = vunpack.c.h.b16 %v391
    %v906 = vunpack.c.l.b16 %v392
    %v907 = vunpack.c.h.b16 %v392
    %v908 = vunpack.c.l.b16 %v393
    %v909 = vunpack.c.h.b16 %v393
    %v910 = vunpack.c.l.b16 %v394
    %v911 = vunpack.c.h.b16 %v394
    %v912 = vunpack.c.l.b16 %v395
    %v913 = vunpack.c.h.b16 %v395
    %v914 = vunpack.c.l.b16 %v396
    %v915 = vunpack.c.h.b16 %v396
    %v916 = vunpack.c.l.b16 %v397
    %v917 = vunpack.c.h.b16 %v397
    %v918 = vunpack.c.l.b16 %v398
    %v919 = vunpack.c.h.b16 %v398
    %v920 = vunpack.c.l.b16 %v399
    %v921 = vunpack.c.h.b16 %v399
    %v922 = vunpack.c.l.b16 %v400
    %v923 = vunpack.c.h.b16 %v400
    %v924 = vunpack.c.l.b16 %v401
    %v925 = vunpack.c.h.b16 %v401
    %v926 = vunpack.c.l.b16 %v402
    %v927 = vunpack.c.h.b16 %v402
    %v928 = vunpack.c.l.b16 %v403
    %v929 = vunpack.c.h.b16 %v403
    %v930 = vunpack.c.l.b16 %v404
    %v931 = vunpack.c.h.b16 %v404
    %v932 = vunpack.c.l.b16 %v405
    %v933 = vunpack.c.h.b16 %v405
    %v934 = vunpack.c.l.b16 %v406
    %v935 = vunpack.c.h.b16 %v406
    %v936 = vunpack.c.l.b16 %v407
    %v937 = vunpack.c.h.b16 %v407
    %v938 = vunpack.c.l.b16 %v408
    %v939 = vunpack.c.h.b16 %v408
    %v940 = vunpack.c.l.b16 %v409
    %v941 = vunpack.c.h.b16 %v409
    %v942 = vunpack.c.l.b16 %v410
    %v943 = vunpack.c.h.b16 %v410
    %v944 = vunpack.c.l.b16 %v411
    %v945 = vunpack.c.h.b16 %v411
    %v946 = vunpack.c.l.b16 %v412
    %v947 = vunpack.c.h.b16 %v412
    %v948 = vunpack.c.l.b16 %v413
    %v949 = vunpack.c.h.b16 %v413
    %v950 = vunpack.c.l.b16 %v414
    %v951 = vunpack.c.h.b16 %v414
    %v952 = vunpack.c.l.b16 %v415
    %v953 = vunpack.c.h.b16 %v415
    %v954 = vunpack.c.l.b16 %v416
    %v955 = vunpack.c.h.b16 %v416
    %v956 = vunpack.c.l.b16 %v417
    %v957 = vunpack.c.h.b16 %v417
    %v958 = vunpack.c.l.b16 %v418
    %v959 = vunpack.c.h.b16 %v418
    %v960 = vunpack.c.l.b16 %v419
    %v961 = vunpack.c.h.b16 %v419
    %v962 = vunpack.c.l.b16 %v420
    %v963 = vunpack.c.h.b16 %v420
    %v964 = vunpack.c.l.b16 %v421
    %v965 = vunpack.c.h.b16 %v421
    %v966 = vunpack.c.l.b16 %v422
    %v967 = vunpack.c.h.b16 %v422
    %v968 = vunpack.c.l.b16 %v423
    %v969 = vunpack.c.h.b16 %v423
    %v970 = vunpack.c.l.b16 %v424
    %v971 = vunpack.c.h.b16 %v424
    %v972 = vunpack.c.l.b16 %v425
    %v973 = vunpack.c.h.b16 %v425
    %v974 = vunpack.c.l.b16 %v426
    %v975 = vunpack.c.h.b16 %v426
    %v976 = vunpack.c.l.b16 %v427
    %v977 = vunpack.c.h.b16 %v427
    %v978 = vunpack.c.l.b16 %v428
    %v979 = vunpack.c.h.b16 %v428
    %v980 = vunpack.c.l.b16 %v429
    %v981 = vunpack.c.h.b16 %v429
    %v982 = vunpack.c.l.b16 %v430
    %v983 = vunpack.c.h.b16 %v430
    %v984 = vunpack.c.l.b16 %v431
    %v985 = vunpack.c.h.b16 %v431
    %v986 = vunpack.c.l.b16 %v432
    %v987 = vunpack.c.h.b16 %v432
    %v988 = vunpack.c.l.b16 %v433
    %v989 = vunpack.c.h.b16 %v433
    %v990 = vunpack.c.l.b16 %v434
    %v991 = vunpack.c.h.b16 %v434
    %v992 = vunpack.c.l.b16 %v435
    %v993 = vunpack.c.h.b16 %v435
    %v994 = vunpack.c.l.b16 %v436
    %v995 = vunpack.c.h.b16 %v436
    %v996 = vunpack.c.l.b16 %v437
    %v997 = vunpack.c.h.b16 %v437
    %v998 = vunpack.c.l.b16 %v438
    %v999 = vunpack.c.h.b16 %v438
    %v1000 = vunpack.c.l.b16 %v439
    %v1001 = vunpack.c.h.b16 %v439
    %v1002 = vunpack.c.l.b16 %v440
    %v1003 = vunpack.c.h.b16 %v440
    %v1004 = vunpack.c.l.b16 %v441
    %v1005 = vunpack.c.h.b16 %v441
    %v1006 = vunpack.c.l.b16 %v442
    %v1007 = vunpack.c.h.b16 %v442
    %v1008 = vunpack.c.l.b16 %v443
    %v1009 = vunpack.c.h.b16 %v443
    %v1010 = vunpack.c.l.b16 %v444
    %v1011 = vunpack.c.h.b16 %v444
    %v1012 = vunpack.c.l.b16 %v445
    %v1013 = vunpack.c.h.b16 %v445
    %v1014 = vunpack.c.l.b16 %v446
    %v1015 = vunpack.c.h.b16 %v446
    %v1016 = vunpack.c.l.b16 %v447
    %v1017 = vunpack.c.h.b16 %v447
    %v1018 = vunpack.c.l.b16 %v448
    %v1019 = vunpack.c.h.b16 %v448
    %v1020 = vunpack.c.l.b16 %v449
    %v1021 = vunpack.c.h.b16 %v449
    %v1022 = vunpack.c.l.b16 %v450
    %v1023 = vunpack.c.h.b16 %v450
    %v1024 = vunpack.c.l.b16 %v451
    %v1025 = vunpack.c.h.b16 %v451
    %v1026 = vunpack.c.l.b16 %v452
    %v1027 = vunpack.c.h.b16 %v452
    %v1028 = vunpack.c.l.b16 %v453
    %v1029 = vunpack.c.h.b16 %v453
    %v1030 = vunpack.c.l.b16 %v454
    %v1031 = vunpack.c.h.b16 %v454
    %v1032 = vunpack.c.l.b16 %v455
    %v1033 = vunpack.c.h.b16 %v455
    %v1034 = vunpack.c.l.b16 %v456
    %v1035 = vunpack.c.h.b16 %v456
    %v1036 = vunpack.c.l.b16 %v457
    %v1037 = vunpack.c.h.b16 %v457
    %v1038 = vunpack.c.l.b16 %v458
    %v1039 = vunpack.c.h.b16 %v458
    %v1040 = vunpack.c.l.b16 %v459
    %v1041 = vunpack.c.h.b16 %v459
    %v1042 = vunpack.c.l.b16 %v460
    %v1043 = vunpack.c.h.b16 %v460
    %v1044 = vunpack.c.l.b16 %v461
    %v1045 = vunpack.c.h.b16 %v461
    %v1046 = vunpack.c.l.b16 %v462
    %v1047 = vunpack.c.h.b16 %v462
    %v1048 = vunpack.c.l.b16 %v463
    %v1049 = vunpack.c.h.b16 %v463
    %v1050 = vunpack.c.l.b16 %v464
    %v1051 = vunpack.c.h.b16 %v464
    %v1052 = vunpack.c.l.b16 %v465
    %v1053 = vunpack.c.h.b16 %v465
    %v1054 = vunpack.c.l.b16 %v466
    %v1055 = vunpack.c.h.b16 %v466
    %v1056 = vunpack.c.l.b16 %v467
    %v1057 = vunpack.c.h.b16 %v467
    %v1058 = vunpack.c.l.b16 %v468
    %v1059 = vunpack.c.h.b16 %v468
    %v1060 = vunpack.c.l.b16 %v469
    %v1061 = vunpack.c.h.b16 %v469
    %v1062 = vunpack.c.l.b16 %v470
    %v1063 = vunpack.c.h.b16 %v470
    %v1064 = vunpack.c.l.b16 %v471
    %v1065 = vunpack.c.h.b16 %v471
    %v1066 = vunpack.c.l.b16 %v472
    %v1067 = vunpack.c.h.b16 %v472
    %v1068 = vunpack.c.l.b16 %v473
    %v1069 = vunpack.c.h.b16 %v473
    %v1070 = vunpack.c.l.b16 %v474
    %v1071 = vunpack.c.h.b16 %v474
    %v1072 = vunpack.c.l.b16 %v475
    %v1073 = vunpack.c.h.b16 %v475
    %v1074 = vunpack.c.l.b16 %v476
    %v1075 = vunpack.c.h.b16 %v476
    %v1076 = vunpack.c.l.b16 %v477
    %v1077 = vunpack.c.h.b16 %v477
    %v1078 = vunpack.c.l.b16 %v478
    %v1079 = vunpack.c.h.b16 %v478
    %v1080 = vunpack.c.l.b16 %v479
    %v1081 = vunpack.c.h.b16 %v479
    %v1082 = vunpack.c.l.b16 %v480
    %v1083 = vunpack.c.h.b16 %v480
    %v1084 = vunpack.c.l.b16 %v481
    %v1085 = vunpack.c.h.b16 %v481
    %v1086 = vunpack.c.l.b16 %v482
    %v1087 = vunpack.c.h.b16 %v482
    %v1088 = vunpack.c.l.b16 %v483
    %v1089 = vunpack.c.h.b16 %v483
    %v1090 = vunpack.c.l.b16 %v484
    %v1091 = vunpack.c.h.b16 %v484
    %v1092 = vunpack.c.l.b16 %v485
    %v1093 = vunpack.c.h.b16 %v485
    %v1094 = vunpack.c.l.b16 %v486
    %v1095 = vunpack.c.h.b16 %v486
    %v1096 = vunpack.c.l.b16 %v487
    %v1097 = vunpack.c.h.b16 %v487
    %v1098 = vunpack.c.l.b16 %v488
    %v1099 = vunpack.c.h.b16 %v488
    %v1100 = vunpack.c.l.b16 %v489
    %v1101 = vunpack.c.h.b16 %v489
    %v1102 = vunpack.c.l.b16 %v490
    %v1103 = vunpack.c.h.b16 %v490
    %v1104 = vunpack.c.l.b16 %v491
    %v1105 = vunpack.c.h.b16 %v491
    %v1106 = vunpack.c.l.b16 %v492
    %v1107 = vunpack.c.h.b16 %v492
    %v1108 = vunpack.c.l.b16 %v493
    %v1109 = vunpack.c.h.b16 %v493
    %v1110 = vunpack.c.l.b16 %v494
    %v1111 = vunpack.c.h.b16 %v494
    %v1112 = vunpack.c.l.b16 %v495
    %v1113 = vunpack.c.h.b16 %v495
    %v1114 = vunpack.c.l.b16 %v496
    %v1115 = vunpack.c.h.b16 %v496
    %v1116 = vunpack.c.l.b16 %v497
    %v1117 = vunpack.c.h.b16 %v497
    %v1118 = vunpack.c.l.b16 %v498
    %v1119 = vunpack.c.h.b16 %v498
    %v1120 = vunpack.c.l.b16 %v499
    %v1121 = vunpack.c.h.b16 %v499
    %v1122 = vpack.c.b16 %v742, %v738
    %v1123 = vpack.c.b16 %v743, %v739
    %v1124 = vpack.c.b16 %v744, %v740
    %v1125 = vpack.c.b16 %v745, %v741
    %v1126 = vpack.c.b16 %v750, %v746
    %v1127 = vpack.c.b16 %v751, %v747
    %v1128 = vpack.c.b16 %v752, %v748
    %v1129 = vpack.c.b16 %v753, %v749
    %v1130 = vpack.c.b16 %v758, %v754
    %v1131 = vpack.c.b16 %v759, %v755
    %v1132 = vpack.c.b16 %v760, %v756
    %v1133 = vpack.c.b16 %v761, %v757
    %v1134 = vpack.c.b16 %v766, %v762
    %v1135 = vpack.c.b16 %v767, %v763
    %v1136 = vpack.c.b16 %v768, %v764
    %v1137 = vpack.c.b16 %v769, %v765
    %v1138 = vpack.c.b16 %v774, %v770
    %v1139 = vpack.c.b16 %v775, %v771
    %v1140 = vpack.c.b16 %v776, %v772
    %v1141 = vpack.c.b16 %v777, %v773
    %v1142 = vpack.c.b16 %v782, %v778
    %v1143 = vpack.c.b16 %v783, %v779
    %v1144 = vpack.c.b16 %v784, %v780
    %v1145 = vpack.c.b16 %v785, %v781
    %v1146 = vpack.c.b16 %v790, %v786
    %v1147 = vpack.c.b16 %v791, %v787
    %v1148 = vpack.c.b16 %v792, %v788
    %v1149 = vpack.c.b16 %v793, %v789
    %v1150 = vpack.c.b16 %v798, %v794
    %v1151 = vpack.c.b16 %v799, %v795
    %v1152 = vpack.c.b16 %v800, %v796
    %v1153 = vpack.c.b16 %v801, %v797
    %v1154 = vpack.c.b16 %v806, %v802
    %v1155 = vpack.c.b16 %v807, %v803
    %v1156 = vpack.c.b16 %v808, %v804
    %v1157 = vpack.c.b16 %v809, %v805
    %v1158 = vpack.c.b16 %v814, %v810
    %v1159 = vpack.c.b16 %v815, %v811
    %v1160 = vpack.c.b16 %v816, %v812
    %v1161 = vpack.c.b16 %v817, %v813
    %v1162 = vpack.c.b16 %v822, %v818
    %v1163 = vpack.c.b16 %v823, %v819
    %v1164 = vpack.c.b16 %v824, %v820
    %v1165 = vpack.c.b16 %v825, %v821
    %v1166 = vpack.c.b16 %v830, %v826
    %v1167 = vpack.c.b16 %v831, %v827
    %v1168 = vpack.c.b16 %v832, %v828
    %v1169 = vpack.c.b16 %v833, %v829
    %v1170 = vpack.c.b16 %v838, %v834
    %v1171 = vpack.c.b16 %v839, %v835
    %v1172 = vpack.c.b16 %v840, %v836
    %v1173 = vpack.c.b16 %v841, %v837
    %v1174 = vpack.c.b16 %v846, %v842
    %v1175 = vpack.c.b16 %v847, %v843
    %v1176 = vpack.c.b16 %v848, %v844
    %v1177 = vpack.c.b16 %v849, %v845
    %v1178 = vpack.c.b16 %v854, %v850
    %v1179 = vpack.c.b16 %v855, %v851
    %v1180 = vpack.c.b16 %v856, %v852
    %v1181 = vpack.c.b16 %v857, %v853
    %v1182 = vpack.c.b16 %v862, %v858
    %v1183 = vpack.c.b16 %v863, %v859
    %v1184 = vpack.c.b16 %v864, %v860
    %v1185 = vpack.c.b16 %v865, %v861
    %v1186 = vpack.c.b16 %v870, %v866
    %v1187 = vpack.c.b16 %v871, %v867
    %v1188 = vpack.c.b16 %v872, %v868
    %v1189 = vpack.c.b16 %v873, %v869
    %v1190 = vpack.c.b16 %v878, %v874
    %v1191 = vpack.c.b16 %v879, %v875
    %v1192 = vpack.c.b16 %v880, %v876
    %v1193 = vpack.c.b16 %v881, %v877
    %v1194 = vpack.c.b16 %v886, %v882
    %v1195 = vpack.c.b16 %v887, %v883
    %v1196 = vpack.c.b16 %v888, %v884
    %v1197 = vpack.c.b16 %v889, %v885
    %v1198 = vpack.c.b16 %v894, %v890
    %v1199 = vpack.c.b16 %v895, %v891
    %v1200 = vpack.c.b16 %v896, %v892
    %v1201 = vpack.c.b16 %v897, %v893
    %v1202 = vpack.c.b16 %v902, %v898
    %v1203 = vpack.c.b16 %v903, %v899
    %v1204 = vpack.c.b16 %v904, %v900
    %v1205 = vpack.c.b16 %v905, %v901
    %v1206 = vpack.c.b16 %v910, %v906
    %v1207 = vpack.c.b16 %v911, %v907
    %v1208 = vpack.c.b16 %v912, %v908
    %v1209 = vpack.c.b16 %v913, %v909
    %v1210 = vpack.c.b16 %v918, %v914
    %v1211 = vpack.c.b16 %v919, %v915
    %v1212 = vpack.c.b16 %v920, %v916
    %v1213 = vpack.c.b16 %v921, %v917
    %v1214 = vpack.c.b16 %v926, %v922
    %v1215 = vpack.c.b16 %v927, %v923
    %v1216 = vpack.c.b16 %v928, %v924
    %v1217 = vpack.c.b16 %v929, %v925
    %v1218 = vpack.c.b16 %v934, %v930
    %v1219 = vpack.c.b16 %v935, %v931
    %v1220 = vpack.c.b16 %v936, %v932
    %v1221 = vpack.c.b16 %v937, %v933
    %v1222 = vpack.c.b16 %v942, %v938
    %v1223 = vpack.c.b16 %v943, %v939
    %v1224 = vpack.c.b16 %v944, %v940
    %v1225 = vpack.c.b16 %v945, %v941
    %v1226 = vpack.c.b16 %v950, %v946
    %v1227 = vpack.c.b16 %v951, %v947
    %v1228 = vpack.c.b16 %v952, %v948
    %v1229 = vpack.c.b16 %v953, %v949
    %v1230 = vpack.c.b16 %v958, %v954
    %v1231 = vpack.c.b16 %v959, %v955
    %v1232 = vpack.c.b16 %v960, %v956
    %v1233 = vpack.c.b16 %v961, %v957
    %v1234 = vpack.c.b16 %v966, %v962
    %v1235 = vpack.c.b16 %v967, %v963
    %v1236 = vpack.c.b16 %v968, %v964
    %v1237 = vpack.c.b16 %v969, %v965
    %v1238 = vpack.c.b16 %v974, %v970
    %v1239 = vpack.c.b16 %v975, %v971
    %v1240 = vpack.c.b16 %v976, %v972
    %v1241 = vpack.c.b16 %v977, %v973
    %v1242 = vpack.c.b16 %v982, %v978
    %v1243 = vpack.c.b16 %v983, %v979
    %v1244 = vpack.c.b16 %v984, %v980
    %v1245 = vpack.c.b16 %v985, %v981
    %v1246 = vpack.c.b16 %v990, %v986
    %v1247 = vpack.c.b16 %v991, %v987
    %v1248 = vpack.c.b16 %v992, %v988
    %v1249 = vpack.c.b16 %v993, %v989
    %v1250 = vpack.c.b16 %v998, %v994
    %v1251 = vpack.c.b16 %v999, %v995
    %v1252 = vpack.c.b16 %v1000, %v996
    %v1253 = vpack.c.b16 %v1001, %v997
    %v1254 = vpack.c.b16 %v1006, %v1002
    %v1255 = vpack.c.b16 %v1007, %v1003
    %v1256 = vpack.c.b16 %v1008, %v1004
    %v1257 = vpack.c.b16 %v1009, %v1005
    %v1258 = vpack.c.b16 %v1014, %v1010
    %v1259 = vpack.c.b16 %v1015, %v1011
    %v1260 = vpack.c.b16 %v1016, %v1012
    %v1261 = vpack.c.b16 %v1017, %v1013
    %v1262 = vpack.c.b16 %v1022, %v1018
    %v1263 = vpack.c.b16 %v1023, %v1019
    %v1264 = vpack.c.b16 %v1024, %v1020
    %v1265 = vpack.c.b16 %v1025, %v1021
    %v1266 = vpack.c.b16 %v1030, %v1026
    %v1267 = vpack.c.b16 %v1031, %v1027
    %v1268 = vpack.c.b16 %v1032, %v1028
    %v1269 = vpack.c.b16 %v1033, %v1029
    %v1270 = vpack.c.b16 %v1038, %v1034
    %v1271 = vpack.c.b16 %v1039, %v1035
    %v1272 = vpack.c.b16 %v1040, %v1036
    %v1273 = vpack.c.b16 %v1041, %v1037
    %v1274 = vpack.c.b16 %v1046, %v1042
    %v1275 = vpack.c.b16 %v1047, %v1043
    %v1276 = vpack.c.b16 %v1048, %v1044
    %v1277 = vpack.c.b16 %v1049, %v1045
    %v1278 = vpack.c.b16 %v1054, %v1050
    %v1279 = vpack.c.b16 %v1055, %v1051
    %v1280 = vpack.c.b16 %v1056, %v1052
    %v1281 = vpack.c.b16 %v1057, %v1053
    %v1282 = vpack.c.b16 %v1062, %v1058
    %v1283 = vpack.c.b16 %v1063, %v1059
    %v1284 = vpack.c.b16 %v1064, %v1060
    %v1285 = vpack.c.b16 %v1065, %v1061
    %v1286 = vpack.c.b16 %v1070, %v1066
    %v1287 = vpack.c.b16 %v1071, %v1067
    %v1288 = vpack.c.b16 %v1072, %v1068
    %v1289 = vpack.c.b16 %v1073, %v1069
    %v1290 = vpack.c.b16 %v1078, %v1074
    %v1291 = vpack.c.b16 %v1079, %v1075
    %v1292 = vpack.c.b16 %v1080, %v1076
    %v1293 = vpack.c.b16 %v1081, %v1077
    %v1294 = vpack.c.b16 %v1086, %v1082
    %v1295 = vpack.c.b16 %v1087, %v1083
    %v1296 = vpack.c.b16 %v1088, %v1084
    %v1297 = vpack.c.b16 %v1089, %v1085
    %v1298 = vpack.c.b16 %v1094, %v1090
    %v1299 = vpack.c.b16 %v1095, %v1091
    %v1300 = vpack.c.b16 %v1096, %v1092
    %v1301 = vpack.c.b16 %v1097, %v1093
    %v1302 = vpack.c.b16 %v1102, %v1098
    %v1303 = vpack.c.b16 %v1103, %v1099
    %v1304 = vpack.c.b16 %v1104, %v1100
    %v1305 = vpack.c.b16 %v1105, %v1101
    %v1306 = vpack.c.b16 %v1110, %v1106
    %v1307 = vpack.c.b16 %v1111, %v1107
    %v1308 = vpack.c.b16 %v1112, %v1108
    %v1309 = vpack.c.b16 %v1113, %v1109
    %v1310 = vpack.c.b16 %v1118, %v1114
    %v1311 = vpack.c.b16 %v1119, %v1115
    %v1312 = vpack.c.b16 %v1120, %v1116
    %v1313 = vpack.c.b16 %v1121, %v1117
    %1506 = vmatprep.subr.bf16.mxu0 %v1151
    %1507 = vmatpush1.bf16.msra.mxu0 %v1150
    %1508 = vmatprep.subr.bf16.mxu0 %v1147
    %1509 = vmatpush1.bf16.msra.mxu0 %v1146
    %1510 = vmatprep.subr.bf16.mxu0 %v1143
    %1511 = vmatpush1.bf16.msra.mxu0 %v1142
    %1512 = vmatprep.subr.bf16.mxu0 %v1139
    %1513 = vmatpush1.bf16.msra.mxu0 %v1138
    %1514 = vmatprep.subr.bf16.mxu0 %v1135
    %1515 = vmatpush1.bf16.msra.mxu0 %v1134
    %1516 = vmatprep.subr.bf16.mxu0 %v1131
    %1517 = vmatpush1.bf16.msra.mxu0 %v1130
    %1518 = vmatprep.subr.bf16.mxu0 %v1127
    %1519 = vmatpush1.bf16.msra.mxu0 %v1126
    %1520 = vmatprep.subr.bf16.mxu0 %v1123
    %1521 = vmatpush1.bf16.msra.mxu0 %v1122
    %1522 = vmatprep.subr.bf16.mxu0 %v1183
    %1523 = vmatpush2.bf16.msra.mxu0 %v1182
    %1524 = vmatprep.subr.bf16.mxu0 %v1179
    %1525 = vmatpush2.bf16.msra.mxu0 %v1178
    %1526 = vmatprep.subr.bf16.mxu0 %v1175
    %1527 = vmatpush2.bf16.msra.mxu0 %v1174
    %1528 = vmatprep.subr.bf16.mxu0 %v1171
    %1529 = vmatpush2.bf16.msra.mxu0 %v1170
    %1530 = vmatprep.subr.bf16.mxu0 %v1167
    %1531 = vmatpush2.bf16.msra.mxu0 %v1166
    %1532 = vmatprep.subr.bf16.mxu0 %v1163
    %1533 = vmatpush2.bf16.msra.mxu0 %v1162
    %1534 = vmatprep.subr.bf16.mxu0 %v1159
    %1535 = vmatpush2.bf16.msra.mxu0 %v1158
    %1536 = vmatprep.subr.bf16.mxu0 %v1155
    %1537 = vmatpush2.bf16.msra.mxu0 %v1154
    %1538 = vmatprep.mubr.bf16.mxu0 %v535
    %1539 = vmatmul.mubr.bf16.gmra.mxu0 %v534
    %v1540 = vpop.f32.mrf.mxu0
    %v1541 = vadd.f32 %v505, %v1540
    %v1542 = vpop.f32.mrf.mxu0
    %v1543 = vadd.f32 %v509, %v1542
    %v1544 = vpop.f32.mrf.mxu0
    %v1545 = vadd.f32 %v505, %v1544
    %v1546 = vpop.f32.mrf.mxu0
    %v1547 = vadd.f32 %v509, %v1546
    %1548 = vdwg.mxu0
    %1549 = vmatprep.subr.bf16.mxu0 %v1215
    %1550 = vmatpush1.bf16.msra.mxu0 %v1214
    %1551 = vmatprep.subr.bf16.mxu0 %v1211
    %1552 = vmatpush1.bf16.msra.mxu0 %v1210
    %1553 = vmatprep.subr.bf16.mxu0 %v1207
    %1554 = vmatpush1.bf16.msra.mxu0 %v1206
    %1555 = vmatprep.subr.bf16.mxu0 %v1203
    %1556 = vmatpush1.bf16.msra.mxu0 %v1202
    %1557 = vmatprep.subr.bf16.mxu0 %v1199
    %1558 = vmatpush1.bf16.msra.mxu0 %v1198
    %1559 = vmatprep.subr.bf16.mxu0 %v1195
    %1560 = vmatpush1.bf16.msra.mxu0 %v1194
    %1561 = vmatprep.subr.bf16.mxu0 %v1191
    %1562 = vmatpush1.bf16.msra.mxu0 %v1190
    %1563 = vmatprep.subr.bf16.mxu0 %v1187
    %1564 = vmatpush1.bf16.msra.mxu0 %v1186
    %1565 = vmatprep.subr.bf16.mxu0 %v1247
    %1566 = vmatpush2.bf16.msra.mxu0 %v1246
    %1567 = vmatprep.subr.bf16.mxu0 %v1243
    %1568 = vmatpush2.bf16.msra.mxu0 %v1242
    %1569 = vmatprep.subr.bf16.mxu0 %v1239
    %1570 = vmatpush2.bf16.msra.mxu0 %v1238
    %1571 = vmatprep.subr.bf16.mxu0 %v1235
    %1572 = vmatpush2.bf16.msra.mxu0 %v1234
    %1573 = vmatprep.subr.bf16.mxu0 %v1231
    %1574 = vmatpush2.bf16.msra.mxu0 %v1230
    %1575 = vmatprep.subr.bf16.mxu0 %v1227
    %1576 = vmatpush2.bf16.msra.mxu0 %v1226
    %1577 = vmatprep.subr.bf16.mxu0 %v1223
    %1578 = vmatpush2.bf16.msra.mxu0 %v1222
    %1579 = vmatprep.subr.bf16.mxu0 %v1219
    %1580 = vmatpush2.bf16.msra.mxu0 %v1218
    %1581 = vmatprep.mubr.bf16.mxu0 %v537
    %1582 = vmatmul.mubr.bf16.gmra.mxu0 %v536
    %v1583 = vpop.f32.mrf.mxu0
    %v1584 = vadd.f32 %v1541, %v1583
    %v1585 = vpop.f32.mrf.mxu0
    %v1586 = vadd.f32 %v1543, %v1585
    %v1587 = vpop.f32.mrf.mxu0
    %v1588 = vadd.f32 %v1545, %v1587
    %v1589 = vpop.f32.mrf.mxu0
    %v1590 = vadd.f32 %v1547, %v1589
    %1591 = vdwg.mxu0
    %1592 = vmatprep.subr.bf16.mxu0 %v1279
    %1593 = vmatpush1.bf16.msra.mxu0 %v1278
    %1594 = vmatprep.subr.bf16.mxu0 %v1275
    %1595 = vmatpush1.bf16.msra.mxu0 %v1274
    %1596 = vmatprep.subr.bf16.mxu0 %v1271
    %1597 = vmatpush1.bf16.msra.mxu0 %v1270
    %1598 = vmatprep.subr.bf16.mxu0 %v1267
    %1599 = vmatpush1.bf16.msra.mxu0 %v1266
    %1600 = vmatprep.subr.bf16.mxu0 %v1263
    %1601 = vmatpush1.bf16.msra.mxu0 %v1262
    %1602 = vmatprep.subr.bf16.mxu0 %v1259
    %1603 = vmatpush1.bf16.msra.mxu0 %v1258
    %1604 = vmatprep.subr.bf16.mxu0 %v1255
    %1605 = vmatpush1.bf16.msra.mxu0 %v1254
    %1606 = vmatprep.subr.bf16.mxu0 %v1251
    %1607 = vmatpush1.bf16.msra.mxu0 %v1250
    %1608 = vmatprep.subr.bf16.mxu0 %v1311
    %1609 = vmatpush2.bf16.msra.mxu0 %v1310
    %1610 = vmatprep.subr.bf16.mxu0 %v1307
    %1611 = vmatpush2.bf16.msra.mxu0 %v1306
    %1612 = vmatprep.subr.bf16.mxu0 %v1303
    %1613 = vmatpush2.bf16.msra.mxu0 %v1302
    %1614 = vmatprep.subr.bf16.mxu0 %v1299
    %1615 = vmatpush2.bf16.msra.mxu0 %v1298
    %1616 = vmatprep.subr.bf16.mxu0 %v1295
    %1617 = vmatpush2.bf16.msra.mxu0 %v1294
    %1618 = vmatprep.subr.bf16.mxu0 %v1291
    %1619 = vmatpush2.bf16.msra.mxu0 %v1290
    %1620 = vmatprep.subr.bf16.mxu0 %v1287
    %1621 = vmatpush2.bf16.msra.mxu0 %v1286
    %1622 = vmatprep.subr.bf16.mxu0 %v1283
    %1623 = vmatpush2.bf16.msra.mxu0 %v1282
    %1624 = vmatprep.mubr.bf16.mxu0 %v539
    %1625 = vmatmul.mubr.bf16.gmra.mxu0 %v538
    %v1626 = vpop.f32.mrf.mxu0
    %v1627 = vadd.f32 %v1584, %v1626
    %v1628 = vpop.f32.mrf.mxu0
    %v1629 = vadd.f32 %v1586, %v1628
    %v1630 = vpop.f32.mrf.mxu0
    %v1631 = vadd.f32 %v1588, %v1630
    %v1632 = vpop.f32.mrf.mxu0
    %v1633 = vadd.f32 %v1590, %v1632
    %1634 = vdwg.mxu0
    %1635 = vmatprep.subr.bf16.mxu0 %v1153
    %1636 = vmatpush1.bf16.msra.mxu0 %v1152
    %1637 = vmatprep.subr.bf16.mxu0 %v1149
    %1638 = vmatpush1.bf16.msra.mxu0 %v1148
    %1639 = vmatprep.subr.bf16.mxu0 %v1145
    %1640 = vmatpush1.bf16.msra.mxu0 %v1144
    %1641 = vmatprep.subr.bf16.mxu0 %v1141
    %1642 = vmatpush1.bf16.msra.mxu0 %v1140
    %1643 = vmatprep.subr.bf16.mxu0 %v1137
    %1644 = vmatpush1.bf16.msra.mxu0 %v1136
    %1645 = vmatprep.subr.bf16.mxu0 %v1133
    %1646 = vmatpush1.bf16.msra.mxu0 %v1132
    %1647 = vmatprep.subr.bf16.mxu0 %v1129
    %1648 = vmatpush1.bf16.msra.mxu0 %v1128
    %1649 = vmatprep.subr.bf16.mxu0 %v1125
    %1650 = vmatpush1.bf16.msra.mxu0 %v1124
    %1651 = vmatprep.subr.bf16.mxu0 %v1185
    %1652 = vmatpush2.bf16.msra.mxu0 %v1184
    %1653 = vmatprep.subr.bf16.mxu0 %v1181
    %1654 = vmatpush2.bf16.msra.mxu0 %v1180
    %1655 = vmatprep.subr.bf16.mxu0 %v1177
    %1656 = vmatpush2.bf16.msra.mxu0 %v1176
    %1657 = vmatprep.subr.bf16.mxu0 %v1173
    %1658 = vmatpush2.bf16.msra.mxu0 %v1172
    %1659 = vmatprep.subr.bf16.mxu0 %v1169
    %1660 = vmatpush2.bf16.msra.mxu0 %v1168
    %1661 = vmatprep.subr.bf16.mxu0 %v1165
    %1662 = vmatpush2.bf16.msra.mxu0 %v1164
    %1663 = vmatprep.subr.bf16.mxu0 %v1161
    %1664 = vmatpush2.bf16.msra.mxu0 %v1160
    %1665 = vmatprep.subr.bf16.mxu0 %v1157
    %1666 = vmatpush2.bf16.msra.mxu0 %v1156
    %1667 = vmatprep.mubr.bf16.mxu0 %v535
    %1668 = vmatmul.mubr.bf16.gmra.mxu0 %v534
    %v1669 = vpop.f32.mrf.mxu0
    %v1670 = vadd.f32 %v513, %v1669
    %v1671 = vpop.f32.mrf.mxu0
    %v1672 = vadd.f32 %v517, %v1671
    %v1673 = vpop.f32.mrf.mxu0
    %v1674 = vadd.f32 %v513, %v1673
    %v1675 = vpop.f32.mrf.mxu0
    %v1676 = vadd.f32 %v517, %v1675
    %1677 = vdwg.mxu0
    %1678 = vmatprep.subr.bf16.mxu0 %v1217
    %1679 = vmatpush1.bf16.msra.mxu0 %v1216
    %1680 = vmatprep.subr.bf16.mxu0 %v1213
    %1681 = vmatpush1.bf16.msra.mxu0 %v1212
    %1682 = vmatprep.subr.bf16.mxu0 %v1209
    %1683 = vmatpush1.bf16.msra.mxu0 %v1208
    %1684 = vmatprep.subr.bf16.mxu0 %v1205
    %1685 = vmatpush1.bf16.msra.mxu0 %v1204
    %1686 = vmatprep.subr.bf16.mxu0 %v1201
    %1687 = vmatpush1.bf16.msra.mxu0 %v1200
    %1688 = vmatprep.subr.bf16.mxu0 %v1197
    %1689 = vmatpush1.bf16.msra.mxu0 %v1196
    %1690 = vmatprep.subr.bf16.mxu0 %v1193
    %1691 = vmatpush1.bf16.msra.mxu0 %v1192
    %1692 = vmatprep.subr.bf16.mxu0 %v1189
    %1693 = vmatpush1.bf16.msra.mxu0 %v1188
    %1694 = vmatprep.subr.bf16.mxu0 %v1249
    %1695 = vmatpush2.bf16.msra.mxu0 %v1248
    %1696 = vmatprep.subr.bf16.mxu0 %v1245
    %1697 = vmatpush2.bf16.msra.mxu0 %v1244
    %1698 = vmatprep.subr.bf16.mxu0 %v1241
    %1699 = vmatpush2.bf16.msra.mxu0 %v1240
    %1700 = vmatprep.subr.bf16.mxu0 %v1237
    %1701 = vmatpush2.bf16.msra.mxu0 %v1236
    %1702 = vmatprep.subr.bf16.mxu0 %v1233
    %1703 = vmatpush2.bf16.msra.mxu0 %v1232
    %1704 = vmatprep.subr.bf16.mxu0 %v1229
    %1705 = vmatpush2.bf16.msra.mxu0 %v1228
    %1706 = vmatprep.subr.bf16.mxu0 %v1225
    %1707 = vmatpush2.bf16.msra.mxu0 %v1224
    %1708 = vmatprep.subr.bf16.mxu0 %v1221
    %1709 = vmatpush2.bf16.msra.mxu0 %v1220
    %1710 = vmatprep.mubr.bf16.mxu0 %v537
    %1711 = vmatmul.mubr.bf16.gmra.mxu0 %v536
    %v1712 = vpop.f32.mrf.mxu0
    %v1713 = vadd.f32 %v1670, %v1712
    %v1714 = vpop.f32.mrf.mxu0
    %v1715 = vadd.f32 %v1672, %v1714
    %v1716 = vpop.f32.mrf.mxu0
    %v1717 = vadd.f32 %v1674, %v1716
    %v1718 = vpop.f32.mrf.mxu0
    %v1719 = vadd.f32 %v1676, %v1718
    %1720 = vdwg.mxu0
    %1721 = vmatprep.subr.bf16.mxu0 %v1281
    %1722 = vmatpush1.bf16.msra.mxu0 %v1280
    %1723 = vmatprep.subr.bf16.mxu0 %v1277
    %1724 = vmatpush1.bf16.msra.mxu0 %v1276
    %1725 = vmatprep.subr.bf16.mxu0 %v1273
    %1726 = vmatpush1.bf16.msra.mxu0 %v1272
    %1727 = vmatprep.subr.bf16.mxu0 %v1269
    %1728 = vmatpush1.bf16.msra.mxu0 %v1268
    %1729 = vmatprep.subr.bf16.mxu0 %v1265
    %1730 = vmatpush1.bf16.msra.mxu0 %v1264
    %1731 = vmatprep.subr.bf16.mxu0 %v1261
    %1732 = vmatpush1.bf16.msra.mxu0 %v1260
    %1733 = vmatprep.subr.bf16.mxu0 %v1257
    %1734 = vmatpush1.bf16.msra.mxu0 %v1256
    %1735 = vmatprep.subr.bf16.mxu0 %v1253
    %1736 = vmatpush1.bf16.msra.mxu0 %v1252
    %1737 = vmatprep.subr.bf16.mxu0 %v1313
    %1738 = vmatpush2.bf16.msra.mxu0 %v1312
    %1739 = vmatprep.subr.bf16.mxu0 %v1309
    %1740 = vmatpush2.bf16.msra.mxu0 %v1308
    %1741 = vmatprep.subr.bf16.mxu0 %v1305
    %1742 = vmatpush2.bf16.msra.mxu0 %v1304
    %1743 = vmatprep.subr.bf16.mxu0 %v1301
    %1744 = vmatpush2.bf16.msra.mxu0 %v1300
    %1745 = vmatprep.subr.bf16.mxu0 %v1297
    %1746 = vmatpush2.bf16.msra.mxu0 %v1296
    %1747 = vmatprep.subr.bf16.mxu0 %v1293
    %1748 = vmatpush2.bf16.msra.mxu0 %v1292
    %1749 = vmatprep.subr.bf16.mxu0 %v1289
    %1750 = vmatpush2.bf16.msra.mxu0 %v1288
    %1751 = vmatprep.subr.bf16.mxu0 %v1285
    %1752 = vmatpush2.bf16.msra.mxu0 %v1284
    %1753 = vmatprep.mubr.bf16.mxu0 %v539
    %1754 = vmatmul.mubr.bf16.gmra.mxu0 %v538
    %v1755 = vpop.f32.mrf.mxu0
    %v1756 = vadd.f32 %v1713, %v1755
    %v1757 = vpop.f32.mrf.mxu0
    %v1758 = vadd.f32 %v1715, %v1757
    %v1759 = vpop.f32.mrf.mxu0
    %v1760 = vadd.f32 %v1717, %v1759
    %v1761 = vpop.f32.mrf.mxu0
    %v1762 = vadd.f32 %v1719, %v1761
    %1763 = vdwg.mxu0
    %v1764 = vmax.f32 %v1627, 0.0
    %v1765 = vmax.f32 %v1629, 0.0
    %v1766 = vmax.f32 %v1756, 0.0
    %v1767 = vmax.f32 %v1758, 0.0
    %v1768 = vmax.f32 %v1631, 0.0
    %v1769 = vmax.f32 %v1633, 0.0
    %v1770 = vmax.f32 %v1760, 0.0
    %v1771 = vmax.f32 %v1762, 0.0
    %v1772 = vpack.c.bf16 %v1768, %v1764
    %v1773 = vpack.c.bf16 %v1769, %v1765
    %v1774 = vpack.c.bf16 %v1770, %v1766
    %v1775 = vpack.c.bf16 %v1771, %v1767
    %v1776 = vld [vmem:[#allocation5] sm:$0xff]
    %v1777 = vld [vmem:[#allocation5 + $0x8] sm:$0xff]
    %v1778 = vld [vmem:[#allocation5 + $0x10] sm:$0xff]
    %v1779 = vld [vmem:[#allocation5 + $0x18] sm:$0xff]
    %v1780 = vld [vmem:[#allocation5 + $0x20] sm:$0xff]
    %v1781 = vld [vmem:[#allocation5 + $0x28] sm:$0xff]
    %v1782 = vld [vmem:[#allocation5 + $0x30] sm:$0xff]
    %v1783 = vld [vmem:[#allocation5 + $0x38] sm:$0xff]
    %v1784 = vld [vmem:[#allocation5 + $0x40] sm:$0xff]
    %v1785 = vld [vmem:[#allocation5 + $0x48] sm:$0xff]
    %v1786 = vld [vmem:[#allocation5 + $0x50] sm:$0xff]
    %v1787 = vld [vmem:[#allocation5 + $0x58] sm:$0xff]
    %v1788 = vld [vmem:[#allocation5 + $0x60] sm:$0xff]
    %v1789 = vld [vmem:[#allocation5 + $0x68] sm:$0xff]
    %v1790 = vld [vmem:[#allocation5 + $0x70] sm:$0xff]
    %v1791 = vld [vmem:[#allocation5 + $0x78] sm:$0xff]
    %v1792 = vld [vmem:[#allocation5 + $0x80] sm:$0xff]
    %v1793 = vld [vmem:[#allocation5 + $0x88] sm:$0xff]
    %v1794 = vld [vmem:[#allocation5 + $0x90] sm:$0xff]
    %v1795 = vld [vmem:[#allocation5 + $0x98] sm:$0xff]
    %v1796 = vld [vmem:[#allocation5 + $0xa0] sm:$0xff]
    %v1797 = vld [vmem:[#allocation5 + $0xa8] sm:$0xff]
    %v1798 = vld [vmem:[#allocation5 + $0xb0] sm:$0xff]
    %v1799 = vld [vmem:[#allocation5 + $0xb8] sm:$0xff]
    %v1800 = vld [vmem:[#allocation5 + $0xc0] sm:$0xff]
    %v1801 = vld [vmem:[#allocation5 + $0xc8] sm:$0xff]
    %v1802 = vld [vmem:[#allocation5 + $0xd0] sm:$0xff]
    %v1803 = vld [vmem:[#allocation5 + $0xd8] sm:$0xff]
    %v1804 = vld [vmem:[#allocation5 + $0xe0] sm:$0xff]
    %v1805 = vld [vmem:[#allocation5 + $0xe8] sm:$0xff]
    %v1806 = vld [vmem:[#allocation5 + $0xf0] sm:$0xff]
    %v1807 = vld [vmem:[#allocation5 + $0xf8] sm:$0xff]
    %v1808 = vld [vmem:[#allocation5 + $0x100] sm:$0xff]
    %v1809 = vld [vmem:[#allocation5 + $0x108] sm:$0xff]
    %v1810 = vld [vmem:[#allocation5 + $0x110] sm:$0xff]
    %v1811 = vld [vmem:[#allocation5 + $0x118] sm:$0xff]
    %v1812 = vld [vmem:[#allocation5 + $0x120] sm:$0xff]
    %v1813 = vld [vmem:[#allocation5 + $0x128] sm:$0xff]
    %v1814 = vld [vmem:[#allocation5 + $0x130] sm:$0xff]
    %v1815 = vld [vmem:[#allocation5 + $0x138] sm:$0xff]
    %v1816 = vld [vmem:[#allocation5 + $0x140] sm:$0xff]
    %v1817 = vld [vmem:[#allocation5 + $0x148] sm:$0xff]
    %v1818 = vld [vmem:[#allocation5 + $0x150] sm:$0xff]
    %v1819 = vld [vmem:[#allocation5 + $0x158] sm:$0xff]
    %v1820 = vld [vmem:[#allocation5 + $0x160] sm:$0xff]
    %v1821 = vld [vmem:[#allocation5 + $0x168] sm:$0xff]
    %v1822 = vld [vmem:[#allocation5 + $0x170] sm:$0xff]
    %v1823 = vld [vmem:[#allocation5 + $0x178] sm:$0xff]
    %v1824 = vld [vmem:[#allocation5 + $0x180] sm:$0xff]
    %v1825 = vld [vmem:[#allocation5 + $0x188] sm:$0xff]
    %v1826 = vld [vmem:[#allocation5 + $0x190] sm:$0xff]
    %v1827 = vld [vmem:[#allocation5 + $0x198] sm:$0xff]
    %v1828 = vld [vmem:[#allocation5 + $0x1a0] sm:$0xff]
    %v1829 = vld [vmem:[#allocation5 + $0x1a8] sm:$0xff]
    %v1830 = vld [vmem:[#allocation5 + $0x1b0] sm:$0xff]
    %v1831 = vld [vmem:[#allocation5 + $0x1b8] sm:$0xff]
    %v1832 = vld [vmem:[#allocation5 + $0x1c0] sm:$0xff]
    %v1833 = vld [vmem:[#allocation5 + $0x1c8] sm:$0xff]
    %v1834 = vld [vmem:[#allocation5 + $0x1d0] sm:$0xff]
    %v1835 = vld [vmem:[#allocation5 + $0x1d8] sm:$0xff]
    %v1836 = vld [vmem:[#allocation5 + $0x1e0] sm:$0xff]
    %v1837 = vld [vmem:[#allocation5 + $0x1e8] sm:$0xff]
    %v1838 = vld [vmem:[#allocation5 + $0x1f0] sm:$0xff]
    %v1839 = vld [vmem:[#allocation5 + $0x1f8] sm:$0xff]
    %v1840 = vld [vmem:[#allocation5 + $0x200] sm:$0xff]
    %v1841 = vld [vmem:[#allocation5 + $0x208] sm:$0xff]
    %v1842 = vld [vmem:[#allocation5 + $0x210] sm:$0xff]
    %v1843 = vld [vmem:[#allocation5 + $0x218] sm:$0xff]
    %v1844 = vld [vmem:[#allocation5 + $0x220] sm:$0xff]
    %v1845 = vld [vmem:[#allocation5 + $0x228] sm:$0xff]
    %v1846 = vld [vmem:[#allocation5 + $0x230] sm:$0xff]
    %v1847 = vld [vmem:[#allocation5 + $0x238] sm:$0xff]
    %v1848 = vld [vmem:[#allocation5 + $0x240] sm:$0xff]
    %v1849 = vld [vmem:[#allocation5 + $0x248] sm:$0xff]
    %v1850 = vld [vmem:[#allocation5 + $0x250] sm:$0xff]
    %v1851 = vld [vmem:[#allocation5 + $0x258] sm:$0xff]
    %v1852 = vld [vmem:[#allocation5 + $0x260] sm:$0xff]
    %v1853 = vld [vmem:[#allocation5 + $0x268] sm:$0xff]
    %v1854 = vld [vmem:[#allocation5 + $0x270] sm:$0xff]
    %v1855 = vld [vmem:[#allocation5 + $0x278] sm:$0xff]
    %v1856 = vld [vmem:[#allocation5 + $0x280] sm:$0xff]
    %v1857 = vld [vmem:[#allocation5 + $0x288] sm:$0xff]
    %v1858 = vld [vmem:[#allocation5 + $0x290] sm:$0xff]
    %v1859 = vld [vmem:[#allocation5 + $0x298] sm:$0xff]
    %v1860 = vld [vmem:[#allocation5 + $0x2a0] sm:$0xff]
    %v1861 = vld [vmem:[#allocation5 + $0x2a8] sm:$0xff]
    %v1862 = vld [vmem:[#allocation5 + $0x2b0] sm:$0xff]
    %v1863 = vld [vmem:[#allocation5 + $0x2b8] sm:$0xff]
    %v1864 = vld [vmem:[#allocation5 + $0x2c0] sm:$0xff]
    %v1865 = vld [vmem:[#allocation5 + $0x2c8] sm:$0xff]
    %v1866 = vld [vmem:[#allocation5 + $0x2d0] sm:$0xff]
    %v1867 = vld [vmem:[#allocation5 + $0x2d8] sm:$0xff]
    %v1868 = vld [vmem:[#allocation5 + $0x2e0] sm:$0xff]
    %v1869 = vld [vmem:[#allocation5 + $0x2e8] sm:$0xff]
    %v1870 = vld [vmem:[#allocation5 + $0x2f0] sm:$0xff]
    %v1871 = vld [vmem:[#allocation5 + $0x2f8] sm:$0xff]
    %v1872 = vld [vmem:[#allocation5 + $0x300] sm:$0xff]
    %v1873 = vld [vmem:[#allocation5 + $0x308] sm:$0xff]
    %v1874 = vld [vmem:[#allocation5 + $0x310] sm:$0xff]
    %v1875 = vld [vmem:[#allocation5 + $0x318] sm:$0xff]
    %v1876 = vld [vmem:[#allocation5 + $0x320] sm:$0xff]
    %v1877 = vld [vmem:[#allocation5 + $0x328] sm:$0xff]
    %v1878 = vld [vmem:[#allocation5 + $0x330] sm:$0xff]
    %v1879 = vld [vmem:[#allocation5 + $0x338] sm:$0xff]
    %v1880 = vld [vmem:[#allocation5 + $0x340] sm:$0xff]
    %v1881 = vld [vmem:[#allocation5 + $0x348] sm:$0xff]
    %v1882 = vld [vmem:[#allocation5 + $0x350] sm:$0xff]
    %v1883 = vld [vmem:[#allocation5 + $0x358] sm:$0xff]
    %v1884 = vld [vmem:[#allocation5 + $0x360] sm:$0xff]
    %v1885 = vld [vmem:[#allocation5 + $0x368] sm:$0xff]
    %v1886 = vld [vmem:[#allocation5 + $0x370] sm:$0xff]
    %v1887 = vld [vmem:[#allocation5 + $0x378] sm:$0xff]
    %v1888 = vld [vmem:[#allocation5 + $0x380] sm:$0xff]
    %v1889 = vld [vmem:[#allocation5 + $0x388] sm:$0xff]
    %v1890 = vld [vmem:[#allocation5 + $0x390] sm:$0xff]
    %v1891 = vld [vmem:[#allocation5 + $0x398] sm:$0xff]
    %v1892 = vld [vmem:[#allocation5 + $0x3a0] sm:$0xff]
    %v1893 = vld [vmem:[#allocation5 + $0x3a8] sm:$0xff]
    %v1894 = vld [vmem:[#allocation5 + $0x3b0] sm:$0xff]
    %v1895 = vld [vmem:[#allocation5 + $0x3b8] sm:$0xff]
    %v1896 = vld [vmem:[#allocation5 + $0x3c0] sm:$0xff]
    %v1897 = vld [vmem:[#allocation5 + $0x3c8] sm:$0xff]
    %v1898 = vld [vmem:[#allocation5 + $0x3d0] sm:$0xff]
    %v1899 = vld [vmem:[#allocation5 + $0x3d8] sm:$0xff]
    %v1900 = vld [vmem:[#allocation5 + $0x3e0] sm:$0xff]
    %v1901 = vld [vmem:[#allocation5 + $0x3e8] sm:$0xff]
    %v1902 = vld [vmem:[#allocation5 + $0x3f0] sm:$0xff]
    %v1903 = vld [vmem:[#allocation5 + $0x3f8] sm:$0xff]
    %v1904 = vld [vmem:[#allocation5 + $0x400] sm:$0xff]
    %v1905 = vld [vmem:[#allocation5 + $0x408] sm:$0xff]
    %v1906 = vld [vmem:[#allocation5 + $0x410] sm:$0xff]
    %v1907 = vld [vmem:[#allocation5 + $0x418] sm:$0xff]
    %v1908 = vld [vmem:[#allocation5 + $0x420] sm:$0xff]
    %v1909 = vld [vmem:[#allocation5 + $0x428] sm:$0xff]
    %v1910 = vld [vmem:[#allocation5 + $0x430] sm:$0xff]
    %v1911 = vld [vmem:[#allocation5 + $0x438] sm:$0xff]
    %v1912 = vld [vmem:[#allocation5 + $0x440] sm:$0xff]
    %v1913 = vld [vmem:[#allocation5 + $0x448] sm:$0xff]
    %v1914 = vld [vmem:[#allocation5 + $0x450] sm:$0xff]
    %v1915 = vld [vmem:[#allocation5 + $0x458] sm:$0xff]
    %v1916 = vld [vmem:[#allocation5 + $0x460] sm:$0xff]
    %v1917 = vld [vmem:[#allocation5 + $0x468] sm:$0xff]
    %v1918 = vld [vmem:[#allocation5 + $0x470] sm:$0xff]
    %v1919 = vld [vmem:[#allocation5 + $0x478] sm:$0xff]
    %v1920 = vld [vmem:[#allocation5 + $0x480] sm:$0xff]
    %v1921 = vld [vmem:[#allocation5 + $0x488] sm:$0xff]
    %v1922 = vld [vmem:[#allocation5 + $0x490] sm:$0xff]
    %v1923 = vld [vmem:[#allocation5 + $0x498] sm:$0xff]
    %v1924 = vld [vmem:[#allocation5 + $0x4a0] sm:$0xff]
    %v1925 = vld [vmem:[#allocation5 + $0x4a8] sm:$0xff]
    %v1926 = vld [vmem:[#allocation5 + $0x4b0] sm:$0xff]
    %v1927 = vld [vmem:[#allocation5 + $0x4b8] sm:$0xff]
    %v1928 = vld [vmem:[#allocation5 + $0x4c0] sm:$0xff]
    %v1929 = vld [vmem:[#allocation5 + $0x4c8] sm:$0xff]
    %v1930 = vld [vmem:[#allocation5 + $0x4d0] sm:$0xff]
    %v1931 = vld [vmem:[#allocation5 + $0x4d8] sm:$0xff]
    %v1932 = vld [vmem:[#allocation5 + $0x4e0] sm:$0xff]
    %v1933 = vld [vmem:[#allocation5 + $0x4e8] sm:$0xff]
    %v1934 = vld [vmem:[#allocation5 + $0x4f0] sm:$0xff]
    %v1935 = vld [vmem:[#allocation5 + $0x4f8] sm:$0xff]
    %v1936 = vld [vmem:[#allocation5 + $0x500] sm:$0xff]
    %v1937 = vld [vmem:[#allocation5 + $0x508] sm:$0xff]
    %v1938 = vld [vmem:[#allocation5 + $0x510] sm:$0xff]
    %v1939 = vld [vmem:[#allocation5 + $0x518] sm:$0xff]
    %v1940 = vld [vmem:[#allocation5 + $0x520] sm:$0xff]
    %v1941 = vld [vmem:[#allocation5 + $0x528] sm:$0xff]
    %v1942 = vld [vmem:[#allocation5 + $0x530] sm:$0xff]
    %v1943 = vld [vmem:[#allocation5 + $0x538] sm:$0xff]
    %v1944 = vld [vmem:[#allocation5 + $0x540] sm:$0xff]
    %v1945 = vld [vmem:[#allocation5 + $0x548] sm:$0xff]
    %v1946 = vld [vmem:[#allocation5 + $0x550] sm:$0xff]
    %v1947 = vld [vmem:[#allocation5 + $0x558] sm:$0xff]
    %v1948 = vld [vmem:[#allocation5 + $0x560] sm:$0xff]
    %v1949 = vld [vmem:[#allocation5 + $0x568] sm:$0xff]
    %v1950 = vld [vmem:[#allocation5 + $0x570] sm:$0xff]
    %v1951 = vld [vmem:[#allocation5 + $0x578] sm:$0xff]
    %v1952 = vld [vmem:[#allocation5 + $0x580] sm:$0xff]
    %v1953 = vld [vmem:[#allocation5 + $0x588] sm:$0xff]
    %v1954 = vld [vmem:[#allocation5 + $0x590] sm:$0xff]
    %v1955 = vld [vmem:[#allocation5 + $0x598] sm:$0xff]
    %v1956 = vld [vmem:[#allocation5 + $0x5a0] sm:$0xff]
    %v1957 = vld [vmem:[#allocation5 + $0x5a8] sm:$0xff]
    %v1958 = vld [vmem:[#allocation5 + $0x5b0] sm:$0xff]
    %v1959 = vld [vmem:[#allocation5 + $0x5b8] sm:$0xff]
    %v1960 = vld [vmem:[#allocation5 + $0x5c0] sm:$0xff]
    %v1961 = vld [vmem:[#allocation5 + $0x5c8] sm:$0xff]
    %v1962 = vld [vmem:[#allocation5 + $0x5d0] sm:$0xff]
    %v1963 = vld [vmem:[#allocation5 + $0x5d8] sm:$0xff]
    %v1964 = vld [vmem:[#allocation5 + $0x5e0] sm:$0xff]
    %v1965 = vld [vmem:[#allocation5 + $0x5e8] sm:$0xff]
    %v1966 = vld [vmem:[#allocation5 + $0x5f0] sm:$0xff]
    %v1967 = vld [vmem:[#allocation5 + $0x5f8] sm:$0xff]
    %v1968 = vld [vmem:[#allocation5 + $0x600] sm:$0xff]
    %v1969 = vld [vmem:[#allocation5 + $0x608] sm:$0xff]
    %v1970 = vld [vmem:[#allocation5 + $0x610] sm:$0xff]
    %v1971 = vld [vmem:[#allocation5 + $0x618] sm:$0xff]
    %v1972 = vld [vmem:[#allocation5 + $0x620] sm:$0xff]
    %v1973 = vld [vmem:[#allocation5 + $0x628] sm:$0xff]
    %v1974 = vld [vmem:[#allocation5 + $0x630] sm:$0xff]
    %v1975 = vld [vmem:[#allocation5 + $0x638] sm:$0xff]
    %v1976 = vld [vmem:[#allocation5 + $0x640] sm:$0xff]
    %v1977 = vld [vmem:[#allocation5 + $0x648] sm:$0xff]
    %v1978 = vld [vmem:[#allocation5 + $0x650] sm:$0xff]
    %v1979 = vld [vmem:[#allocation5 + $0x658] sm:$0xff]
    %v1980 = vld [vmem:[#allocation5 + $0x660] sm:$0xff]
    %v1981 = vld [vmem:[#allocation5 + $0x668] sm:$0xff]
    %v1982 = vld [vmem:[#allocation5 + $0x670] sm:$0xff]
    %v1983 = vld [vmem:[#allocation5 + $0x678] sm:$0xff]
    %v1984 = vld [vmem:[#allocation5 + $0x680] sm:$0xff]
    %v1985 = vld [vmem:[#allocation5 + $0x688] sm:$0xff]
    %v1986 = vld [vmem:[#allocation5 + $0x690] sm:$0xff]
    %v1987 = vld [vmem:[#allocation5 + $0x698] sm:$0xff]
    %v1988 = vld [vmem:[#allocation5 + $0x6a0] sm:$0xff]
    %v1989 = vld [vmem:[#allocation5 + $0x6a8] sm:$0xff]
    %v1990 = vld [vmem:[#allocation5 + $0x6b0] sm:$0xff]
    %v1991 = vld [vmem:[#allocation5 + $0x6b8] sm:$0xff]
    %v1992 = vld [vmem:[#allocation5 + $0x6c0] sm:$0xff]
    %v1993 = vld [vmem:[#allocation5 + $0x6c8] sm:$0xff]
    %v1994 = vld [vmem:[#allocation5 + $0x6d0] sm:$0xff]
    %v1995 = vld [vmem:[#allocation5 + $0x6d8] sm:$0xff]
    %v1996 = vld [vmem:[#allocation5 + $0x6e0] sm:$0xff]
    %v1997 = vld [vmem:[#allocation5 + $0x6e8] sm:$0xff]
    %v1998 = vld [vmem:[#allocation5 + $0x6f0] sm:$0xff]
    %v1999 = vld [vmem:[#allocation5 + $0x6f8] sm:$0xff]
    %v2000 = vld [vmem:[#allocation5 + $0x700] sm:$0xff]
    %v2001 = vld [vmem:[#allocation5 + $0x708] sm:$0xff]
    %v2002 = vld [vmem:[#allocation5 + $0x710] sm:$0xff]
    %v2003 = vld [vmem:[#allocation5 + $0x718] sm:$0xff]
    %v2004 = vld [vmem:[#allocation5 + $0x720] sm:$0xff]
    %v2005 = vld [vmem:[#allocation5 + $0x728] sm:$0xff]
    %v2006 = vld [vmem:[#allocation5 + $0x730] sm:$0xff]
    %v2007 = vld [vmem:[#allocation5 + $0x738] sm:$0xff]
    %v2008 = vld [vmem:[#allocation5 + $0x740] sm:$0xff]
    %v2009 = vld [vmem:[#allocation5 + $0x748] sm:$0xff]
    %v2010 = vld [vmem:[#allocation5 + $0x750] sm:$0xff]
    %v2011 = vld [vmem:[#allocation5 + $0x758] sm:$0xff]
    %v2012 = vld [vmem:[#allocation5 + $0x760] sm:$0xff]
    %v2013 = vld [vmem:[#allocation5 + $0x768] sm:$0xff]
    %v2014 = vld [vmem:[#allocation5 + $0x770] sm:$0xff]
    %v2015 = vld [vmem:[#allocation5 + $0x778] sm:$0xff]
    %v2016 = vld [vmem:[#allocation5 + $0x780] sm:$0xff]
    %v2017 = vld [vmem:[#allocation5 + $0x788] sm:$0xff]
    %v2018 = vld [vmem:[#allocation5 + $0x790] sm:$0xff]
    %v2019 = vld [vmem:[#allocation5 + $0x798] sm:$0xff]
    %v2020 = vld [vmem:[#allocation5 + $0x7a0] sm:$0xff]
    %v2021 = vld [vmem:[#allocation5 + $0x7a8] sm:$0xff]
    %v2022 = vld [vmem:[#allocation5 + $0x7b0] sm:$0xff]
    %v2023 = vld [vmem:[#allocation5 + $0x7b8] sm:$0xff]
    %v2024 = vld [vmem:[#allocation5 + $0x7c0] sm:$0xff]
    %v2025 = vld [vmem:[#allocation5 + $0x7c8] sm:$0xff]
    %v2026 = vld [vmem:[#allocation5 + $0x7d0] sm:$0xff]
    %v2027 = vld [vmem:[#allocation5 + $0x7d8] sm:$0xff]
    %v2028 = vld [vmem:[#allocation5 + $0x7e0] sm:$0xff]
    %v2029 = vld [vmem:[#allocation5 + $0x7e8] sm:$0xff]
    %v2030 = vld [vmem:[#allocation5 + $0x7f0] sm:$0xff]
    %v2031 = vld [vmem:[#allocation5 + $0x7f8] sm:$0xff]
    %v2032 = vld [vmem:[#allocation5 + $0x800] sm:$0xff]
    %v2033 = vld [vmem:[#allocation5 + $0x808] sm:$0xff]
    %v2034 = vld [vmem:[#allocation5 + $0x810] sm:$0xff]
    %v2035 = vld [vmem:[#allocation5 + $0x818] sm:$0xff]
    %v2036 = vld [vmem:[#allocation5 + $0x820] sm:$0xff]
    %v2037 = vld [vmem:[#allocation5 + $0x828] sm:$0xff]
    %v2038 = vld [vmem:[#allocation5 + $0x830] sm:$0xff]
    %v2039 = vld [vmem:[#allocation5 + $0x838] sm:$0xff]
    %v2040 = vld [vmem:[#allocation5 + $0x840] sm:$0xff]
    %v2041 = vld [vmem:[#allocation5 + $0x848] sm:$0xff]
    %v2042 = vld [vmem:[#allocation5 + $0x850] sm:$0xff]
    %v2043 = vld [vmem:[#allocation5 + $0x858] sm:$0xff]
    %v2044 = vld [vmem:[#allocation5 + $0x860] sm:$0xff]
    %v2045 = vld [vmem:[#allocation5 + $0x868] sm:$0xff]
    %v2046 = vld [vmem:[#allocation5 + $0x870] sm:$0xff]
    %v2047 = vld [vmem:[#allocation5 + $0x878] sm:$0xff]
    %v2048 = vld [vmem:[#allocation5 + $0x880] sm:$0xff]
    %v2049 = vld [vmem:[#allocation5 + $0x888] sm:$0xff]
    %v2050 = vld [vmem:[#allocation5 + $0x890] sm:$0xff]
    %v2051 = vld [vmem:[#allocation5 + $0x898] sm:$0xff]
    %v2052 = vld [vmem:[#allocation5 + $0x8a0] sm:$0xff]
    %v2053 = vld [vmem:[#allocation5 + $0x8a8] sm:$0xff]
    %v2054 = vld [vmem:[#allocation5 + $0x8b0] sm:$0xff]
    %v2055 = vld [vmem:[#allocation5 + $0x8b8] sm:$0xff]
    %v2056 = vld [vmem:[#allocation5 + $0x8c0] sm:$0xff]
    %v2057 = vld [vmem:[#allocation5 + $0x8c8] sm:$0xff]
    %v2058 = vld [vmem:[#allocation5 + $0x8d0] sm:$0xff]
    %v2059 = vld [vmem:[#allocation5 + $0x8d8] sm:$0xff]
    %v2060 = vld [vmem:[#allocation5 + $0x8e0] sm:$0xff]
    %v2061 = vld [vmem:[#allocation5 + $0x8e8] sm:$0xff]
    %v2062 = vld [vmem:[#allocation5 + $0x8f0] sm:$0xff]
    %v2063 = vld [vmem:[#allocation5 + $0x8f8] sm:$0xff]
    %v2064 = vld [vmem:[#allocation5 + $0x900] sm:$0xff]
    %v2065 = vld [vmem:[#allocation5 + $0x908] sm:$0xff]
    %v2066 = vld [vmem:[#allocation5 + $0x910] sm:$0xff]
    %v2067 = vld [vmem:[#allocation5 + $0x918] sm:$0xff]
    %v2068 = vld [vmem:[#allocation5 + $0x920] sm:$0xff]
    %v2069 = vld [vmem:[#allocation5 + $0x928] sm:$0xff]
    %v2070 = vld [vmem:[#allocation5 + $0x930] sm:$0xff]
    %v2071 = vld [vmem:[#allocation5 + $0x938] sm:$0xff]
    %v2072 = vld [vmem:[#allocation5 + $0x940] sm:$0xff]
    %v2073 = vld [vmem:[#allocation5 + $0x948] sm:$0xff]
    %v2074 = vld [vmem:[#allocation5 + $0x950] sm:$0xff]
    %v2075 = vld [vmem:[#allocation5 + $0x958] sm:$0xff]
    %v2076 = vld [vmem:[#allocation5 + $0x960] sm:$0xff]
    %v2077 = vld [vmem:[#allocation5 + $0x968] sm:$0xff]
    %v2078 = vld [vmem:[#allocation5 + $0x970] sm:$0xff]
    %v2079 = vld [vmem:[#allocation5 + $0x978] sm:$0xff]
    %v2080 = vld [vmem:[#allocation5 + $0x980] sm:$0xff]
    %v2081 = vld [vmem:[#allocation5 + $0x988] sm:$0xff]
    %v2082 = vld [vmem:[#allocation5 + $0x990] sm:$0xff]
    %v2083 = vld [vmem:[#allocation5 + $0x998] sm:$0xff]
    %v2084 = vld [vmem:[#allocation5 + $0x9a0] sm:$0xff]
    %v2085 = vld [vmem:[#allocation5 + $0x9a8] sm:$0xff]
    %v2086 = vld [vmem:[#allocation5 + $0x9b0] sm:$0xff]
    %v2087 = vld [vmem:[#allocation5 + $0x9b8] sm:$0xff]
    %v2088 = vld [vmem:[#allocation5 + $0x9c0] sm:$0xff]
    %v2089 = vld [vmem:[#allocation5 + $0x9c8] sm:$0xff]
    %v2090 = vld [vmem:[#allocation5 + $0x9d0] sm:$0xff]
    %v2091 = vld [vmem:[#allocation5 + $0x9d8] sm:$0xff]
    %v2092 = vld [vmem:[#allocation5 + $0x9e0] sm:$0xff]
    %v2093 = vld [vmem:[#allocation5 + $0x9e8] sm:$0xff]
    %v2094 = vld [vmem:[#allocation5 + $0x9f0] sm:$0xff]
    %v2095 = vld [vmem:[#allocation5 + $0x9f8] sm:$0xff]
    %v2096 = vld [vmem:[#allocation5 + $0xa00] sm:$0xff]
    %v2097 = vld [vmem:[#allocation5 + $0xa08] sm:$0xff]
    %v2098 = vld [vmem:[#allocation5 + $0xa10] sm:$0xff]
    %v2099 = vld [vmem:[#allocation5 + $0xa18] sm:$0xff]
    %v2100 = vld [vmem:[#allocation5 + $0xa20] sm:$0xff]
    %v2101 = vld [vmem:[#allocation5 + $0xa28] sm:$0xff]
    %v2102 = vld [vmem:[#allocation5 + $0xa30] sm:$0xff]
    %v2103 = vld [vmem:[#allocation5 + $0xa38] sm:$0xff]
    %v2104 = vld [vmem:[#allocation5 + $0xa40] sm:$0xff]
    %v2105 = vld [vmem:[#allocation5 + $0xa48] sm:$0xff]
    %v2106 = vld [vmem:[#allocation5 + $0xa50] sm:$0xff]
    %v2107 = vld [vmem:[#allocation5 + $0xa58] sm:$0xff]
    %v2108 = vld [vmem:[#allocation5 + $0xa60] sm:$0xff]
    %v2109 = vld [vmem:[#allocation5 + $0xa68] sm:$0xff]
    %v2110 = vld [vmem:[#allocation5 + $0xa70] sm:$0xff]
    %v2111 = vld [vmem:[#allocation5 + $0xa78] sm:$0xff]
    %v2112 = vld [vmem:[#allocation5 + $0xa80] sm:$0xff]
    %v2113 = vld [vmem:[#allocation5 + $0xa88] sm:$0xff]
    %v2114 = vld [vmem:[#allocation5 + $0xa90] sm:$0xff]
    %v2115 = vld [vmem:[#allocation5 + $0xa98] sm:$0xff]
    %v2116 = vld [vmem:[#allocation5 + $0xaa0] sm:$0xff]
    %v2117 = vld [vmem:[#allocation5 + $0xaa8] sm:$0xff]
    %v2118 = vld [vmem:[#allocation5 + $0xab0] sm:$0xff]
    %v2119 = vld [vmem:[#allocation5 + $0xab8] sm:$0xff]
    %v2120 = vld [vmem:[#allocation5 + $0xac0] sm:$0xff]
    %v2121 = vld [vmem:[#allocation5 + $0xac8] sm:$0xff]
    %v2122 = vld [vmem:[#allocation5 + $0xad0] sm:$0xff]
    %v2123 = vld [vmem:[#allocation5 + $0xad8] sm:$0xff]
    %v2124 = vld [vmem:[#allocation5 + $0xae0] sm:$0xff]
    %v2125 = vld [vmem:[#allocation5 + $0xae8] sm:$0xff]
    %v2126 = vld [vmem:[#allocation5 + $0xaf0] sm:$0xff]
    %v2127 = vld [vmem:[#allocation5 + $0xaf8] sm:$0xff]
    %v2128 = vld [vmem:[#allocation5 + $0xb00] sm:$0xff]
    %v2129 = vld [vmem:[#allocation5 + $0xb08] sm:$0xff]
    %v2130 = vld [vmem:[#allocation5 + $0xb10] sm:$0xff]
    %v2131 = vld [vmem:[#allocation5 + $0xb18] sm:$0xff]
    %v2132 = vld [vmem:[#allocation5 + $0xb20] sm:$0xff]
    %v2133 = vld [vmem:[#allocation5 + $0xb28] sm:$0xff]
    %v2134 = vld [vmem:[#allocation5 + $0xb30] sm:$0xff]
    %v2135 = vld [vmem:[#allocation5 + $0xb38] sm:$0xff]
    %v2136 = vld [vmem:[#allocation5 + $0xb40] sm:$0xff]
    %v2137 = vld [vmem:[#allocation5 + $0xb48] sm:$0xff]
    %v2138 = vld [vmem:[#allocation5 + $0xb50] sm:$0xff]
    %v2139 = vld [vmem:[#allocation5 + $0xb58] sm:$0xff]
    %v2140 = vld [vmem:[#allocation5 + $0xb60] sm:$0xff]
    %v2141 = vld [vmem:[#allocation5 + $0xb68] sm:$0xff]
    %v2142 = vld [vmem:[#allocation5 + $0xb70] sm:$0xff]
    %v2143 = vld [vmem:[#allocation5 + $0xb78] sm:$0xff]
    %v2144 = vld [vmem:[#allocation5 + $0xb80] sm:$0xff]
    %v2145 = vld [vmem:[#allocation5 + $0xb88] sm:$0xff]
    %v2146 = vld [vmem:[#allocation5 + $0xb90] sm:$0xff]
    %v2147 = vld [vmem:[#allocation5 + $0xb98] sm:$0xff]
    %v2148 = vld [vmem:[#allocation5 + $0xba0] sm:$0xff]
    %v2149 = vld [vmem:[#allocation5 + $0xba8] sm:$0xff]
    %v2150 = vld [vmem:[#allocation5 + $0xbb0] sm:$0xff]
    %v2151 = vld [vmem:[#allocation5 + $0xbb8] sm:$0xff]
    %v2152 = vld [vmem:[#allocation5 + $0xbc0] sm:$0xff]
    %v2153 = vld [vmem:[#allocation5 + $0xbc8] sm:$0xff]
    %v2154 = vld [vmem:[#allocation5 + $0xbd0] sm:$0xff]
    %v2155 = vld [vmem:[#allocation5 + $0xbd8] sm:$0xff]
    %v2156 = vld [vmem:[#allocation5 + $0xbe0] sm:$0xff]
    %v2157 = vld [vmem:[#allocation5 + $0xbe8] sm:$0xff]
    %v2158 = vld [vmem:[#allocation5 + $0xbf0] sm:$0xff]
    %v2159 = vld [vmem:[#allocation5 + $0xbf8] sm:$0xff]
    %v2544 = vunpack.c.l.b16 %v1776
    %v2545 = vunpack.c.h.b16 %v1776
    %v2546 = vunpack.c.l.b16 %v1777
    %v2547 = vunpack.c.h.b16 %v1777
    %v2548 = vunpack.c.l.b16 %v1778
    %v2549 = vunpack.c.h.b16 %v1778
    %v2550 = vunpack.c.l.b16 %v1779
    %v2551 = vunpack.c.h.b16 %v1779
    %v2552 = vunpack.c.l.b16 %v1780
    %v2553 = vunpack.c.h.b16 %v1780
    %v2554 = vunpack.c.l.b16 %v1781
    %v2555 = vunpack.c.h.b16 %v1781
    %v2556 = vunpack.c.l.b16 %v1782
    %v2557 = vunpack.c.h.b16 %v1782
    %v2558 = vunpack.c.l.b16 %v1783
    %v2559 = vunpack.c.h.b16 %v1783
    %v2560 = vunpack.c.l.b16 %v1784
    %v2561 = vunpack.c.h.b16 %v1784
    %v2562 = vunpack.c.l.b16 %v1785
    %v2563 = vunpack.c.h.b16 %v1785
    %v2564 = vunpack.c.l.b16 %v1786
    %v2565 = vunpack.c.h.b16 %v1786
    %v2566 = vunpack.c.l.b16 %v1787
    %v2567 = vunpack.c.h.b16 %v1787
    %v2568 = vunpack.c.l.b16 %v1788
    %v2569 = vunpack.c.h.b16 %v1788
    %v2570 = vunpack.c.l.b16 %v1789
    %v2571 = vunpack.c.h.b16 %v1789
    %v2572 = vunpack.c.l.b16 %v1790
    %v2573 = vunpack.c.h.b16 %v1790
    %v2574 = vunpack.c.l.b16 %v1791
    %v2575 = vunpack.c.h.b16 %v1791
    %v2576 = vunpack.c.l.b16 %v1792
    %v2577 = vunpack.c.h.b16 %v1792
    %v2578 = vunpack.c.l.b16 %v1793
    %v2579 = vunpack.c.h.b16 %v1793
    %v2580 = vunpack.c.l.b16 %v1794
    %v2581 = vunpack.c.h.b16 %v1794
    %v2582 = vunpack.c.l.b16 %v1795
    %v2583 = vunpack.c.h.b16 %v1795
    %v2584 = vunpack.c.l.b16 %v1796
    %v2585 = vunpack.c.h.b16 %v1796
    %v2586 = vunpack.c.l.b16 %v1797
    %v2587 = vunpack.c.h.b16 %v1797
    %v2588 = vunpack.c.l.b16 %v1798
    %v2589 = vunpack.c.h.b16 %v1798
    %v2590 = vunpack.c.l.b16 %v1799
    %v2591 = vunpack.c.h.b16 %v1799
    %v2592 = vunpack.c.l.b16 %v1800
    %v2593 = vunpack.c.h.b16 %v1800
    %v2594 = vunpack.c.l.b16 %v1801
    %v2595 = vunpack.c.h.b16 %v1801
    %v2596 = vunpack.c.l.b16 %v1802
    %v2597 = vunpack.c.h.b16 %v1802
    %v2598 = vunpack.c.l.b16 %v1803
    %v2599 = vunpack.c.h.b16 %v1803
    %v2600 = vunpack.c.l.b16 %v1804
    %v2601 = vunpack.c.h.b16 %v1804
    %v2602 = vunpack.c.l.b16 %v1805
    %v2603 = vunpack.c.h.b16 %v1805
    %v2604 = vunpack.c.l.b16 %v1806
    %v2605 = vunpack.c.h.b16 %v1806
    %v2606 = vunpack.c.l.b16 %v1807
    %v2607 = vunpack.c.h.b16 %v1807
    %v2608 = vunpack.c.l.b16 %v1808
    %v2609 = vunpack.c.h.b16 %v1808
    %v2610 = vunpack.c.l.b16 %v1809
    %v2611 = vunpack.c.h.b16 %v1809
    %v2612 = vunpack.c.l.b16 %v1810
    %v2613 = vunpack.c.h.b16 %v1810
    %v2614 = vunpack.c.l.b16 %v1811
    %v2615 = vunpack.c.h.b16 %v1811
    %v2616 = vunpack.c.l.b16 %v1812
    %v2617 = vunpack.c.h.b16 %v1812
    %v2618 = vunpack.c.l.b16 %v1813
    %v2619 = vunpack.c.h.b16 %v1813
    %v2620 = vunpack.c.l.b16 %v1814
    %v2621 = vunpack.c.h.b16 %v1814
    %v2622 = vunpack.c.l.b16 %v1815
    %v2623 = vunpack.c.h.b16 %v1815
    %v2624 = vunpack.c.l.b16 %v1816
    %v2625 = vunpack.c.h.b16 %v1816
    %v2626 = vunpack.c.l.b16 %v1817
    %v2627 = vunpack.c.h.b16 %v1817
    %v2628 = vunpack.c.l.b16 %v1818
    %v2629 = vunpack.c.h.b16 %v1818
    %v2630 = vunpack.c.l.b16 %v1819
    %v2631 = vunpack.c.h.b16 %v1819
    %v2632 = vunpack.c.l.b16 %v1820
    %v2633 = vunpack.c.h.b16 %v1820
    %v2634 = vunpack.c.l.b16 %v1821
    %v2635 = vunpack.c.h.b16 %v1821
    %v2636 = vunpack.c.l.b16 %v1822
    %v2637 = vunpack.c.h.b16 %v1822
    %v2638 = vunpack.c.l.b16 %v1823
    %v2639 = vunpack.c.h.b16 %v1823
    %v2640 = vunpack.c.l.b16 %v1824
    %v2641 = vunpack.c.h.b16 %v1824
    %v2642 = vunpack.c.l.b16 %v1825
    %v2643 = vunpack.c.h.b16 %v1825
    %v2644 = vunpack.c.l.b16 %v1826
    %v2645 = vunpack.c.h.b16 %v1826
    %v2646 = vunpack.c.l.b16 %v1827
    %v2647 = vunpack.c.h.b16 %v1827
    %v2648 = vunpack.c.l.b16 %v1828
    %v2649 = vunpack.c.h.b16 %v1828
    %v2650 = vunpack.c.l.b16 %v1829
    %v2651 = vunpack.c.h.b16 %v1829
    %v2652 = vunpack.c.l.b16 %v1830
    %v2653 = vunpack.c.h.b16 %v1830
    %v2654 = vunpack.c.l.b16 %v1831
    %v2655 = vunpack.c.h.b16 %v1831
    %v2656 = vunpack.c.l.b16 %v1832
    %v2657 = vunpack.c.h.b16 %v1832
    %v2658 = vunpack.c.l.b16 %v1833
    %v2659 = vunpack.c.h.b16 %v1833
    %v2660 = vunpack.c.l.b16 %v1834
    %v2661 = vunpack.c.h.b16 %v1834
    %v2662 = vunpack.c.l.b16 %v1835
    %v2663 = vunpack.c.h.b16 %v1835
    %v2664 = vunpack.c.l.b16 %v1836
    %v2665 = vunpack.c.h.b16 %v1836
    %v2666 = vunpack.c.l.b16 %v1837
    %v2667 = vunpack.c.h.b16 %v1837
    %v2668 = vunpack.c.l.b16 %v1838
    %v2669 = vunpack.c.h.b16 %v1838
    %v2670 = vunpack.c.l.b16 %v1839
    %v2671 = vunpack.c.h.b16 %v1839
    %v2672 = vunpack.c.l.b16 %v1840
    %v2673 = vunpack.c.h.b16 %v1840
    %v2674 = vunpack.c.l.b16 %v1841
    %v2675 = vunpack.c.h.b16 %v1841
    %v2676 = vunpack.c.l.b16 %v1842
    %v2677 = vunpack.c.h.b16 %v1842
    %v2678 = vunpack.c.l.b16 %v1843
    %v2679 = vunpack.c.h.b16 %v1843
    %v2680 = vunpack.c.l.b16 %v1844
    %v2681 = vunpack.c.h.b16 %v1844
    %v2682 = vunpack.c.l.b16 %v1845
    %v2683 = vunpack.c.h.b16 %v1845
    %v2684 = vunpack.c.l.b16 %v1846
    %v2685 = vunpack.c.h.b16 %v1846
    %v2686 = vunpack.c.l.b16 %v1847
    %v2687 = vunpack.c.h.b16 %v1847
    %v2688 = vunpack.c.l.b16 %v1848
    %v2689 = vunpack.c.h.b16 %v1848
    %v2690 = vunpack.c.l.b16 %v1849
    %v2691 = vunpack.c.h.b16 %v1849
    %v2692 = vunpack.c.l.b16 %v1850
    %v2693 = vunpack.c.h.b16 %v1850
    %v2694 = vunpack.c.l.b16 %v1851
    %v2695 = vunpack.c.h.b16 %v1851
    %v2696 = vunpack.c.l.b16 %v1852
    %v2697 = vunpack.c.h.b16 %v1852
    %v2698 = vunpack.c.l.b16 %v1853
    %v2699 = vunpack.c.h.b16 %v1853
    %v2700 = vunpack.c.l.b16 %v1854
    %v2701 = vunpack.c.h.b16 %v1854
    %v2702 = vunpack.c.l.b16 %v1855
    %v2703 = vunpack.c.h.b16 %v1855
    %v2704 = vunpack.c.l.b16 %v1856
    %v2705 = vunpack.c.h.b16 %v1856
    %v2706 = vunpack.c.l.b16 %v1857
    %v2707 = vunpack.c.h.b16 %v1857
    %v2708 = vunpack.c.l.b16 %v1858
    %v2709 = vunpack.c.h.b16 %v1858
    %v2710 = vunpack.c.l.b16 %v1859
    %v2711 = vunpack.c.h.b16 %v1859
    %v2712 = vunpack.c.l.b16 %v1860
    %v2713 = vunpack.c.h.b16 %v1860
    %v2714 = vunpack.c.l.b16 %v1861
    %v2715 = vunpack.c.h.b16 %v1861
    %v2716 = vunpack.c.l.b16 %v1862
    %v2717 = vunpack.c.h.b16 %v1862
    %v2718 = vunpack.c.l.b16 %v1863
    %v2719 = vunpack.c.h.b16 %v1863
    %v2720 = vunpack.c.l.b16 %v1864
    %v2721 = vunpack.c.h.b16 %v1864
    %v2722 = vunpack.c.l.b16 %v1865
    %v2723 = vunpack.c.h.b16 %v1865
    %v2724 = vunpack.c.l.b16 %v1866
    %v2725 = vunpack.c.h.b16 %v1866
    %v2726 = vunpack.c.l.b16 %v1867
    %v2727 = vunpack.c.h.b16 %v1867
    %v2728 = vunpack.c.l.b16 %v1868
    %v2729 = vunpack.c.h.b16 %v1868
    %v2730 = vunpack.c.l.b16 %v1869
    %v2731 = vunpack.c.h.b16 %v1869
    %v2732 = vunpack.c.l.b16 %v1870
    %v2733 = vunpack.c.h.b16 %v1870
    %v2734 = vunpack.c.l.b16 %v1871
    %v2735 = vunpack.c.h.b16 %v1871
    %v2736 = vunpack.c.l.b16 %v1872
    %v2737 = vunpack.c.h.b16 %v1872
    %v2738 = vunpack.c.l.b16 %v1873
    %v2739 = vunpack.c.h.b16 %v1873
    %v2740 = vunpack.c.l.b16 %v1874
    %v2741 = vunpack.c.h.b16 %v1874
    %v2742 = vunpack.c.l.b16 %v1875
    %v2743 = vunpack.c.h.b16 %v1875
    %v2744 = vunpack.c.l.b16 %v1876
    %v2745 = vunpack.c.h.b16 %v1876
    %v2746 = vunpack.c.l.b16 %v1877
    %v2747 = vunpack.c.h.b16 %v1877
    %v2748 = vunpack.c.l.b16 %v1878
    %v2749 = vunpack.c.h.b16 %v1878
    %v2750 = vunpack.c.l.b16 %v1879
    %v2751 = vunpack.c.h.b16 %v1879
    %v2752 = vunpack.c.l.b16 %v1880
    %v2753 = vunpack.c.h.b16 %v1880
    %v2754 = vunpack.c.l.b16 %v1881
    %v2755 = vunpack.c.h.b16 %v1881
    %v2756 = vunpack.c.l.b16 %v1882
    %v2757 = vunpack.c.h.b16 %v1882
    %v2758 = vunpack.c.l.b16 %v1883
    %v2759 = vunpack.c.h.b16 %v1883
    %v2760 = vunpack.c.l.b16 %v1884
    %v2761 = vunpack.c.h.b16 %v1884
    %v2762 = vunpack.c.l.b16 %v1885
    %v2763 = vunpack.c.h.b16 %v1885
    %v2764 = vunpack.c.l.b16 %v1886
    %v2765 = vunpack.c.h.b16 %v1886
    %v2766 = vunpack.c.l.b16 %v1887
    %v2767 = vunpack.c.h.b16 %v1887
    %v2768 = vunpack.c.l.b16 %v1888
    %v2769 = vunpack.c.h.b16 %v1888
    %v2770 = vunpack.c.l.b16 %v1889
    %v2771 = vunpack.c.h.b16 %v1889
    %v2772 = vunpack.c.l.b16 %v1890
    %v2773 = vunpack.c.h.b16 %v1890
    %v2774 = vunpack.c.l.b16 %v1891
    %v2775 = vunpack.c.h.b16 %v1891
    %v2776 = vunpack.c.l.b16 %v1892
    %v2777 = vunpack.c.h.b16 %v1892
    %v2778 = vunpack.c.l.b16 %v1893
    %v2779 = vunpack.c.h.b16 %v1893
    %v2780 = vunpack.c.l.b16 %v1894
    %v2781 = vunpack.c.h.b16 %v1894
    %v2782 = vunpack.c.l.b16 %v1895
    %v2783 = vunpack.c.h.b16 %v1895
    %v2784 = vunpack.c.l.b16 %v1896
    %v2785 = vunpack.c.h.b16 %v1896
    %v2786 = vunpack.c.l.b16 %v1897
    %v2787 = vunpack.c.h.b16 %v1897
    %v2788 = vunpack.c.l.b16 %v1898
    %v2789 = vunpack.c.h.b16 %v1898
    %v2790 = vunpack.c.l.b16 %v1899
    %v2791 = vunpack.c.h.b16 %v1899
    %v2792 = vunpack.c.l.b16 %v1900
    %v2793 = vunpack.c.h.b16 %v1900
    %v2794 = vunpack.c.l.b16 %v1901
    %v2795 = vunpack.c.h.b16 %v1901
    %v2796 = vunpack.c.l.b16 %v1902
    %v2797 = vunpack.c.h.b16 %v1902
    %v2798 = vunpack.c.l.b16 %v1903
    %v2799 = vunpack.c.h.b16 %v1903
    %v2800 = vunpack.c.l.b16 %v1904
    %v2801 = vunpack.c.h.b16 %v1904
    %v2802 = vunpack.c.l.b16 %v1905
    %v2803 = vunpack.c.h.b16 %v1905
    %v2804 = vunpack.c.l.b16 %v1906
    %v2805 = vunpack.c.h.b16 %v1906
    %v2806 = vunpack.c.l.b16 %v1907
    %v2807 = vunpack.c.h.b16 %v1907
    %v2808 = vunpack.c.l.b16 %v1908
    %v2809 = vunpack.c.h.b16 %v1908
    %v2810 = vunpack.c.l.b16 %v1909
    %v2811 = vunpack.c.h.b16 %v1909
    %v2812 = vunpack.c.l.b16 %v1910
    %v2813 = vunpack.c.h.b16 %v1910
    %v2814 = vunpack.c.l.b16 %v1911
    %v2815 = vunpack.c.h.b16 %v1911
    %v2816 = vunpack.c.l.b16 %v1912
    %v2817 = vunpack.c.h.b16 %v1912
    %v2818 = vunpack.c.l.b16 %v1913
    %v2819 = vunpack.c.h.b16 %v1913
    %v2820 = vunpack.c.l.b16 %v1914
    %v2821 = vunpack.c.h.b16 %v1914
    %v2822 = vunpack.c.l.b16 %v1915
    %v2823 = vunpack.c.h.b16 %v1915
    %v2824 = vunpack.c.l.b16 %v1916
    %v2825 = vunpack.c.h.b16 %v1916
    %v2826 = vunpack.c.l.b16 %v1917
    %v2827 = vunpack.c.h.b16 %v1917
    %v2828 = vunpack.c.l.b16 %v1918
    %v2829 = vunpack.c.h.b16 %v1918
    %v2830 = vunpack.c.l.b16 %v1919
    %v2831 = vunpack.c.h.b16 %v1919
    %v2832 = vunpack.c.l.b16 %v1920
    %v2833 = vunpack.c.h.b16 %v1920
    %v2834 = vunpack.c.l.b16 %v1921
    %v2835 = vunpack.c.h.b16 %v1921
    %v2836 = vunpack.c.l.b16 %v1922
    %v2837 = vunpack.c.h.b16 %v1922
    %v2838 = vunpack.c.l.b16 %v1923
    %v2839 = vunpack.c.h.b16 %v1923
    %v2840 = vunpack.c.l.b16 %v1924
    %v2841 = vunpack.c.h.b16 %v1924
    %v2842 = vunpack.c.l.b16 %v1925
    %v2843 = vunpack.c.h.b16 %v1925
    %v2844 = vunpack.c.l.b16 %v1926
    %v2845 = vunpack.c.h.b16 %v1926
    %v2846 = vunpack.c.l.b16 %v1927
    %v2847 = vunpack.c.h.b16 %v1927
    %v2848 = vunpack.c.l.b16 %v1928
    %v2849 = vunpack.c.h.b16 %v1928
    %v2850 = vunpack.c.l.b16 %v1929
    %v2851 = vunpack.c.h.b16 %v1929
    %v2852 = vunpack.c.l.b16 %v1930
    %v2853 = vunpack.c.h.b16 %v1930
    %v2854 = vunpack.c.l.b16 %v1931
    %v2855 = vunpack.c.h.b16 %v1931
    %v2856 = vunpack.c.l.b16 %v1932
    %v2857 = vunpack.c.h.b16 %v1932
    %v2858 = vunpack.c.l.b16 %v1933
    %v2859 = vunpack.c.h.b16 %v1933
    %v2860 = vunpack.c.l.b16 %v1934
    %v2861 = vunpack.c.h.b16 %v1934
    %v2862 = vunpack.c.l.b16 %v1935
    %v2863 = vunpack.c.h.b16 %v1935
    %v2864 = vunpack.c.l.b16 %v1936
    %v2865 = vunpack.c.h.b16 %v1936
    %v2866 = vunpack.c.l.b16 %v1937
    %v2867 = vunpack.c.h.b16 %v1937
    %v2868 = vunpack.c.l.b16 %v1938
    %v2869 = vunpack.c.h.b16 %v1938
    %v2870 = vunpack.c.l.b16 %v1939
    %v2871 = vunpack.c.h.b16 %v1939
    %v2872 = vunpack.c.l.b16 %v1940
    %v2873 = vunpack.c.h.b16 %v1940
    %v2874 = vunpack.c.l.b16 %v1941
    %v2875 = vunpack.c.h.b16 %v1941
    %v2876 = vunpack.c.l.b16 %v1942
    %v2877 = vunpack.c.h.b16 %v1942
    %v2878 = vunpack.c.l.b16 %v1943
    %v2879 = vunpack.c.h.b16 %v1943
    %v2880 = vunpack.c.l.b16 %v1944
    %v2881 = vunpack.c.h.b16 %v1944
    %v2882 = vunpack.c.l.b16 %v1945
    %v2883 = vunpack.c.h.b16 %v1945
    %v2884 = vunpack.c.l.b16 %v1946
    %v2885 = vunpack.c.h.b16 %v1946
    %v2886 = vunpack.c.l.b16 %v1947
    %v2887 = vunpack.c.h.b16 %v1947
    %v2888 = vunpack.c.l.b16 %v1948
    %v2889 = vunpack.c.h.b16 %v1948
    %v2890 = vunpack.c.l.b16 %v1949
    %v2891 = vunpack.c.h.b16 %v1949
    %v2892 = vunpack.c.l.b16 %v1950
    %v2893 = vunpack.c.h.b16 %v1950
    %v2894 = vunpack.c.l.b16 %v1951
    %v2895 = vunpack.c.h.b16 %v1951
    %v2896 = vunpack.c.l.b16 %v1952
    %v2897 = vunpack.c.h.b16 %v1952
    %v2898 = vunpack.c.l.b16 %v1953
    %v2899 = vunpack.c.h.b16 %v1953
    %v2900 = vunpack.c.l.b16 %v1954
    %v2901 = vunpack.c.h.b16 %v1954
    %v2902 = vunpack.c.l.b16 %v1955
    %v2903 = vunpack.c.h.b16 %v1955
    %v2904 = vunpack.c.l.b16 %v1956
    %v2905 = vunpack.c.h.b16 %v1956
    %v2906 = vunpack.c.l.b16 %v1957
    %v2907 = vunpack.c.h.b16 %v1957
    %v2908 = vunpack.c.l.b16 %v1958
    %v2909 = vunpack.c.h.b16 %v1958
    %v2910 = vunpack.c.l.b16 %v1959
    %v2911 = vunpack.c.h.b16 %v1959
    %v2912 = vunpack.c.l.b16 %v1960
    %v2913 = vunpack.c.h.b16 %v1960
    %v2914 = vunpack.c.l.b16 %v1961
    %v2915 = vunpack.c.h.b16 %v1961
    %v2916 = vunpack.c.l.b16 %v1962
    %v2917 = vunpack.c.h.b16 %v1962
    %v2918 = vunpack.c.l.b16 %v1963
    %v2919 = vunpack.c.h.b16 %v1963
    %v2920 = vunpack.c.l.b16 %v1964
    %v2921 = vunpack.c.h.b16 %v1964
    %v2922 = vunpack.c.l.b16 %v1965
    %v2923 = vunpack.c.h.b16 %v1965
    %v2924 = vunpack.c.l.b16 %v1966
    %v2925 = vunpack.c.h.b16 %v1966
    %v2926 = vunpack.c.l.b16 %v1967
    %v2927 = vunpack.c.h.b16 %v1967
    %v2928 = vunpack.c.l.b16 %v1968
    %v2929 = vunpack.c.h.b16 %v1968
    %v2930 = vunpack.c.l.b16 %v1969
    %v2931 = vunpack.c.h.b16 %v1969
    %v2932 = vunpack.c.l.b16 %v1970
    %v2933 = vunpack.c.h.b16 %v1970
    %v2934 = vunpack.c.l.b16 %v1971
    %v2935 = vunpack.c.h.b16 %v1971
    %v2936 = vunpack.c.l.b16 %v1972
    %v2937 = vunpack.c.h.b16 %v1972
    %v2938 = vunpack.c.l.b16 %v1973
    %v2939 = vunpack.c.h.b16 %v1973
    %v2940 = vunpack.c.l.b16 %v1974
    %v2941 = vunpack.c.h.b16 %v1974
    %v2942 = vunpack.c.l.b16 %v1975
    %v2943 = vunpack.c.h.b16 %v1975
    %v2944 = vunpack.c.l.b16 %v1976
    %v2945 = vunpack.c.h.b16 %v1976
    %v2946 = vunpack.c.l.b16 %v1977
    %v2947 = vunpack.c.h.b16 %v1977
    %v2948 = vunpack.c.l.b16 %v1978
    %v2949 = vunpack.c.h.b16 %v1978
    %v2950 = vunpack.c.l.b16 %v1979
    %v2951 = vunpack.c.h.b16 %v1979
    %v2952 = vunpack.c.l.b16 %v1980
    %v2953 = vunpack.c.h.b16 %v1980
    %v2954 = vunpack.c.l.b16 %v1981
    %v2955 = vunpack.c.h.b16 %v1981
    %v2956 = vunpack.c.l.b16 %v1982
    %v2957 = vunpack.c.h.b16 %v1982
    %v2958 = vunpack.c.l.b16 %v1983
    %v2959 = vunpack.c.h.b16 %v1983
    %v2960 = vunpack.c.l.b16 %v1984
    %v2961 = vunpack.c.h.b16 %v1984
    %v2962 = vunpack.c.l.b16 %v1985
    %v2963 = vunpack.c.h.b16 %v1985
    %v2964 = vunpack.c.l.b16 %v1986
    %v2965 = vunpack.c.h.b16 %v1986
    %v2966 = vunpack.c.l.b16 %v1987
    %v2967 = vunpack.c.h.b16 %v1987
    %v2968 = vunpack.c.l.b16 %v1988
    %v2969 = vunpack.c.h.b16 %v1988
    %v2970 = vunpack.c.l.b16 %v1989
    %v2971 = vunpack.c.h.b16 %v1989
    %v2972 = vunpack.c.l.b16 %v1990
    %v2973 = vunpack.c.h.b16 %v1990
    %v2974 = vunpack.c.l.b16 %v1991
    %v2975 = vunpack.c.h.b16 %v1991
    %v2976 = vunpack.c.l.b16 %v1992
    %v2977 = vunpack.c.h.b16 %v1992
    %v2978 = vunpack.c.l.b16 %v1993
    %v2979 = vunpack.c.h.b16 %v1993
    %v2980 = vunpack.c.l.b16 %v1994
    %v2981 = vunpack.c.h.b16 %v1994
    %v2982 = vunpack.c.l.b16 %v1995
    %v2983 = vunpack.c.h.b16 %v1995
    %v2984 = vunpack.c.l.b16 %v1996
    %v2985 = vunpack.c.h.b16 %v1996
    %v2986 = vunpack.c.l.b16 %v1997
    %v2987 = vunpack.c.h.b16 %v1997
    %v2988 = vunpack.c.l.b16 %v1998
    %v2989 = vunpack.c.h.b16 %v1998
    %v2990 = vunpack.c.l.b16 %v1999
    %v2991 = vunpack.c.h.b16 %v1999
    %v2992 = vunpack.c.l.b16 %v2000
    %v2993 = vunpack.c.h.b16 %v2000
    %v2994 = vunpack.c.l.b16 %v2001
    %v2995 = vunpack.c.h.b16 %v2001
    %v2996 = vunpack.c.l.b16 %v2002
    %v2997 = vunpack.c.h.b16 %v2002
    %v2998 = vunpack.c.l.b16 %v2003
    %v2999 = vunpack.c.h.b16 %v2003
    %v3000 = vunpack.c.l.b16 %v2004
    %v3001 = vunpack.c.h.b16 %v2004
    %v3002 = vunpack.c.l.b16 %v2005
    %v3003 = vunpack.c.h.b16 %v2005
    %v3004 = vunpack.c.l.b16 %v2006
    %v3005 = vunpack.c.h.b16 %v2006
    %v3006 = vunpack.c.l.b16 %v2007
    %v3007 = vunpack.c.h.b16 %v2007
    %v3008 = vunpack.c.l.b16 %v2008
    %v3009 = vunpack.c.h.b16 %v2008
    %v3010 = vunpack.c.l.b16 %v2009
    %v3011 = vunpack.c.h.b16 %v2009
    %v3012 = vunpack.c.l.b16 %v2010
    %v3013 = vunpack.c.h.b16 %v2010
    %v3014 = vunpack.c.l.b16 %v2011
    %v3015 = vunpack.c.h.b16 %v2011
    %v3016 = vunpack.c.l.b16 %v2012
    %v3017 = vunpack.c.h.b16 %v2012
    %v3018 = vunpack.c.l.b16 %v2013
    %v3019 = vunpack.c.h.b16 %v2013
    %v3020 = vunpack.c.l.b16 %v2014
    %v3021 = vunpack.c.h.b16 %v2014
    %v3022 = vunpack.c.l.b16 %v2015
    %v3023 = vunpack.c.h.b16 %v2015
    %v3024 = vunpack.c.l.b16 %v2016
    %v3025 = vunpack.c.h.b16 %v2016
    %v3026 = vunpack.c.l.b16 %v2017
    %v3027 = vunpack.c.h.b16 %v2017
    %v3028 = vunpack.c.l.b16 %v2018
    %v3029 = vunpack.c.h.b16 %v2018
    %v3030 = vunpack.c.l.b16 %v2019
    %v3031 = vunpack.c.h.b16 %v2019
    %v3032 = vunpack.c.l.b16 %v2020
    %v3033 = vunpack.c.h.b16 %v2020
    %v3034 = vunpack.c.l.b16 %v2021
    %v3035 = vunpack.c.h.b16 %v2021
    %v3036 = vunpack.c.l.b16 %v2022
    %v3037 = vunpack.c.h.b16 %v2022
    %v3038 = vunpack.c.l.b16 %v2023
    %v3039 = vunpack.c.h.b16 %v2023
    %v3040 = vunpack.c.l.b16 %v2024
    %v3041 = vunpack.c.h.b16 %v2024
    %v3042 = vunpack.c.l.b16 %v2025
    %v3043 = vunpack.c.h.b16 %v2025
    %v3044 = vunpack.c.l.b16 %v2026
    %v3045 = vunpack.c.h.b16 %v2026
    %v3046 = vunpack.c.l.b16 %v2027
    %v3047 = vunpack.c.h.b16 %v2027
    %v3048 = vunpack.c.l.b16 %v2028
    %v3049 = vunpack.c.h.b16 %v2028
    %v3050 = vunpack.c.l.b16 %v2029
    %v3051 = vunpack.c.h.b16 %v2029
    %v3052 = vunpack.c.l.b16 %v2030
    %v3053 = vunpack.c.h.b16 %v2030
    %v3054 = vunpack.c.l.b16 %v2031
    %v3055 = vunpack.c.h.b16 %v2031
    %v3056 = vunpack.c.l.b16 %v2032
    %v3057 = vunpack.c.h.b16 %v2032
    %v3058 = vunpack.c.l.b16 %v2033
    %v3059 = vunpack.c.h.b16 %v2033
    %v3060 = vunpack.c.l.b16 %v2034
    %v3061 = vunpack.c.h.b16 %v2034
    %v3062 = vunpack.c.l.b16 %v2035
    %v3063 = vunpack.c.h.b16 %v2035
    %v3064 = vunpack.c.l.b16 %v2036
    %v3065 = vunpack.c.h.b16 %v2036
    %v3066 = vunpack.c.l.b16 %v2037
    %v3067 = vunpack.c.h.b16 %v2037
    %v3068 = vunpack.c.l.b16 %v2038
    %v3069 = vunpack.c.h.b16 %v2038
    %v3070 = vunpack.c.l.b16 %v2039
    %v3071 = vunpack.c.h.b16 %v2039
    %v3072 = vunpack.c.l.b16 %v2040
    %v3073 = vunpack.c.h.b16 %v2040
    %v3074 = vunpack.c.l.b16 %v2041
    %v3075 = vunpack.c.h.b16 %v2041
    %v3076 = vunpack.c.l.b16 %v2042
    %v3077 = vunpack.c.h.b16 %v2042
    %v3078 = vunpack.c.l.b16 %v2043
    %v3079 = vunpack.c.h.b16 %v2043
    %v3080 = vunpack.c.l.b16 %v2044
    %v3081 = vunpack.c.h.b16 %v2044
    %v3082 = vunpack.c.l.b16 %v2045
    %v3083 = vunpack.c.h.b16 %v2045
    %v3084 = vunpack.c.l.b16 %v2046
    %v3085 = vunpack.c.h.b16 %v2046
    %v3086 = vunpack.c.l.b16 %v2047
    %v3087 = vunpack.c.h.b16 %v2047
    %v3088 = vunpack.c.l.b16 %v2048
    %v3089 = vunpack.c.h.b16 %v2048
    %v3090 = vunpack.c.l.b16 %v2049
    %v3091 = vunpack.c.h.b16 %v2049
    %v3092 = vunpack.c.l.b16 %v2050
    %v3093 = vunpack.c.h.b16 %v2050
    %v3094 = vunpack.c.l.b16 %v2051
    %v3095 = vunpack.c.h.b16 %v2051
    %v3096 = vunpack.c.l.b16 %v2052
    %v3097 = vunpack.c.h.b16 %v2052
    %v3098 = vunpack.c.l.b16 %v2053
    %v3099 = vunpack.c.h.b16 %v2053
    %v3100 = vunpack.c.l.b16 %v2054
    %v3101 = vunpack.c.h.b16 %v2054
    %v3102 = vunpack.c.l.b16 %v2055
    %v3103 = vunpack.c.h.b16 %v2055
    %v3104 = vunpack.c.l.b16 %v2056
    %v3105 = vunpack.c.h.b16 %v2056
    %v3106 = vunpack.c.l.b16 %v2057
    %v3107 = vunpack.c.h.b16 %v2057
    %v3108 = vunpack.c.l.b16 %v2058
    %v3109 = vunpack.c.h.b16 %v2058
    %v3110 = vunpack.c.l.b16 %v2059
    %v3111 = vunpack.c.h.b16 %v2059
    %v3112 = vunpack.c.l.b16 %v2060
    %v3113 = vunpack.c.h.b16 %v2060
    %v3114 = vunpack.c.l.b16 %v2061
    %v3115 = vunpack.c.h.b16 %v2061
    %v3116 = vunpack.c.l.b16 %v2062
    %v3117 = vunpack.c.h.b16 %v2062
    %v3118 = vunpack.c.l.b16 %v2063
    %v3119 = vunpack.c.h.b16 %v2063
    %v3120 = vunpack.c.l.b16 %v2064
    %v3121 = vunpack.c.h.b16 %v2064
    %v3122 = vunpack.c.l.b16 %v2065
    %v3123 = vunpack.c.h.b16 %v2065
    %v3124 = vunpack.c.l.b16 %v2066
    %v3125 = vunpack.c.h.b16 %v2066
    %v3126 = vunpack.c.l.b16 %v2067
    %v3127 = vunpack.c.h.b16 %v2067
    %v3128 = vunpack.c.l.b16 %v2068
    %v3129 = vunpack.c.h.b16 %v2068
    %v3130 = vunpack.c.l.b16 %v2069
    %v3131 = vunpack.c.h.b16 %v2069
    %v3132 = vunpack.c.l.b16 %v2070
    %v3133 = vunpack.c.h.b16 %v2070
    %v3134 = vunpack.c.l.b16 %v2071
    %v3135 = vunpack.c.h.b16 %v2071
    %v3136 = vunpack.c.l.b16 %v2072
    %v3137 = vunpack.c.h.b16 %v2072
    %v3138 = vunpack.c.l.b16 %v2073
    %v3139 = vunpack.c.h.b16 %v2073
    %v3140 = vunpack.c.l.b16 %v2074
    %v3141 = vunpack.c.h.b16 %v2074
    %v3142 = vunpack.c.l.b16 %v2075
    %v3143 = vunpack.c.h.b16 %v2075
    %v3144 = vunpack.c.l.b16 %v2076
    %v3145 = vunpack.c.h.b16 %v2076
    %v3146 = vunpack.c.l.b16 %v2077
    %v3147 = vunpack.c.h.b16 %v2077
    %v3148 = vunpack.c.l.b16 %v2078
    %v3149 = vunpack.c.h.b16 %v2078
    %v3150 = vunpack.c.l.b16 %v2079
    %v3151 = vunpack.c.h.b16 %v2079
    %v3152 = vunpack.c.l.b16 %v2080
    %v3153 = vunpack.c.h.b16 %v2080
    %v3154 = vunpack.c.l.b16 %v2081
    %v3155 = vunpack.c.h.b16 %v2081
    %v3156 = vunpack.c.l.b16 %v2082
    %v3157 = vunpack.c.h.b16 %v2082
    %v3158 = vunpack.c.l.b16 %v2083
    %v3159 = vunpack.c.h.b16 %v2083
    %v3160 = vunpack.c.l.b16 %v2084
    %v3161 = vunpack.c.h.b16 %v2084
    %v3162 = vunpack.c.l.b16 %v2085
    %v3163 = vunpack.c.h.b16 %v2085
    %v3164 = vunpack.c.l.b16 %v2086
    %v3165 = vunpack.c.h.b16 %v2086
    %v3166 = vunpack.c.l.b16 %v2087
    %v3167 = vunpack.c.h.b16 %v2087
    %v3168 = vunpack.c.l.b16 %v2088
    %v3169 = vunpack.c.h.b16 %v2088
    %v3170 = vunpack.c.l.b16 %v2089
    %v3171 = vunpack.c.h.b16 %v2089
    %v3172 = vunpack.c.l.b16 %v2090
    %v3173 = vunpack.c.h.b16 %v2090
    %v3174 = vunpack.c.l.b16 %v2091
    %v3175 = vunpack.c.h.b16 %v2091
    %v3176 = vunpack.c.l.b16 %v2092
    %v3177 = vunpack.c.h.b16 %v2092
    %v3178 = vunpack.c.l.b16 %v2093
    %v3179 = vunpack.c.h.b16 %v2093
    %v3180 = vunpack.c.l.b16 %v2094
    %v3181 = vunpack.c.h.b16 %v2094
    %v3182 = vunpack.c.l.b16 %v2095
    %v3183 = vunpack.c.h.b16 %v2095
    %v3184 = vunpack.c.l.b16 %v2096
    %v3185 = vunpack.c.h.b16 %v2096
    %v3186 = vunpack.c.l.b16 %v2097
    %v3187 = vunpack.c.h.b16 %v2097
    %v3188 = vunpack.c.l.b16 %v2098
    %v3189 = vunpack.c.h.b16 %v2098
    %v3190 = vunpack.c.l.b16 %v2099
    %v3191 = vunpack.c.h.b16 %v2099
    %v3192 = vunpack.c.l.b16 %v2100
    %v3193 = vunpack.c.h.b16 %v2100
    %v3194 = vunpack.c.l.b16 %v2101
    %v3195 = vunpack.c.h.b16 %v2101
    %v3196 = vunpack.c.l.b16 %v2102
    %v3197 = vunpack.c.h.b16 %v2102
    %v3198 = vunpack.c.l.b16 %v2103
    %v3199 = vunpack.c.h.b16 %v2103
    %v3200 = vunpack.c.l.b16 %v2104
    %v3201 = vunpack.c.h.b16 %v2104
    %v3202 = vunpack.c.l.b16 %v2105
    %v3203 = vunpack.c.h.b16 %v2105
    %v3204 = vunpack.c.l.b16 %v2106
    %v3205 = vunpack.c.h.b16 %v2106
    %v3206 = vunpack.c.l.b16 %v2107
    %v3207 = vunpack.c.h.b16 %v2107
    %v3208 = vunpack.c.l.b16 %v2108
    %v3209 = vunpack.c.h.b16 %v2108
    %v3210 = vunpack.c.l.b16 %v2109
    %v3211 = vunpack.c.h.b16 %v2109
    %v3212 = vunpack.c.l.b16 %v2110
    %v3213 = vunpack.c.h.b16 %v2110
    %v3214 = vunpack.c.l.b16 %v2111
    %v3215 = vunpack.c.h.b16 %v2111
    %v3216 = vunpack.c.l.b16 %v2112
    %v3217 = vunpack.c.h.b16 %v2112
    %v3218 = vunpack.c.l.b16 %v2113
    %v3219 = vunpack.c.h.b16 %v2113
    %v3220 = vunpack.c.l.b16 %v2114
    %v3221 = vunpack.c.h.b16 %v2114
    %v3222 = vunpack.c.l.b16 %v2115
    %v3223 = vunpack.c.h.b16 %v2115
    %v3224 = vunpack.c.l.b16 %v2116
    %v3225 = vunpack.c.h.b16 %v2116
    %v3226 = vunpack.c.l.b16 %v2117
    %v3227 = vunpack.c.h.b16 %v2117
    %v3228 = vunpack.c.l.b16 %v2118
    %v3229 = vunpack.c.h.b16 %v2118
    %v3230 = vunpack.c.l.b16 %v2119
    %v3231 = vunpack.c.h.b16 %v2119
    %v3232 = vunpack.c.l.b16 %v2120
    %v3233 = vunpack.c.h.b16 %v2120
    %v3234 = vunpack.c.l.b16 %v2121
    %v3235 = vunpack.c.h.b16 %v2121
    %v3236 = vunpack.c.l.b16 %v2122
    %v3237 = vunpack.c.h.b16 %v2122
    %v3238 = vunpack.c.l.b16 %v2123
    %v3239 = vunpack.c.h.b16 %v2123
    %v3240 = vunpack.c.l.b16 %v2124
    %v3241 = vunpack.c.h.b16 %v2124
    %v3242 = vunpack.c.l.b16 %v2125
    %v3243 = vunpack.c.h.b16 %v2125
    %v3244 = vunpack.c.l.b16 %v2126
    %v3245 = vunpack.c.h.b16 %v2126
    %v3246 = vunpack.c.l.b16 %v2127
    %v3247 = vunpack.c.h.b16 %v2127
    %v3248 = vunpack.c.l.b16 %v2128
    %v3249 = vunpack.c.h.b16 %v2128
    %v3250 = vunpack.c.l.b16 %v2129
    %v3251 = vunpack.c.h.b16 %v2129
    %v3252 = vunpack.c.l.b16 %v2130
    %v3253 = vunpack.c.h.b16 %v2130
    %v3254 = vunpack.c.l.b16 %v2131
    %v3255 = vunpack.c.h.b16 %v2131
    %v3256 = vunpack.c.l.b16 %v2132
    %v3257 = vunpack.c.h.b16 %v2132
    %v3258 = vunpack.c.l.b16 %v2133
    %v3259 = vunpack.c.h.b16 %v2133
    %v3260 = vunpack.c.l.b16 %v2134
    %v3261 = vunpack.c.h.b16 %v2134
    %v3262 = vunpack.c.l.b16 %v2135
    %v3263 = vunpack.c.h.b16 %v2135
    %v3264 = vunpack.c.l.b16 %v2136
    %v3265 = vunpack.c.h.b16 %v2136
    %v3266 = vunpack.c.l.b16 %v2137
    %v3267 = vunpack.c.h.b16 %v2137
    %v3268 = vunpack.c.l.b16 %v2138
    %v3269 = vunpack.c.h.b16 %v2138
    %v3270 = vunpack.c.l.b16 %v2139
    %v3271 = vunpack.c.h.b16 %v2139
    %v3272 = vunpack.c.l.b16 %v2140
    %v3273 = vunpack.c.h.b16 %v2140
    %v3274 = vunpack.c.l.b16 %v2141
    %v3275 = vunpack.c.h.b16 %v2141
    %v3276 = vunpack.c.l.b16 %v2142
    %v3277 = vunpack.c.h.b16 %v2142
    %v3278 = vunpack.c.l.b16 %v2143
    %v3279 = vunpack.c.h.b16 %v2143
    %v3280 = vunpack.c.l.b16 %v2144
    %v3281 = vunpack.c.h.b16 %v2144
    %v3282 = vunpack.c.l.b16 %v2145
    %v3283 = vunpack.c.h.b16 %v2145
    %v3284 = vunpack.c.l.b16 %v2146
    %v3285 = vunpack.c.h.b16 %v2146
    %v3286 = vunpack.c.l.b16 %v2147
    %v3287 = vunpack.c.h.b16 %v2147
    %v3288 = vunpack.c.l.b16 %v2148
    %v3289 = vunpack.c.h.b16 %v2148
    %v3290 = vunpack.c.l.b16 %v2149
    %v3291 = vunpack.c.h.b16 %v2149
    %v3292 = vunpack.c.l.b16 %v2150
    %v3293 = vunpack.c.h.b16 %v2150
    %v3294 = vunpack.c.l.b16 %v2151
    %v3295 = vunpack.c.h.b16 %v2151
    %v3296 = vunpack.c.l.b16 %v2152
    %v3297 = vunpack.c.h.b16 %v2152
    %v3298 = vunpack.c.l.b16 %v2153
    %v3299 = vunpack.c.h.b16 %v2153
    %v3300 = vunpack.c.l.b16 %v2154
    %v3301 = vunpack.c.h.b16 %v2154
    %v3302 = vunpack.c.l.b16 %v2155
    %v3303 = vunpack.c.h.b16 %v2155
    %v3304 = vunpack.c.l.b16 %v2156
    %v3305 = vunpack.c.h.b16 %v2156
    %v3306 = vunpack.c.l.b16 %v2157
    %v3307 = vunpack.c.h.b16 %v2157
    %v3308 = vunpack.c.l.b16 %v2158
    %v3309 = vunpack.c.h.b16 %v2158
    %v3310 = vunpack.c.l.b16 %v2159
    %v3311 = vunpack.c.h.b16 %v2159
    %v3312 = vpack.c.b16 %v2556, %v2544
    %v3313 = vpack.c.b16 %v2557, %v2545
    %v3314 = vpack.c.b16 %v2558, %v2546
    %v3315 = vpack.c.b16 %v2559, %v2547
    %v3316 = vpack.c.b16 %v2560, %v2548
    %v3317 = vpack.c.b16 %v2561, %v2549
    %v3318 = vpack.c.b16 %v2562, %v2550
    %v3319 = vpack.c.b16 %v2563, %v2551
    %v3320 = vpack.c.b16 %v2564, %v2552
    %v3321 = vpack.c.b16 %v2565, %v2553
    %v3322 = vpack.c.b16 %v2566, %v2554
    %v3323 = vpack.c.b16 %v2567, %v2555
    %v3324 = vpack.c.b16 %v2580, %v2568
    %v3325 = vpack.c.b16 %v2581, %v2569
    %v3326 = vpack.c.b16 %v2582, %v2570
    %v3327 = vpack.c.b16 %v2583, %v2571
    %v3328 = vpack.c.b16 %v2584, %v2572
    %v3329 = vpack.c.b16 %v2585, %v2573
    %v3330 = vpack.c.b16 %v2586, %v2574
    %v3331 = vpack.c.b16 %v2587, %v2575
    %v3332 = vpack.c.b16 %v2588, %v2576
    %v3333 = vpack.c.b16 %v2589, %v2577
    %v3334 = vpack.c.b16 %v2590, %v2578
    %v3335 = vpack.c.b16 %v2591, %v2579
    %v3336 = vpack.c.b16 %v2604, %v2592
    %v3337 = vpack.c.b16 %v2605, %v2593
    %v3338 = vpack.c.b16 %v2606, %v2594
    %v3339 = vpack.c.b16 %v2607, %v2595
    %v3340 = vpack.c.b16 %v2608, %v2596
    %v3341 = vpack.c.b16 %v2609, %v2597
    %v3342 = vpack.c.b16 %v2610, %v2598
    %v3343 = vpack.c.b16 %v2611, %v2599
    %v3344 = vpack.c.b16 %v2612, %v2600
    %v3345 = vpack.c.b16 %v2613, %v2601
    %v3346 = vpack.c.b16 %v2614, %v2602
    %v3347 = vpack.c.b16 %v2615, %v2603
    %v3348 = vpack.c.b16 %v2628, %v2616
    %v3349 = vpack.c.b16 %v2629, %v2617
    %v3350 = vpack.c.b16 %v2630, %v2618
    %v3351 = vpack.c.b16 %v2631, %v2619
    %v3352 = vpack.c.b16 %v2632, %v2620
    %v3353 = vpack.c.b16 %v2633, %v2621
    %v3354 = vpack.c.b16 %v2634, %v2622
    %v3355 = vpack.c.b16 %v2635, %v2623
    %v3356 = vpack.c.b16 %v2636, %v2624
    %v3357 = vpack.c.b16 %v2637, %v2625
    %v3358 = vpack.c.b16 %v2638, %v2626
    %v3359 = vpack.c.b16 %v2639, %v2627
    %v3360 = vpack.c.b16 %v2652, %v2640
    %v3361 = vpack.c.b16 %v2653, %v2641
    %v3362 = vpack.c.b16 %v2654, %v2642
    %v3363 = vpack.c.b16 %v2655, %v2643
    %v3364 = vpack.c.b16 %v2656, %v2644
    %v3365 = vpack.c.b16 %v2657, %v2645
    %v3366 = vpack.c.b16 %v2658, %v2646
    %v3367 = vpack.c.b16 %v2659, %v2647
    %v3368 = vpack.c.b16 %v2660, %v2648
    %v3369 = vpack.c.b16 %v2661, %v2649
    %v3370 = vpack.c.b16 %v2662, %v2650
    %v3371 = vpack.c.b16 %v2663, %v2651
    %v3372 = vpack.c.b16 %v2676, %v2664
    %v3373 = vpack.c.b16 %v2677, %v2665
    %v3374 = vpack.c.b16 %v2678, %v2666
    %v3375 = vpack.c.b16 %v2679, %v2667
    %v3376 = vpack.c.b16 %v2680, %v2668
    %v3377 = vpack.c.b16 %v2681, %v2669
    %v3378 = vpack.c.b16 %v2682, %v2670
    %v3379 = vpack.c.b16 %v2683, %v2671
    %v3380 = vpack.c.b16 %v2684, %v2672
    %v3381 = vpack.c.b16 %v2685, %v2673
    %v3382 = vpack.c.b16 %v2686, %v2674
    %v3383 = vpack.c.b16 %v2687, %v2675
    %v3384 = vpack.c.b16 %v2700, %v2688
    %v3385 = vpack.c.b16 %v2701, %v2689
    %v3386 = vpack.c.b16 %v2702, %v2690
    %v3387 = vpack.c.b16 %v2703, %v2691
    %v3388 = vpack.c.b16 %v2704, %v2692
    %v3389 = vpack.c.b16 %v2705, %v2693
    %v3390 = vpack.c.b16 %v2706, %v2694
    %v3391 = vpack.c.b16 %v2707, %v2695
    %v3392 = vpack.c.b16 %v2708, %v2696
    %v3393 = vpack.c.b16 %v2709, %v2697
    %v3394 = vpack.c.b16 %v2710, %v2698
    %v3395 = vpack.c.b16 %v2711, %v2699
    %v3396 = vpack.c.b16 %v2724, %v2712
    %v3397 = vpack.c.b16 %v2725, %v2713
    %v3398 = vpack.c.b16 %v2726, %v2714
    %v3399 = vpack.c.b16 %v2727, %v2715
    %v3400 = vpack.c.b16 %v2728, %v2716
    %v3401 = vpack.c.b16 %v2729, %v2717
    %v3402 = vpack.c.b16 %v2730, %v2718
    %v3403 = vpack.c.b16 %v2731, %v2719
    %v3404 = vpack.c.b16 %v2732, %v2720
    %v3405 = vpack.c.b16 %v2733, %v2721
    %v3406 = vpack.c.b16 %v2734, %v2722
    %v3407 = vpack.c.b16 %v2735, %v2723
    %v3408 = vpack.c.b16 %v2748, %v2736
    %v3409 = vpack.c.b16 %v2749, %v2737
    %v3410 = vpack.c.b16 %v2750, %v2738
    %v3411 = vpack.c.b16 %v2751, %v2739
    %v3412 = vpack.c.b16 %v2752, %v2740
    %v3413 = vpack.c.b16 %v2753, %v2741
    %v3414 = vpack.c.b16 %v2754, %v2742
    %v3415 = vpack.c.b16 %v2755, %v2743
    %v3416 = vpack.c.b16 %v2756, %v2744
    %v3417 = vpack.c.b16 %v2757, %v2745
    %v3418 = vpack.c.b16 %v2758, %v2746
    %v3419 = vpack.c.b16 %v2759, %v2747
    %v3420 = vpack.c.b16 %v2772, %v2760
    %v3421 = vpack.c.b16 %v2773, %v2761
    %v3422 = vpack.c.b16 %v2774, %v2762
    %v3423 = vpack.c.b16 %v2775, %v2763
    %v3424 = vpack.c.b16 %v2776, %v2764
    %v3425 = vpack.c.b16 %v2777, %v2765
    %v3426 = vpack.c.b16 %v2778, %v2766
    %v3427 = vpack.c.b16 %v2779, %v2767
    %v3428 = vpack.c.b16 %v2780, %v2768
    %v3429 = vpack.c.b16 %v2781, %v2769
    %v3430 = vpack.c.b16 %v2782, %v2770
    %v3431 = vpack.c.b16 %v2783, %v2771
    %v3432 = vpack.c.b16 %v2796, %v2784
    %v3433 = vpack.c.b16 %v2797, %v2785
    %v3434 = vpack.c.b16 %v2798, %v2786
    %v3435 = vpack.c.b16 %v2799, %v2787
    %v3436 = vpack.c.b16 %v2800, %v2788
    %v3437 = vpack.c.b16 %v2801, %v2789
    %v3438 = vpack.c.b16 %v2802, %v2790
    %v3439 = vpack.c.b16 %v2803, %v2791
    %v3440 = vpack.c.b16 %v2804, %v2792
    %v3441 = vpack.c.b16 %v2805, %v2793
    %v3442 = vpack.c.b16 %v2806, %v2794
    %v3443 = vpack.c.b16 %v2807, %v2795
    %v3444 = vpack.c.b16 %v2820, %v2808
    %v3445 = vpack.c.b16 %v2821, %v2809
    %v3446 = vpack.c.b16 %v2822, %v2810
    %v3447 = vpack.c.b16 %v2823, %v2811
    %v3448 = vpack.c.b16 %v2824, %v2812
    %v3449 = vpack.c.b16 %v2825, %v2813
    %v3450 = vpack.c.b16 %v2826, %v2814
    %v3451 = vpack.c.b16 %v2827, %v2815
    %v3452 = vpack.c.b16 %v2828, %v2816
    %v3453 = vpack.c.b16 %v2829, %v2817
    %v3454 = vpack.c.b16 %v2830, %v2818
    %v3455 = vpack.c.b16 %v2831, %v2819
    %v3456 = vpack.c.b16 %v2844, %v2832
    %v3457 = vpack.c.b16 %v2845, %v2833
    %v3458 = vpack.c.b16 %v2846, %v2834
    %v3459 = vpack.c.b16 %v2847, %v2835
    %v3460 = vpack.c.b16 %v2848, %v2836
    %v3461 = vpack.c.b16 %v2849, %v2837
    %v3462 = vpack.c.b16 %v2850, %v2838
    %v3463 = vpack.c.b16 %v2851, %v2839
    %v3464 = vpack.c.b16 %v2852, %v2840
    %v3465 = vpack.c.b16 %v2853, %v2841
    %v3466 = vpack.c.b16 %v2854, %v2842
    %v3467 = vpack.c.b16 %v2855, %v2843
    %v3468 = vpack.c.b16 %v2868, %v2856
    %v3469 = vpack.c.b16 %v2869, %v2857
    %v3470 = vpack.c.b16 %v2870, %v2858
    %v3471 = vpack.c.b16 %v2871, %v2859
    %v3472 = vpack.c.b16 %v2872, %v2860
    %v3473 = vpack.c.b16 %v2873, %v2861
    %v3474 = vpack.c.b16 %v2874, %v2862
    %v3475 = vpack.c.b16 %v2875, %v2863
    %v3476 = vpack.c.b16 %v2876, %v2864
    %v3477 = vpack.c.b16 %v2877, %v2865
    %v3478 = vpack.c.b16 %v2878, %v2866
    %v3479 = vpack.c.b16 %v2879, %v2867
    %v3480 = vpack.c.b16 %v2892, %v2880
    %v3481 = vpack.c.b16 %v2893, %v2881
    %v3482 = vpack.c.b16 %v2894, %v2882
    %v3483 = vpack.c.b16 %v2895, %v2883
    %v3484 = vpack.c.b16 %v2896, %v2884
    %v3485 = vpack.c.b16 %v2897, %v2885
    %v3486 = vpack.c.b16 %v2898, %v2886
    %v3487 = vpack.c.b16 %v2899, %v2887
    %v3488 = vpack.c.b16 %v2900, %v2888
    %v3489 = vpack.c.b16 %v2901, %v2889
    %v3490 = vpack.c.b16 %v2902, %v2890
    %v3491 = vpack.c.b16 %v2903, %v2891
    %v3492 = vpack.c.b16 %v2916, %v2904
    %v3493 = vpack.c.b16 %v2917, %v2905
    %v3494 = vpack.c.b16 %v2918, %v2906
    %v3495 = vpack.c.b16 %v2919, %v2907
    %v3496 = vpack.c.b16 %v2920, %v2908
    %v3497 = vpack.c.b16 %v2921, %v2909
    %v3498 = vpack.c.b16 %v2922, %v2910
    %v3499 = vpack.c.b16 %v2923, %v2911
    %v3500 = vpack.c.b16 %v2924, %v2912
    %v3501 = vpack.c.b16 %v2925, %v2913
    %v3502 = vpack.c.b16 %v2926, %v2914
    %v3503 = vpack.c.b16 %v2927, %v2915
    %v3504 = vpack.c.b16 %v2940, %v2928
    %v3505 = vpack.c.b16 %v2941, %v2929
    %v3506 = vpack.c.b16 %v2942, %v2930
    %v3507 = vpack.c.b16 %v2943, %v2931
    %v3508 = vpack.c.b16 %v2944, %v2932
    %v3509 = vpack.c.b16 %v2945, %v2933
    %v3510 = vpack.c.b16 %v2946, %v2934
    %v3511 = vpack.c.b16 %v2947, %v2935
    %v3512 = vpack.c.b16 %v2948, %v2936
    %v3513 = vpack.c.b16 %v2949, %v2937
    %v3514 = vpack.c.b16 %v2950, %v2938
    %v3515 = vpack.c.b16 %v2951, %v2939
    %v3516 = vpack.c.b16 %v2964, %v2952
    %v3517 = vpack.c.b16 %v2965, %v2953
    %v3518 = vpack.c.b16 %v2966, %v2954
    %v3519 = vpack.c.b16 %v2967, %v2955
    %v3520 = vpack.c.b16 %v2968, %v2956
    %v3521 = vpack.c.b16 %v2969, %v2957
    %v3522 = vpack.c.b16 %v2970, %v2958
    %v3523 = vpack.c.b16 %v2971, %v2959
    %v3524 = vpack.c.b16 %v2972, %v2960
    %v3525 = vpack.c.b16 %v2973, %v2961
    %v3526 = vpack.c.b16 %v2974, %v2962
    %v3527 = vpack.c.b16 %v2975, %v2963
    %v3528 = vpack.c.b16 %v2988, %v2976
    %v3529 = vpack.c.b16 %v2989, %v2977
    %v3530 = vpack.c.b16 %v2990, %v2978
    %v3531 = vpack.c.b16 %v2991, %v2979
    %v3532 = vpack.c.b16 %v2992, %v2980
    %v3533 = vpack.c.b16 %v2993, %v2981
    %v3534 = vpack.c.b16 %v2994, %v2982
    %v3535 = vpack.c.b16 %v2995, %v2983
    %v3536 = vpack.c.b16 %v2996, %v2984
    %v3537 = vpack.c.b16 %v2997, %v2985
    %v3538 = vpack.c.b16 %v2998, %v2986
    %v3539 = vpack.c.b16 %v2999, %v2987
    %v3540 = vpack.c.b16 %v3012, %v3000
    %v3541 = vpack.c.b16 %v3013, %v3001
    %v3542 = vpack.c.b16 %v3014, %v3002
    %v3543 = vpack.c.b16 %v3015, %v3003
    %v3544 = vpack.c.b16 %v3016, %v3004
    %v3545 = vpack.c.b16 %v3017, %v3005
    %v3546 = vpack.c.b16 %v3018, %v3006
    %v3547 = vpack.c.b16 %v3019, %v3007
    %v3548 = vpack.c.b16 %v3020, %v3008
    %v3549 = vpack.c.b16 %v3021, %v3009
    %v3550 = vpack.c.b16 %v3022, %v3010
    %v3551 = vpack.c.b16 %v3023, %v3011
    %v3552 = vpack.c.b16 %v3036, %v3024
    %v3553 = vpack.c.b16 %v3037, %v3025
    %v3554 = vpack.c.b16 %v3038, %v3026
    %v3555 = vpack.c.b16 %v3039, %v3027
    %v3556 = vpack.c.b16 %v3040, %v3028
    %v3557 = vpack.c.b16 %v3041, %v3029
    %v3558 = vpack.c.b16 %v3042, %v3030
    %v3559 = vpack.c.b16 %v3043, %v3031
    %v3560 = vpack.c.b16 %v3044, %v3032
    %v3561 = vpack.c.b16 %v3045, %v3033
    %v3562 = vpack.c.b16 %v3046, %v3034
    %v3563 = vpack.c.b16 %v3047, %v3035
    %v3564 = vpack.c.b16 %v3060, %v3048
    %v3565 = vpack.c.b16 %v3061, %v3049
    %v3566 = vpack.c.b16 %v3062, %v3050
    %v3567 = vpack.c.b16 %v3063, %v3051
    %v3568 = vpack.c.b16 %v3064, %v3052
    %v3569 = vpack.c.b16 %v3065, %v3053
    %v3570 = vpack.c.b16 %v3066, %v3054
    %v3571 = vpack.c.b16 %v3067, %v3055
    %v3572 = vpack.c.b16 %v3068, %v3056
    %v3573 = vpack.c.b16 %v3069, %v3057
    %v3574 = vpack.c.b16 %v3070, %v3058
    %v3575 = vpack.c.b16 %v3071, %v3059
    %v3576 = vpack.c.b16 %v3084, %v3072
    %v3577 = vpack.c.b16 %v3085, %v3073
    %v3578 = vpack.c.b16 %v3086, %v3074
    %v3579 = vpack.c.b16 %v3087, %v3075
    %v3580 = vpack.c.b16 %v3088, %v3076
    %v3581 = vpack.c.b16 %v3089, %v3077
    %v3582 = vpack.c.b16 %v3090, %v3078
    %v3583 = vpack.c.b16 %v3091, %v3079
    %v3584 = vpack.c.b16 %v3092, %v3080
    %v3585 = vpack.c.b16 %v3093, %v3081
    %v3586 = vpack.c.b16 %v3094, %v3082
    %v3587 = vpack.c.b16 %v3095, %v3083
    %v3588 = vpack.c.b16 %v3108, %v3096
    %v3589 = vpack.c.b16 %v3109, %v3097
    %v3590 = vpack.c.b16 %v3110, %v3098
    %v3591 = vpack.c.b16 %v3111, %v3099
    %v3592 = vpack.c.b16 %v3112, %v3100
    %v3593 = vpack.c.b16 %v3113, %v3101
    %v3594 = vpack.c.b16 %v3114, %v3102
    %v3595 = vpack.c.b16 %v3115, %v3103
    %v3596 = vpack.c.b16 %v3116, %v3104
    %v3597 = vpack.c.b16 %v3117, %v3105
    %v3598 = vpack.c.b16 %v3118, %v3106
    %v3599 = vpack.c.b16 %v3119, %v3107
    %v3600 = vpack.c.b16 %v3132, %v3120
    %v3601 = vpack.c.b16 %v3133, %v3121
    %v3602 = vpack.c.b16 %v3134, %v3122
    %v3603 = vpack.c.b16 %v3135, %v3123
    %v3604 = vpack.c.b16 %v3136, %v3124
    %v3605 = vpack.c.b16 %v3137, %v3125
    %v3606 = vpack.c.b16 %v3138, %v3126
    %v3607 = vpack.c.b16 %v3139, %v3127
    %v3608 = vpack.c.b16 %v3140, %v3128
    %v3609 = vpack.c.b16 %v3141, %v3129
    %v3610 = vpack.c.b16 %v3142, %v3130
    %v3611 = vpack.c.b16 %v3143, %v3131
    %v3612 = vpack.c.b16 %v3156, %v3144
    %v3613 = vpack.c.b16 %v3157, %v3145
    %v3614 = vpack.c.b16 %v3158, %v3146
    %v3615 = vpack.c.b16 %v3159, %v3147
    %v3616 = vpack.c.b16 %v3160, %v3148
    %v3617 = vpack.c.b16 %v3161, %v3149
    %v3618 = vpack.c.b16 %v3162, %v3150
    %v3619 = vpack.c.b16 %v3163, %v3151
    %v3620 = vpack.c.b16 %v3164, %v3152
    %v3621 = vpack.c.b16 %v3165, %v3153
    %v3622 = vpack.c.b16 %v3166, %v3154
    %v3623 = vpack.c.b16 %v3167, %v3155
    %v3624 = vpack.c.b16 %v3180, %v3168
    %v3625 = vpack.c.b16 %v3181, %v3169
    %v3626 = vpack.c.b16 %v3182, %v3170
    %v3627 = vpack.c.b16 %v3183, %v3171
    %v3628 = vpack.c.b16 %v3184, %v3172
    %v3629 = vpack.c.b16 %v3185, %v3173
    %v3630 = vpack.c.b16 %v3186, %v3174
    %v3631 = vpack.c.b16 %v3187, %v3175
    %v3632 = vpack.c.b16 %v3188, %v3176
    %v3633 = vpack.c.b16 %v3189, %v3177
    %v3634 = vpack.c.b16 %v3190, %v3178
    %v3635 = vpack.c.b16 %v3191, %v3179
    %v3636 = vpack.c.b16 %v3204, %v3192
    %v3637 = vpack.c.b16 %v3205, %v3193
    %v3638 = vpack.c.b16 %v3206, %v3194
    %v3639 = vpack.c.b16 %v3207, %v3195
    %v3640 = vpack.c.b16 %v3208, %v3196
    %v3641 = vpack.c.b16 %v3209, %v3197
    %v3642 = vpack.c.b16 %v3210, %v3198
    %v3643 = vpack.c.b16 %v3211, %v3199
    %v3644 = vpack.c.b16 %v3212, %v3200
    %v3645 = vpack.c.b16 %v3213, %v3201
    %v3646 = vpack.c.b16 %v3214, %v3202
    %v3647 = vpack.c.b16 %v3215, %v3203
    %v3648 = vpack.c.b16 %v3228, %v3216
    %v3649 = vpack.c.b16 %v3229, %v3217
    %v3650 = vpack.c.b16 %v3230, %v3218
    %v3651 = vpack.c.b16 %v3231, %v3219
    %v3652 = vpack.c.b16 %v3232, %v3220
    %v3653 = vpack.c.b16 %v3233, %v3221
    %v3654 = vpack.c.b16 %v3234, %v3222
    %v3655 = vpack.c.b16 %v3235, %v3223
    %v3656 = vpack.c.b16 %v3236, %v3224
    %v3657 = vpack.c.b16 %v3237, %v3225
    %v3658 = vpack.c.b16 %v3238, %v3226
    %v3659 = vpack.c.b16 %v3239, %v3227
    %v3660 = vpack.c.b16 %v3252, %v3240
    %v3661 = vpack.c.b16 %v3253, %v3241
    %v3662 = vpack.c.b16 %v3254, %v3242
    %v3663 = vpack.c.b16 %v3255, %v3243
    %v3664 = vpack.c.b16 %v3256, %v3244
    %v3665 = vpack.c.b16 %v3257, %v3245
    %v3666 = vpack.c.b16 %v3258, %v3246
    %v3667 = vpack.c.b16 %v3259, %v3247
    %v3668 = vpack.c.b16 %v3260, %v3248
    %v3669 = vpack.c.b16 %v3261, %v3249
    %v3670 = vpack.c.b16 %v3262, %v3250
    %v3671 = vpack.c.b16 %v3263, %v3251
    %v3672 = vpack.c.b16 %v3276, %v3264
    %v3673 = vpack.c.b16 %v3277, %v3265
    %v3674 = vpack.c.b16 %v3278, %v3266
    %v3675 = vpack.c.b16 %v3279, %v3267
    %v3676 = vpack.c.b16 %v3280, %v3268
    %v3677 = vpack.c.b16 %v3281, %v3269
    %v3678 = vpack.c.b16 %v3282, %v3270
    %v3679 = vpack.c.b16 %v3283, %v3271
    %v3680 = vpack.c.b16 %v3284, %v3272
    %v3681 = vpack.c.b16 %v3285, %v3273
    %v3682 = vpack.c.b16 %v3286, %v3274
    %v3683 = vpack.c.b16 %v3287, %v3275
    %v3684 = vpack.c.b16 %v3300, %v3288
    %v3685 = vpack.c.b16 %v3301, %v3289
    %v3686 = vpack.c.b16 %v3302, %v3290
    %v3687 = vpack.c.b16 %v3303, %v3291
    %v3688 = vpack.c.b16 %v3304, %v3292
    %v3689 = vpack.c.b16 %v3305, %v3293
    %v3690 = vpack.c.b16 %v3306, %v3294
    %v3691 = vpack.c.b16 %v3307, %v3295
    %v3692 = vpack.c.b16 %v3308, %v3296
    %v3693 = vpack.c.b16 %v3309, %v3297
    %v3694 = vpack.c.b16 %v3310, %v3298
    %v3695 = vpack.c.b16 %v3311, %v3299
    %4080 = vmatprep.subr.bf16.mxu0 %v3397
    %4081 = vmatpush1.bf16.msra.mxu0 %v3396
    %4082 = vmatprep.subr.bf16.mxu0 %v3385
    %4083 = vmatpush1.bf16.msra.mxu0 %v3384
    %4084 = vmatprep.subr.bf16.mxu0 %v3373
    %4085 = vmatpush1.bf16.msra.mxu0 %v3372
    %4086 = vmatprep.subr.bf16.mxu0 %v3361
    %4087 = vmatpush1.bf16.msra.mxu0 %v3360
    %4088 = vmatprep.subr.bf16.mxu0 %v3349
    %4089 = vmatpush1.bf16.msra.mxu0 %v3348
    %4090 = vmatprep.subr.bf16.mxu0 %v3337
    %4091 = vmatpush1.bf16.msra.mxu0 %v3336
    %4092 = vmatprep.subr.bf16.mxu0 %v3325
    %4093 = vmatpush1.bf16.msra.mxu0 %v3324
    %4094 = vmatprep.subr.bf16.mxu0 %v3313
    %4095 = vmatpush1.bf16.msra.mxu0 %v3312
    %4096 = vmatprep.subr.bf16.mxu0 %v3493
    %4097 = vmatpush2.bf16.msra.mxu0 %v3492
    %4098 = vmatprep.subr.bf16.mxu0 %v3481
    %4099 = vmatpush2.bf16.msra.mxu0 %v3480
    %4100 = vmatprep.subr.bf16.mxu0 %v3469
    %4101 = vmatpush2.bf16.msra.mxu0 %v3468
    %4102 = vmatprep.subr.bf16.mxu0 %v3457
    %4103 = vmatpush2.bf16.msra.mxu0 %v3456
    %4104 = vmatprep.subr.bf16.mxu0 %v3445
    %4105 = vmatpush2.bf16.msra.mxu0 %v3444
    %4106 = vmatprep.subr.bf16.mxu0 %v3433
    %4107 = vmatpush2.bf16.msra.mxu0 %v3432
    %4108 = vmatprep.subr.bf16.mxu0 %v3421
    %4109 = vmatpush2.bf16.msra.mxu0 %v3420
    %4110 = vmatprep.subr.bf16.mxu0 %v3409
    %4111 = vmatpush2.bf16.msra.mxu0 %v3408
    %4112 = vmatprep.mubr.bf16.mxu0 %v1773
    %4113 = vmatmul.mubr.bf16.gmra.mxu0 %v1772
    %v4114 = vpop.f32.mrf.mxu0
    %v4115 = vadd.f32 0.0, %v4114
    %v4116 = vpop.f32.mrf.mxu0
    %v4117 = vadd.f32 0.0, %v4116
    %v4118 = vpop.f32.mrf.mxu0
    %v4119 = vadd.f32 0.0, %v4118
    %v4120 = vpop.f32.mrf.mxu0
    %v4121 = vadd.f32 0.0, %v4120
    %4122 = vdwg.mxu0
    %4123 = vmatprep.subr.bf16.mxu0 %v3589
    %4124 = vmatpush1.bf16.msra.mxu0 %v3588
    %4125 = vmatprep.subr.bf16.mxu0 %v3577
    %4126 = vmatpush1.bf16.msra.mxu0 %v3576
    %4127 = vmatprep.subr.bf16.mxu0 %v3565
    %4128 = vmatpush1.bf16.msra.mxu0 %v3564
    %4129 = vmatprep.subr.bf16.mxu0 %v3553
    %4130 = vmatpush1.bf16.msra.mxu0 %v3552
    %4131 = vmatprep.subr.bf16.mxu0 %v3541
    %4132 = vmatpush1.bf16.msra.mxu0 %v3540
    %4133 = vmatprep.subr.bf16.mxu0 %v3529
    %4134 = vmatpush1.bf16.msra.mxu0 %v3528
    %4135 = vmatprep.subr.bf16.mxu0 %v3517
    %4136 = vmatpush1.bf16.msra.mxu0 %v3516
    %4137 = vmatprep.subr.bf16.mxu0 %v3505
    %4138 = vmatpush1.bf16.msra.mxu0 %v3504
    %4139 = vmatprep.subr.bf16.mxu0 %v3685
    %4140 = vmatpush2.bf16.msra.mxu0 %v3684
    %4141 = vmatprep.subr.bf16.mxu0 %v3673
    %4142 = vmatpush2.bf16.msra.mxu0 %v3672
    %4143 = vmatprep.subr.bf16.mxu0 %v3661
    %4144 = vmatpush2.bf16.msra.mxu0 %v3660
    %4145 = vmatprep.subr.bf16.mxu0 %v3649
    %4146 = vmatpush2.bf16.msra.mxu0 %v3648
    %4147 = vmatprep.subr.bf16.mxu0 %v3637
    %4148 = vmatpush2.bf16.msra.mxu0 %v3636
    %4149 = vmatprep.subr.bf16.mxu0 %v3625
    %4150 = vmatpush2.bf16.msra.mxu0 %v3624
    %4151 = vmatprep.subr.bf16.mxu0 %v3613
    %4152 = vmatpush2.bf16.msra.mxu0 %v3612
    %4153 = vmatprep.subr.bf16.mxu0 %v3601
    %4154 = vmatpush2.bf16.msra.mxu0 %v3600
    %4155 = vmatprep.mubr.bf16.mxu0 %v1775
    %4156 = vmatmul.mubr.bf16.gmra.mxu0 %v1774
    %v4157 = vpop.f32.mrf.mxu0
    %v4158 = vadd.f32 %v4115, %v4157
    %v4159 = vpop.f32.mrf.mxu0
    %v4160 = vadd.f32 %v4117, %v4159
    %v4161 = vpop.f32.mrf.mxu0
    %v4162 = vadd.f32 %v4119, %v4161
    %v4163 = vpop.f32.mrf.mxu0
    %v4164 = vadd.f32 %v4121, %v4163
    %4165 = vdwg.mxu0
    %4166 = vmatprep.subr.bf16.mxu0 %v3399
    %4167 = vmatpush1.bf16.msra.mxu0 %v3398
    %4168 = vmatprep.subr.bf16.mxu0 %v3387
    %4169 = vmatpush1.bf16.msra.mxu0 %v3386
    %4170 = vmatprep.subr.bf16.mxu0 %v3375
    %4171 = vmatpush1.bf16.msra.mxu0 %v3374
    %4172 = vmatprep.subr.bf16.mxu0 %v3363
    %4173 = vmatpush1.bf16.msra.mxu0 %v3362
    %4174 = vmatprep.subr.bf16.mxu0 %v3351
    %4175 = vmatpush1.bf16.msra.mxu0 %v3350
    %4176 = vmatprep.subr.bf16.mxu0 %v3339
    %4177 = vmatpush1.bf16.msra.mxu0 %v3338
    %4178 = vmatprep.subr.bf16.mxu0 %v3327
    %4179 = vmatpush1.bf16.msra.mxu0 %v3326
    %4180 = vmatprep.subr.bf16.mxu0 %v3315
    %4181 = vmatpush1.bf16.msra.mxu0 %v3314
    %4182 = vmatprep.subr.bf16.mxu0 %v3495
    %4183 = vmatpush2.bf16.msra.mxu0 %v3494
    %4184 = vmatprep.subr.bf16.mxu0 %v3483
    %4185 = vmatpush2.bf16.msra.mxu0 %v3482
    %4186 = vmatprep.subr.bf16.mxu0 %v3471
    %4187 = vmatpush2.bf16.msra.mxu0 %v3470
    %4188 = vmatprep.subr.bf16.mxu0 %v3459
    %4189 = vmatpush2.bf16.msra.mxu0 %v3458
    %4190 = vmatprep.subr.bf16.mxu0 %v3447
    %4191 = vmatpush2.bf16.msra.mxu0 %v3446
    %4192 = vmatprep.subr.bf16.mxu0 %v3435
    %4193 = vmatpush2.bf16.msra.mxu0 %v3434
    %4194 = vmatprep.subr.bf16.mxu0 %v3423
    %4195 = vmatpush2.bf16.msra.mxu0 %v3422
    %4196 = vmatprep.subr.bf16.mxu0 %v3411
    %4197 = vmatpush2.bf16.msra.mxu0 %v3410
    %4198 = vmatprep.mubr.bf16.mxu0 %v1773
    %4199 = vmatmul.mubr.bf16.gmra.mxu0 %v1772
    %v4200 = vpop.f32.mrf.mxu0
    %v4201 = vadd.f32 0.0, %v4200
    %v4202 = vpop.f32.mrf.mxu0
    %v4203 = vadd.f32 0.0, %v4202
    %v4204 = vpop.f32.mrf.mxu0
    %v4205 = vadd.f32 0.0, %v4204
    %v4206 = vpop.f32.mrf.mxu0
    %v4207 = vadd.f32 0.0, %v4206
    %4208 = vdwg.mxu0
    %4209 = vmatprep.subr.bf16.mxu0 %v3591
    %4210 = vmatpush1.bf16.msra.mxu0 %v3590
    %4211 = vmatprep.subr.bf16.mxu0 %v3579
    %4212 = vmatpush1.bf16.msra.mxu0 %v3578
    %4213 = vmatprep.subr.bf16.mxu0 %v3567
    %4214 = vmatpush1.bf16.msra.mxu0 %v3566
    %4215 = vmatprep.subr.bf16.mxu0 %v3555
    %4216 = vmatpush1.bf16.msra.mxu0 %v3554
    %4217 = vmatprep.subr.bf16.mxu0 %v3543
    %4218 = vmatpush1.bf16.msra.mxu0 %v3542
    %4219 = vmatprep.subr.bf16.mxu0 %v3531
    %4220 = vmatpush1.bf16.msra.mxu0 %v3530
    %4221 = vmatprep.subr.bf16.mxu0 %v3519
    %4222 = vmatpush1.bf16.msra.mxu0 %v3518
    %4223 = vmatprep.subr.bf16.mxu0 %v3507
    %4224 = vmatpush1.bf16.msra.mxu0 %v3506
    %4225 = vmatprep.subr.bf16.mxu0 %v3687
    %4226 = vmatpush2.bf16.msra.mxu0 %v3686
    %4227 = vmatprep.subr.bf16.mxu0 %v3675
    %4228 = vmatpush2.bf16.msra.mxu0 %v3674
    %4229 = vmatprep.subr.bf16.mxu0 %v3663
    %4230 = vmatpush2.bf16.msra.mxu0 %v3662
    %4231 = vmatprep.subr.bf16.mxu0 %v3651
    %4232 = vmatpush2.bf16.msra.mxu0 %v3650
    %4233 = vmatprep.subr.bf16.mxu0 %v3639
    %4234 = vmatpush2.bf16.msra.mxu0 %v3638
    %4235 = vmatprep.subr.bf16.mxu0 %v3627
    %4236 = vmatpush2.bf16.msra.mxu0 %v3626
    %4237 = vmatprep.subr.bf16.mxu0 %v3615
    %4238 = vmatpush2.bf16.msra.mxu0 %v3614
    %4239 = vmatprep.subr.bf16.mxu0 %v3603
    %4240 = vmatpush2.bf16.msra.mxu0 %v3602
    %4241 = vmatprep.mubr.bf16.mxu0 %v1775
    %4242 = vmatmul.mubr.bf16.gmra.mxu0 %v1774
    %v4243 = vpop.f32.mrf.mxu0
    %v4244 = vadd.f32 %v4201, %v4243
    %v4245 = vpop.f32.mrf.mxu0
    %v4246 = vadd.f32 %v4203, %v4245
    %v4247 = vpop.f32.mrf.mxu0
    %v4248 = vadd.f32 %v4205, %v4247
    %v4249 = vpop.f32.mrf.mxu0
    %v4250 = vadd.f32 %v4207, %v4249
    %4251 = vdwg.mxu0
    %4252 = vmatprep.subr.bf16.mxu0 %v3401
    %4253 = vmatpush1.bf16.msra.mxu0 %v3400
    %4254 = vmatprep.subr.bf16.mxu0 %v3389
    %4255 = vmatpush1.bf16.msra.mxu0 %v3388
    %4256 = vmatprep.subr.bf16.mxu0 %v3377
    %4257 = vmatpush1.bf16.msra.mxu0 %v3376
    %4258 = vmatprep.subr.bf16.mxu0 %v3365
    %4259 = vmatpush1.bf16.msra.mxu0 %v3364
    %4260 = vmatprep.subr.bf16.mxu0 %v3353
    %4261 = vmatpush1.bf16.msra.mxu0 %v3352
    %4262 = vmatprep.subr.bf16.mxu0 %v3341
    %4263 = vmatpush1.bf16.msra.mxu0 %v3340
    %4264 = vmatprep.subr.bf16.mxu0 %v3329
    %4265 = vmatpush1.bf16.msra.mxu0 %v3328
    %4266 = vmatprep.subr.bf16.mxu0 %v3317
    %4267 = vmatpush1.bf16.msra.mxu0 %v3316
    %4268 = vmatprep.subr.bf16.mxu0 %v3497
    %4269 = vmatpush2.bf16.msra.mxu0 %v3496
    %4270 = vmatprep.subr.bf16.mxu0 %v3485
    %4271 = vmatpush2.bf16.msra.mxu0 %v3484
    %4272 = vmatprep.subr.bf16.mxu0 %v3473
    %4273 = vmatpush2.bf16.msra.mxu0 %v3472
    %4274 = vmatprep.subr.bf16.mxu0 %v3461
    %4275 = vmatpush2.bf16.msra.mxu0 %v3460
    %4276 = vmatprep.subr.bf16.mxu0 %v3449
    %4277 = vmatpush2.bf16.msra.mxu0 %v3448
    %4278 = vmatprep.subr.bf16.mxu0 %v3437
    %4279 = vmatpush2.bf16.msra.mxu0 %v3436
    %4280 = vmatprep.subr.bf16.mxu0 %v3425
    %4281 = vmatpush2.bf16.msra.mxu0 %v3424
    %4282 = vmatprep.subr.bf16.mxu0 %v3413
    %4283 = vmatpush2.bf16.msra.mxu0 %v3412
    %4284 = vmatprep.mubr.bf16.mxu0 %v1773
    %4285 = vmatmul.mubr.bf16.gmra.mxu0 %v1772
    %v4286 = vpop.f32.mrf.mxu0
    %v4287 = vadd.f32 0.0, %v4286
    %v4288 = vpop.f32.mrf.mxu0
    %v4289 = vadd.f32 0.0, %v4288
    %v4290 = vpop.f32.mrf.mxu0
    %v4291 = vadd.f32 0.0, %v4290
    %v4292 = vpop.f32.mrf.mxu0
    %v4293 = vadd.f32 0.0, %v4292
    %4294 = vdwg.mxu0
    %4295 = vmatprep.subr.bf16.mxu0 %v3593
    %4296 = vmatpush1.bf16.msra.mxu0 %v3592
    %4297 = vmatprep.subr.bf16.mxu0 %v3581
    %4298 = vmatpush1.bf16.msra.mxu0 %v3580
    %4299 = vmatprep.subr.bf16.mxu0 %v3569
    %4300 = vmatpush1.bf16.msra.mxu0 %v3568
    %4301 = vmatprep.subr.bf16.mxu0 %v3557
    %4302 = vmatpush1.bf16.msra.mxu0 %v3556
    %4303 = vmatprep.subr.bf16.mxu0 %v3545
    %4304 = vmatpush1.bf16.msra.mxu0 %v3544
    %4305 = vmatprep.subr.bf16.mxu0 %v3533
    %4306 = vmatpush1.bf16.msra.mxu0 %v3532
    %4307 = vmatprep.subr.bf16.mxu0 %v3521
    %4308 = vmatpush1.bf16.msra.mxu0 %v3520
    %4309 = vmatprep.subr.bf16.mxu0 %v3509
    %4310 = vmatpush1.bf16.msra.mxu0 %v3508
    %4311 = vmatprep.subr.bf16.mxu0 %v3689
    %4312 = vmatpush2.bf16.msra.mxu0 %v3688
    %4313 = vmatprep.subr.bf16.mxu0 %v3677
    %4314 = vmatpush2.bf16.msra.mxu0 %v3676
    %4315 = vmatprep.subr.bf16.mxu0 %v3665
    %4316 = vmatpush2.bf16.msra.mxu0 %v3664
    %4317 = vmatprep.subr.bf16.mxu0 %v3653
    %4318 = vmatpush2.bf16.msra.mxu0 %v3652
    %4319 = vmatprep.subr.bf16.mxu0 %v3641
    %4320 = vmatpush2.bf16.msra.mxu0 %v3640
    %4321 = vmatprep.subr.bf16.mxu0 %v3629
    %4322 = vmatpush2.bf16.msra.mxu0 %v3628
    %4323 = vmatprep.subr.bf16.mxu0 %v3617
    %4324 = vmatpush2.bf16.msra.mxu0 %v3616
    %4325 = vmatprep.subr.bf16.mxu0 %v3605
    %4326 = vmatpush2.bf16.msra.mxu0 %v3604
    %4327 = vmatprep.mubr.bf16.mxu0 %v1775
    %4328 = vmatmul.mubr.bf16.gmra.mxu0 %v1774
    %v4329 = vpop.f32.mrf.mxu0
    %v4330 = vadd.f32 %v4287, %v4329
    %v4331 = vpop.f32.mrf.mxu0
    %v4332 = vadd.f32 %v4289, %v4331
    %v4333 = vpop.f32.mrf.mxu0
    %v4334 = vadd.f32 %v4291, %v4333
    %v4335 = vpop.f32.mrf.mxu0
    %v4336 = vadd.f32 %v4293, %v4335
    %4337 = vdwg.mxu0
    %4338 = vmatprep.subr.bf16.mxu0 %v3403
    %4339 = vmatpush1.bf16.msra.mxu0 %v3402
    %4340 = vmatprep.subr.bf16.mxu0 %v3391
    %4341 = vmatpush1.bf16.msra.mxu0 %v3390
    %4342 = vmatprep.subr.bf16.mxu0 %v3379
    %4343 = vmatpush1.bf16.msra.mxu0 %v3378
    %4344 = vmatprep.subr.bf16.mxu0 %v3367
    %4345 = vmatpush1.bf16.msra.mxu0 %v3366
    %4346 = vmatprep.subr.bf16.mxu0 %v3355
    %4347 = vmatpush1.bf16.msra.mxu0 %v3354
    %4348 = vmatprep.subr.bf16.mxu0 %v3343
    %4349 = vmatpush1.bf16.msra.mxu0 %v3342
    %4350 = vmatprep.subr.bf16.mxu0 %v3331
    %4351 = vmatpush1.bf16.msra.mxu0 %v3330
    %4352 = vmatprep.subr.bf16.mxu0 %v3319
    %4353 = vmatpush1.bf16.msra.mxu0 %v3318
    %4354 = vmatprep.subr.bf16.mxu0 %v3499
    %4355 = vmatpush2.bf16.msra.mxu0 %v3498
    %4356 = vmatprep.subr.bf16.mxu0 %v3487
    %4357 = vmatpush2.bf16.msra.mxu0 %v3486
    %4358 = vmatprep.subr.bf16.mxu0 %v3475
    %4359 = vmatpush2.bf16.msra.mxu0 %v3474
    %4360 = vmatprep.subr.bf16.mxu0 %v3463
    %4361 = vmatpush2.bf16.msra.mxu0 %v3462
    %4362 = vmatprep.subr.bf16.mxu0 %v3451
    %4363 = vmatpush2.bf16.msra.mxu0 %v3450
    %4364 = vmatprep.subr.bf16.mxu0 %v3439
    %4365 = vmatpush2.bf16.msra.mxu0 %v3438
    %4366 = vmatprep.subr.bf16.mxu0 %v3427
    %4367 = vmatpush2.bf16.msra.mxu0 %v3426
    %4368 = vmatprep.subr.bf16.mxu0 %v3415
    %4369 = vmatpush2.bf16.msra.mxu0 %v3414
    %4370 = vmatprep.mubr.bf16.mxu0 %v1773
    %4371 = vmatmul.mubr.bf16.gmra.mxu0 %v1772
    %v4372 = vpop.f32.mrf.mxu0
    %v4373 = vadd.f32 0.0, %v4372
    %v4374 = vpop.f32.mrf.mxu0
    %v4375 = vadd.f32 0.0, %v4374
    %v4376 = vpop.f32.mrf.mxu0
    %v4377 = vadd.f32 0.0, %v4376
    %v4378 = vpop.f32.mrf.mxu0
    %v4379 = vadd.f32 0.0, %v4378
    %4380 = vdwg.mxu0
    %4381 = vmatprep.subr.bf16.mxu0 %v3595
    %4382 = vmatpush1.bf16.msra.mxu0 %v3594
    %4383 = vmatprep.subr.bf16.mxu0 %v3583
    %4384 = vmatpush1.bf16.msra.mxu0 %v3582
    %4385 = vmatprep.subr.bf16.mxu0 %v3571
    %4386 = vmatpush1.bf16.msra.mxu0 %v3570
    %4387 = vmatprep.subr.bf16.mxu0 %v3559
    %4388 = vmatpush1.bf16.msra.mxu0 %v3558
    %4389 = vmatprep.subr.bf16.mxu0 %v3547
    %4390 = vmatpush1.bf16.msra.mxu0 %v3546
    %4391 = vmatprep.subr.bf16.mxu0 %v3535
    %4392 = vmatpush1.bf16.msra.mxu0 %v3534
    %4393 = vmatprep.subr.bf16.mxu0 %v3523
    %4394 = vmatpush1.bf16.msra.mxu0 %v3522
    %4395 = vmatprep.subr.bf16.mxu0 %v3511
    %4396 = vmatpush1.bf16.msra.mxu0 %v3510
    %4397 = vmatprep.subr.bf16.mxu0 %v3691
    %4398 = vmatpush2.bf16.msra.mxu0 %v3690
    %4399 = vmatprep.subr.bf16.mxu0 %v3679
    %4400 = vmatpush2.bf16.msra.mxu0 %v3678
    %4401 = vmatprep.subr.bf16.mxu0 %v3667
    %4402 = vmatpush2.bf16.msra.mxu0 %v3666
    %4403 = vmatprep.subr.bf16.mxu0 %v3655
    %4404 = vmatpush2.bf16.msra.mxu0 %v3654
    %4405 = vmatprep.subr.bf16.mxu0 %v3643
    %4406 = vmatpush2.bf16.msra.mxu0 %v3642
    %4407 = vmatprep.subr.bf16.mxu0 %v3631
    %4408 = vmatpush2.bf16.msra.mxu0 %v3630
    %4409 = vmatprep.subr.bf16.mxu0 %v3619
    %4410 = vmatpush2.bf16.msra.mxu0 %v3618
    %4411 = vmatprep.subr.bf16.mxu0 %v3607
    %4412 = vmatpush2.bf16.msra.mxu0 %v3606
    %4413 = vmatprep.mubr.bf16.mxu0 %v1775
    %4414 = vmatmul.mubr.bf16.gmra.mxu0 %v1774
    %v4415 = vpop.f32.mrf.mxu0
    %v4416 = vadd.f32 %v4373, %v4415
    %v4417 = vpop.f32.mrf.mxu0
    %v4418 = vadd.f32 %v4375, %v4417
    %v4419 = vpop.f32.mrf.mxu0
    %v4420 = vadd.f32 %v4377, %v4419
    %v4421 = vpop.f32.mrf.mxu0
    %v4422 = vadd.f32 %v4379, %v4421
    %4423 = vdwg.mxu0
    %4424 = vmatprep.subr.bf16.mxu0 %v3405
    %4425 = vmatpush1.bf16.msra.mxu0 %v3404
    %4426 = vmatprep.subr.bf16.mxu0 %v3393
    %4427 = vmatpush1.bf16.msra.mxu0 %v3392
    %4428 = vmatprep.subr.bf16.mxu0 %v3381
    %4429 = vmatpush1.bf16.msra.mxu0 %v3380
    %4430 = vmatprep.subr.bf16.mxu0 %v3369
    %4431 = vmatpush1.bf16.msra.mxu0 %v3368
    %4432 = vmatprep.subr.bf16.mxu0 %v3357
    %4433 = vmatpush1.bf16.msra.mxu0 %v3356
    %4434 = vmatprep.subr.bf16.mxu0 %v3345
    %4435 = vmatpush1.bf16.msra.mxu0 %v3344
    %4436 = vmatprep.subr.bf16.mxu0 %v3333
    %4437 = vmatpush1.bf16.msra.mxu0 %v3332
    %4438 = vmatprep.subr.bf16.mxu0 %v3321
    %4439 = vmatpush1.bf16.msra.mxu0 %v3320
    %4440 = vmatprep.subr.bf16.mxu0 %v3501
    %4441 = vmatpush2.bf16.msra.mxu0 %v3500
    %4442 = vmatprep.subr.bf16.mxu0 %v3489
    %4443 = vmatpush2.bf16.msra.mxu0 %v3488
    %4444 = vmatprep.subr.bf16.mxu0 %v3477
    %4445 = vmatpush2.bf16.msra.mxu0 %v3476
    %4446 = vmatprep.subr.bf16.mxu0 %v3465
    %4447 = vmatpush2.bf16.msra.mxu0 %v3464
    %4448 = vmatprep.subr.bf16.mxu0 %v3453
    %4449 = vmatpush2.bf16.msra.mxu0 %v3452
    %4450 = vmatprep.subr.bf16.mxu0 %v3441
    %4451 = vmatpush2.bf16.msra.mxu0 %v3440
    %4452 = vmatprep.subr.bf16.mxu0 %v3429
    %4453 = vmatpush2.bf16.msra.mxu0 %v3428
    %4454 = vmatprep.subr.bf16.mxu0 %v3417
    %4455 = vmatpush2.bf16.msra.mxu0 %v3416
    %4456 = vmatprep.mubr.bf16.mxu0 %v1773
    %4457 = vmatmul.mubr.bf16.gmra.mxu0 %v1772
    %v4458 = vpop.f32.mrf.mxu0
    %v4459 = vadd.f32 0.0, %v4458
    %v4460 = vpop.f32.mrf.mxu0
    %v4461 = vadd.f32 0.0, %v4460
    %v4462 = vpop.f32.mrf.mxu0
    %v4463 = vadd.f32 0.0, %v4462
    %v4464 = vpop.f32.mrf.mxu0
    %v4465 = vadd.f32 0.0, %v4464
    %4466 = vdwg.mxu0
    %4467 = vmatprep.subr.bf16.mxu0 %v3597
    %4468 = vmatpush1.bf16.msra.mxu0 %v3596
    %4469 = vmatprep.subr.bf16.mxu0 %v3585
    %4470 = vmatpush1.bf16.msra.mxu0 %v3584
    %4471 = vmatprep.subr.bf16.mxu0 %v3573
    %4472 = vmatpush1.bf16.msra.mxu0 %v3572
    %4473 = vmatprep.subr.bf16.mxu0 %v3561
    %4474 = vmatpush1.bf16.msra.mxu0 %v3560
    %4475 = vmatprep.subr.bf16.mxu0 %v3549
    %4476 = vmatpush1.bf16.msra.mxu0 %v3548
    %4477 = vmatprep.subr.bf16.mxu0 %v3537
    %4478 = vmatpush1.bf16.msra.mxu0 %v3536
    %4479 = vmatprep.subr.bf16.mxu0 %v3525
    %4480 = vmatpush1.bf16.msra.mxu0 %v3524
    %4481 = vmatprep.subr.bf16.mxu0 %v3513
    %4482 = vmatpush1.bf16.msra.mxu0 %v3512
    %4483 = vmatprep.subr.bf16.mxu0 %v3693
    %4484 = vmatpush2.bf16.msra.mxu0 %v3692
    %4485 = vmatprep.subr.bf16.mxu0 %v3681
    %4486 = vmatpush2.bf16.msra.mxu0 %v3680
    %4487 = vmatprep.subr.bf16.mxu0 %v3669
    %4488 = vmatpush2.bf16.msra.mxu0 %v3668
    %4489 = vmatprep.subr.bf16.mxu0 %v3657
    %4490 = vmatpush2.bf16.msra.mxu0 %v3656
    %4491 = vmatprep.subr.bf16.mxu0 %v3645
    %4492 = vmatpush2.bf16.msra.mxu0 %v3644
    %4493 = vmatprep.subr.bf16.mxu0 %v3633
    %4494 = vmatpush2.bf16.msra.mxu0 %v3632
    %4495 = vmatprep.subr.bf16.mxu0 %v3621
    %4496 = vmatpush2.bf16.msra.mxu0 %v3620
    %4497 = vmatprep.subr.bf16.mxu0 %v3609
    %4498 = vmatpush2.bf16.msra.mxu0 %v3608
    %4499 = vmatprep.mubr.bf16.mxu0 %v1775
    %4500 = vmatmul.mubr.bf16.gmra.mxu0 %v1774
    %v4501 = vpop.f32.mrf.mxu0
    %v4502 = vadd.f32 %v4459, %v4501
    %v4503 = vpop.f32.mrf.mxu0
    %v4504 = vadd.f32 %v4461, %v4503
    %v4505 = vpop.f32.mrf.mxu0
    %v4506 = vadd.f32 %v4463, %v4505
    %v4507 = vpop.f32.mrf.mxu0
    %v4508 = vadd.f32 %v4465, %v4507
    %4509 = vdwg.mxu0
    %4510 = vmatprep.subr.bf16.mxu0 %v3407
    %4511 = vmatpush1.bf16.msra.mxu0 %v3406
    %4512 = vmatprep.subr.bf16.mxu0 %v3395
    %4513 = vmatpush1.bf16.msra.mxu0 %v3394
    %4514 = vmatprep.subr.bf16.mxu0 %v3383
    %4515 = vmatpush1.bf16.msra.mxu0 %v3382
    %4516 = vmatprep.subr.bf16.mxu0 %v3371
    %4517 = vmatpush1.bf16.msra.mxu0 %v3370
    %4518 = vmatprep.subr.bf16.mxu0 %v3359
    %4519 = vmatpush1.bf16.msra.mxu0 %v3358
    %4520 = vmatprep.subr.bf16.mxu0 %v3347
    %4521 = vmatpush1.bf16.msra.mxu0 %v3346
    %4522 = vmatprep.subr.bf16.mxu0 %v3335
    %4523 = vmatpush1.bf16.msra.mxu0 %v3334
    %4524 = vmatprep.subr.bf16.mxu0 %v3323
    %4525 = vmatpush1.bf16.msra.mxu0 %v3322
    %4526 = vmatprep.subr.bf16.mxu0 %v3503
    %4527 = vmatpush2.bf16.msra.mxu0 %v3502
    %4528 = vmatprep.subr.bf16.mxu0 %v3491
    %4529 = vmatpush2.bf16.msra.mxu0 %v3490
    %4530 = vmatprep.subr.bf16.mxu0 %v3479
    %4531 = vmatpush2.bf16.msra.mxu0 %v3478
    %4532 = vmatprep.subr.bf16.mxu0 %v3467
    %4533 = vmatpush2.bf16.msra.mxu0 %v3466
    %4534 = vmatprep.subr.bf16.mxu0 %v3455
    %4535 = vmatpush2.bf16.msra.mxu0 %v3454
    %4536 = vmatprep.subr.bf16.mxu0 %v3443
    %4537 = vmatpush2.bf16.msra.mxu0 %v3442
    %4538 = vmatprep.subr.bf16.mxu0 %v3431
    %4539 = vmatpush2.bf16.msra.mxu0 %v3430
    %4540 = vmatprep.subr.bf16.mxu0 %v3419
    %4541 = vmatpush2.bf16.msra.mxu0 %v3418
    %4542 = vmatprep.mubr.bf16.mxu0 %v1773
    %4543 = vmatmul.mubr.bf16.gmra.mxu0 %v1772
    %v4544 = vpop.f32.mrf.mxu0
    %v4545 = vadd.f32 0.0, %v4544
    %v4546 = vpop.f32.mrf.mxu0
    %v4547 = vadd.f32 0.0, %v4546
    %v4548 = vpop.f32.mrf.mxu0
    %v4549 = vadd.f32 0.0, %v4548
    %v4550 = vpop.f32.mrf.mxu0
    %v4551 = vadd.f32 0.0, %v4550
    %4552 = vdwg.mxu0
    %4553 = vmatprep.subr.bf16.mxu0 %v3599
    %4554 = vmatpush1.bf16.msra.mxu0 %v3598
    %4555 = vmatprep.subr.bf16.mxu0 %v3587
    %4556 = vmatpush1.bf16.msra.mxu0 %v3586
    %4557 = vmatprep.subr.bf16.mxu0 %v3575
    %4558 = vmatpush1.bf16.msra.mxu0 %v3574
    %4559 = vmatprep.subr.bf16.mxu0 %v3563
    %4560 = vmatpush1.bf16.msra.mxu0 %v3562
    %4561 = vmatprep.subr.bf16.mxu0 %v3551
    %4562 = vmatpush1.bf16.msra.mxu0 %v3550
    %4563 = vmatprep.subr.bf16.mxu0 %v3539
    %4564 = vmatpush1.bf16.msra.mxu0 %v3538
    %4565 = vmatprep.subr.bf16.mxu0 %v3527
    %4566 = vmatpush1.bf16.msra.mxu0 %v3526
    %4567 = vmatprep.subr.bf16.mxu0 %v3515
    %4568 = vmatpush1.bf16.msra.mxu0 %v3514
    %4569 = vmatprep.subr.bf16.mxu0 %v3695
    %4570 = vmatpush2.bf16.msra.mxu0 %v3694
    %4571 = vmatprep.subr.bf16.mxu0 %v3683
    %4572 = vmatpush2.bf16.msra.mxu0 %v3682
    %4573 = vmatprep.subr.bf16.mxu0 %v3671
    %4574 = vmatpush2.bf16.msra.mxu0 %v3670
    %4575 = vmatprep.subr.bf16.mxu0 %v3659
    %4576 = vmatpush2.bf16.msra.mxu0 %v3658
    %4577 = vmatprep.subr.bf16.mxu0 %v3647
    %4578 = vmatpush2.bf16.msra.mxu0 %v3646
    %4579 = vmatprep.subr.bf16.mxu0 %v3635
    %4580 = vmatpush2.bf16.msra.mxu0 %v3634
    %4581 = vmatprep.subr.bf16.mxu0 %v3623
    %4582 = vmatpush2.bf16.msra.mxu0 %v3622
    %4583 = vmatprep.subr.bf16.mxu0 %v3611
    %4584 = vmatpush2.bf16.msra.mxu0 %v3610
    %4585 = vmatprep.mubr.bf16.mxu0 %v1775
    %4586 = vmatmul.mubr.bf16.gmra.mxu0 %v1774
    %v4587 = vpop.f32.mrf.mxu0
    %v4588 = vadd.f32 %v4545, %v4587
    %v4589 = vpop.f32.mrf.mxu0
    %v4590 = vadd.f32 %v4547, %v4589
    %v4591 = vpop.f32.mrf.mxu0
    %v4592 = vadd.f32 %v4549, %v4591
    %v4593 = vpop.f32.mrf.mxu0
    %v4594 = vadd.f32 %v4551, %v4593
    %4595 = vdwg.mxu0
    %v4596 = vld [vmem:[#allocation8] sm:$0xff]
    %v4597 = vld [vmem:[#allocation7] sm:$0xf]
    %v4599 = vlaneseq
    %v4600 = vshrl.u32 %v4599, 7
    %v4601 = vsub.s32 0, %v4600
    %v4602 = vrot.slane %v4597, %v4601
    %v4603 = vlaneseq
    %v4604 = vshrl.u32 %v4603, 7
    %v4605 = vsub.s32 1, %v4604
    %v4606 = vrot.slane %v4597, %v4605
    %v4607 = vlaneseq
    %v4608 = vshrl.u32 %v4607, 7
    %v4609 = vsub.s32 2, %v4608
    %v4610 = vrot.slane %v4597, %v4609
    %v4611 = vlaneseq
    %v4612 = vshrl.u32 %v4611, 7
    %v4613 = vsub.s32 3, %v4612
    %v4614 = vrot.slane %v4597, %v4613
    %vm4619 = vcmask 392192
    %v4621 = vsel %vm4619, %v4596, 0
    %4623 = vmatprep.subr.mxu0 0.0
    %4624 = vmatpush1.msra.mxu0 0.0
    %4625 = vmatprep.subr.mxu0 0.0
    %4626 = vmatpush1.msra.mxu0 0.0
    %4627 = vmatprep.subr.mxu0 0.0
    %4628 = vmatpush1.msra.mxu0 0.0
    %4629 = vmatprep.subr.mxu0 0.0
    %4630 = vmatpush1.msra.mxu0 0.0
    %4631 = vmatprep.subr.mxu0 0.0
    %4632 = vmatpush1.msra.mxu0 0.0
    %4633 = vmatprep.subr.mxu0 0.0
    %4634 = vmatpush1.msra.mxu0 0.0
    %4635 = vmatprep.subr.mxu0 0.0
    %4636 = vmatpush1.msra.mxu0 0.0
    %4637 = vmatprep.subr.mxu0 0.0
    %4638 = vmatpush1.msra.mxu0 0.0
    %4639 = vmatprep.subr.mxu0 0.0
    %4640 = vmatpush1.msra.mxu0 0.0
    %4641 = vmatprep.subr.mxu0 0.0
    %4642 = vmatpush1.msra.mxu0 0.0
    %4643 = vmatprep.subr.mxu0 %v4508
    %4644 = vmatpush1.msra.mxu0 %v4506
    %4645 = vmatprep.subr.mxu0 %v4504
    %4646 = vmatpush1.msra.mxu0 %v4502
    %4647 = vmatprep.subr.mxu0 %v4336
    %4648 = vmatpush1.msra.mxu0 %v4334
    %4649 = vmatprep.subr.mxu0 %v4332
    %4650 = vmatpush1.msra.mxu0 %v4330
    %4651 = vmatprep.subr.mxu0 %v4164
    %4652 = vmatpush1.msra.mxu0 %v4162
    %4653 = vmatprep.subr.mxu0 %v4160
    %4654 = vmatpush1.msra.mxu0 %v4158
    %4655 = vmatprep.subr.mxu0 0.0
    %4656 = vmatpush2.msra.mxu0 0.0
    %4657 = vmatprep.subr.mxu0 0.0
    %4658 = vmatpush2.msra.mxu0 0.0
    %4659 = vmatprep.subr.mxu0 0.0
    %4660 = vmatpush2.msra.mxu0 0.0
    %4661 = vmatprep.subr.mxu0 0.0
    %4662 = vmatpush2.msra.mxu0 0.0
    %4663 = vmatprep.subr.mxu0 0.0
    %4664 = vmatpush2.msra.mxu0 0.0
    %4665 = vmatprep.subr.mxu0 0.0
    %4666 = vmatpush2.msra.mxu0 0.0
    %4667 = vmatprep.subr.mxu0 0.0
    %4668 = vmatpush2.msra.mxu0 0.0
    %4669 = vmatprep.subr.mxu0 0.0
    %4670 = vmatpush2.msra.mxu0 0.0
    %4671 = vmatprep.subr.mxu0 0.0
    %4672 = vmatpush2.msra.mxu0 0.0
    %4673 = vmatprep.subr.mxu0 0.0
    %4674 = vmatpush2.msra.mxu0 0.0
    %4675 = vmatprep.subr.mxu0 0.0
    %4676 = vmatpush2.msra.mxu0 0.0
    %4677 = vmatprep.subr.mxu0 0.0
    %4678 = vmatpush2.msra.mxu0 0.0
    %4679 = vmatprep.subr.mxu0 0.0
    %4680 = vmatpush2.msra.mxu0 0.0
    %4681 = vmatprep.subr.mxu0 0.0
    %4682 = vmatpush2.msra.mxu0 0.0
    %4683 = vmatprep.subr.mxu0 0.0
    %4684 = vmatpush2.msra.mxu0 0.0
    %4685 = vmatprep.subr.mxu0 0.0
    %4686 = vmatpush2.msra.mxu0 0.0
    %4687 = vmatprep.mubr.f32.mxu0 0.0
    %4688 = vmatmul.mubr.f32.gmra.mxu0 %v4621
    %v4689 = vpop.f32.mrf.mxu0
    %v4690 = vadd.f32 %v4602, %v4689
    %v4691 = vpop.f32.mrf.mxu0
    %v4692 = vadd.f32 %v4606, %v4691
    %4693 = vdwg.mxu0
    %4694 = vmatprep.subr.mxu0 0.0
    %4695 = vmatpush1.msra.mxu0 0.0
    %4696 = vmatprep.subr.mxu0 0.0
    %4697 = vmatpush1.msra.mxu0 0.0
    %4698 = vmatprep.subr.mxu0 0.0
    %4699 = vmatpush1.msra.mxu0 0.0
    %4700 = vmatprep.subr.mxu0 0.0
    %4701 = vmatpush1.msra.mxu0 0.0
    %4702 = vmatprep.subr.mxu0 0.0
    %4703 = vmatpush1.msra.mxu0 0.0
    %4704 = vmatprep.subr.mxu0 0.0
    %4705 = vmatpush1.msra.mxu0 0.0
    %4706 = vmatprep.subr.mxu0 0.0
    %4707 = vmatpush1.msra.mxu0 0.0
    %4708 = vmatprep.subr.mxu0 0.0
    %4709 = vmatpush1.msra.mxu0 0.0
    %4710 = vmatprep.subr.mxu0 0.0
    %4711 = vmatpush1.msra.mxu0 0.0
    %4712 = vmatprep.subr.mxu0 0.0
    %4713 = vmatpush1.msra.mxu0 0.0
    %4714 = vmatprep.subr.mxu0 %v4594
    %4715 = vmatpush1.msra.mxu0 %v4592
    %4716 = vmatprep.subr.mxu0 %v4590
    %4717 = vmatpush1.msra.mxu0 %v4588
    %4718 = vmatprep.subr.mxu0 %v4422
    %4719 = vmatpush1.msra.mxu0 %v4420
    %4720 = vmatprep.subr.mxu0 %v4418
    %4721 = vmatpush1.msra.mxu0 %v4416
    %4722 = vmatprep.subr.mxu0 %v4250
    %4723 = vmatpush1.msra.mxu0 %v4248
    %4724 = vmatprep.subr.mxu0 %v4246
    %4725 = vmatpush1.msra.mxu0 %v4244
    %4726 = vmatprep.subr.mxu0 0.0
    %4727 = vmatpush2.msra.mxu0 0.0
    %4728 = vmatprep.subr.mxu0 0.0
    %4729 = vmatpush2.msra.mxu0 0.0
    %4730 = vmatprep.subr.mxu0 0.0
    %4731 = vmatpush2.msra.mxu0 0.0
    %4732 = vmatprep.subr.mxu0 0.0
    %4733 = vmatpush2.msra.mxu0 0.0
    %4734 = vmatprep.subr.mxu0 0.0
    %4735 = vmatpush2.msra.mxu0 0.0
    %4736 = vmatprep.subr.mxu0 0.0
    %4737 = vmatpush2.msra.mxu0 0.0
    %4738 = vmatprep.subr.mxu0 0.0
    %4739 = vmatpush2.msra.mxu0 0.0
    %4740 = vmatprep.subr.mxu0 0.0
    %4741 = vmatpush2.msra.mxu0 0.0
    %4742 = vmatprep.subr.mxu0 0.0
    %4743 = vmatpush2.msra.mxu0 0.0
    %4744 = vmatprep.subr.mxu0 0.0
    %4745 = vmatpush2.msra.mxu0 0.0
    %4746 = vmatprep.subr.mxu0 0.0
    %4747 = vmatpush2.msra.mxu0 0.0
    %4748 = vmatprep.subr.mxu0 0.0
    %4749 = vmatpush2.msra.mxu0 0.0
    %4750 = vmatprep.subr.mxu0 0.0
    %4751 = vmatpush2.msra.mxu0 0.0
    %4752 = vmatprep.subr.mxu0 0.0
    %4753 = vmatpush2.msra.mxu0 0.0
    %4754 = vmatprep.subr.mxu0 0.0
    %4755 = vmatpush2.msra.mxu0 0.0
    %4756 = vmatprep.subr.mxu0 0.0
    %4757 = vmatpush2.msra.mxu0 0.0
    %4758 = vmatprep.mubr.f32.mxu0 0.0
    %4759 = vmatmul.mubr.f32.gmra.mxu0 %v4621
    %v4760 = vpop.f32.mrf.mxu0
    %v4761 = vadd.f32 %v4610, %v4760
    %v4762 = vpop.f32.mrf.mxu0
    %v4763 = vadd.f32 %v4614, %v4762
    %4764 = vdwg.mxu0
    %v4765 = vmax.f32 %v4690, 0.0
    %v4766 = vmax.f32 %v4692, 0.0
    %v4767 = vmax.f32 %v4761, 0.0
    %v4768 = vmax.f32 %v4763, 0.0
    %v4769 = vld [vmem:[#allocation10] sm:$0x3]
    %vm4770 = vcmask 64512
    %v4772 = vsel %vm4770, %v4769, 0
    %4774 = vmatprep.subr.mxu0 0.0
    %4775 = vmatpush1.msra.mxu0 0.0
    %4776 = vmatprep.subr.mxu0 0.0
    %4777 = vmatpush1.msra.mxu0 0.0
    %4778 = vmatprep.subr.mxu0 0.0
    %4779 = vmatpush1.msra.mxu0 0.0
    %4780 = vmatprep.subr.mxu0 0.0
    %4781 = vmatpush1.msra.mxu0 0.0
    %4782 = vmatprep.subr.mxu0 0.0
    %4783 = vmatpush1.msra.mxu0 0.0
    %4784 = vmatprep.subr.mxu0 0.0
    %4785 = vmatpush1.msra.mxu0 0.0
    %4786 = vmatprep.subr.mxu0 0.0
    %4787 = vmatpush1.msra.mxu0 0.0
    %4788 = vmatprep.subr.mxu0 0.0
    %4789 = vmatpush1.msra.mxu0 0.0
    %4790 = vmatprep.subr.mxu0 0.0
    %4791 = vmatpush1.msra.mxu0 0.0
    %4792 = vmatprep.subr.mxu0 0.0
    %4793 = vmatpush1.msra.mxu0 0.0
    %4794 = vmatprep.subr.mxu0 0.0
    %4795 = vmatpush1.msra.mxu0 0.0
    %4796 = vmatprep.subr.mxu0 0.0
    %4797 = vmatpush1.msra.mxu0 0.0
    %4798 = vmatprep.subr.mxu0 0.0
    %4799 = vmatpush1.msra.mxu0 0.0
    %4800 = vmatprep.subr.mxu0 0.0
    %4801 = vmatpush1.msra.mxu0 0.0
    %4802 = vmatprep.subr.mxu0 0.0
    %4803 = vmatpush1.msra.mxu0 0.0
    %4804 = vmatprep.subr.mxu0 %v4766
    %4805 = vmatpush1.msra.mxu0 %v4765
    %4806 = vmatprep.subr.mxu0 0.0
    %4807 = vmatpush2.msra.mxu0 0.0
    %4808 = vmatprep.subr.mxu0 0.0
    %4809 = vmatpush2.msra.mxu0 0.0
    %4810 = vmatprep.subr.mxu0 0.0
    %4811 = vmatpush2.msra.mxu0 0.0
    %4812 = vmatprep.subr.mxu0 0.0
    %4813 = vmatpush2.msra.mxu0 0.0
    %4814 = vmatprep.subr.mxu0 0.0
    %4815 = vmatpush2.msra.mxu0 0.0
    %4816 = vmatprep.subr.mxu0 0.0
    %4817 = vmatpush2.msra.mxu0 0.0
    %4818 = vmatprep.subr.mxu0 0.0
    %4819 = vmatpush2.msra.mxu0 0.0
    %4820 = vmatprep.subr.mxu0 0.0
    %4821 = vmatpush2.msra.mxu0 0.0
    %4822 = vmatprep.subr.mxu0 0.0
    %4823 = vmatpush2.msra.mxu0 0.0
    %4824 = vmatprep.subr.mxu0 0.0
    %4825 = vmatpush2.msra.mxu0 0.0
    %4826 = vmatprep.subr.mxu0 0.0
    %4827 = vmatpush2.msra.mxu0 0.0
    %4828 = vmatprep.subr.mxu0 0.0
    %4829 = vmatpush2.msra.mxu0 0.0
    %4830 = vmatprep.subr.mxu0 0.0
    %4831 = vmatpush2.msra.mxu0 0.0
    %4832 = vmatprep.subr.mxu0 0.0
    %4833 = vmatpush2.msra.mxu0 0.0
    %4834 = vmatprep.subr.mxu0 0.0
    %4835 = vmatpush2.msra.mxu0 0.0
    %4836 = vmatprep.subr.mxu0 0.0
    %4837 = vmatpush2.msra.mxu0 0.0
    %4838 = vmatprep.mubr.f32.mxu0 0.0
    %4839 = vmatmul.mubr.f32.gmra.mxu0 %v4772
    %v4840 = vpop.f32.mrf.mxu0
    %v4841 = vadd.f32 0.0, %v4840
    %v4842 = vpop.f32.mrf.mxu0
    %v4843 = vadd.f32 0.0, %v4842
    %4844 = vdwg.mxu0
    %4845 = vmatprep.subr.mxu0 0.0
    %4846 = vmatpush1.msra.mxu0 0.0
    %4847 = vmatprep.subr.mxu0 0.0
    %4848 = vmatpush1.msra.mxu0 0.0
    %4849 = vmatprep.subr.mxu0 0.0
    %4850 = vmatpush1.msra.mxu0 0.0
    %4851 = vmatprep.subr.mxu0 0.0
    %4852 = vmatpush1.msra.mxu0 0.0
    %4853 = vmatprep.subr.mxu0 0.0
    %4854 = vmatpush1.msra.mxu0 0.0
    %4855 = vmatprep.subr.mxu0 0.0
    %4856 = vmatpush1.msra.mxu0 0.0
    %4857 = vmatprep.subr.mxu0 0.0
    %4858 = vmatpush1.msra.mxu0 0.0
    %4859 = vmatprep.subr.mxu0 0.0
    %4860 = vmatpush1.msra.mxu0 0.0
    %4861 = vmatprep.subr.mxu0 0.0
    %4862 = vmatpush1.msra.mxu0 0.0
    %4863 = vmatprep.subr.mxu0 0.0
    %4864 = vmatpush1.msra.mxu0 0.0
    %4865 = vmatprep.subr.mxu0 0.0
    %4866 = vmatpush1.msra.mxu0 0.0
    %4867 = vmatprep.subr.mxu0 0.0
    %4868 = vmatpush1.msra.mxu0 0.0
    %4869 = vmatprep.subr.mxu0 0.0
    %4870 = vmatpush1.msra.mxu0 0.0
    %4871 = vmatprep.subr.mxu0 0.0
    %4872 = vmatpush1.msra.mxu0 0.0
    %4873 = vmatprep.subr.mxu0 0.0
    %4874 = vmatpush1.msra.mxu0 0.0
    %4875 = vmatprep.subr.mxu0 %v4768
    %4876 = vmatpush1.msra.mxu0 %v4767
    %4877 = vmatprep.subr.mxu0 0.0
    %4878 = vmatpush2.msra.mxu0 0.0
    %4879 = vmatprep.subr.mxu0 0.0
    %4880 = vmatpush2.msra.mxu0 0.0
    %4881 = vmatprep.subr.mxu0 0.0
    %4882 = vmatpush2.msra.mxu0 0.0
    %4883 = vmatprep.subr.mxu0 0.0
    %4884 = vmatpush2.msra.mxu0 0.0
    %4885 = vmatprep.subr.mxu0 0.0
    %4886 = vmatpush2.msra.mxu0 0.0
    %4887 = vmatprep.subr.mxu0 0.0
    %4888 = vmatpush2.msra.mxu0 0.0
    %4889 = vmatprep.subr.mxu0 0.0
    %4890 = vmatpush2.msra.mxu0 0.0
    %4891 = vmatprep.subr.mxu0 0.0
    %4892 = vmatpush2.msra.mxu0 0.0
    %4893 = vmatprep.subr.mxu0 0.0
    %4894 = vmatpush2.msra.mxu0 0.0
    %4895 = vmatprep.subr.mxu0 0.0
    %4896 = vmatpush2.msra.mxu0 0.0
    %4897 = vmatprep.subr.mxu0 0.0
    %4898 = vmatpush2.msra.mxu0 0.0
    %4899 = vmatprep.subr.mxu0 0.0
    %4900 = vmatpush2.msra.mxu0 0.0
    %4901 = vmatprep.subr.mxu0 0.0
    %4902 = vmatpush2.msra.mxu0 0.0
    %4903 = vmatprep.subr.mxu0 0.0
    %4904 = vmatpush2.msra.mxu0 0.0
    %4905 = vmatprep.subr.mxu0 0.0
    %4906 = vmatpush2.msra.mxu0 0.0
    %4907 = vmatprep.subr.mxu0 0.0
    %4908 = vmatpush2.msra.mxu0 0.0
    %4909 = vmatprep.mubr.f32.mxu0 0.0
    %4910 = vmatmul.mubr.f32.gmra.mxu0 %v4772
    %v4911 = vpop.f32.mrf.mxu0
    %v4912 = vadd.f32 0.0, %v4911
    %v4913 = vpop.f32.mrf.mxu0
    %v4914 = vadd.f32 0.0, %v4913
    %4915 = vdwg.mxu0
    %v4916 = vld [vmem:[#allocation11] sm:$0xff]
    %v4917 = vld [vmem:[#allocation11 + $0x8] sm:$0xff]
    %v4918 = vld [vmem:[#allocation11 + $0x10] sm:$0xff]
    %v4919 = vld [vmem:[#allocation11 + $0x18] sm:$0xff]
    %v4920 = vld [vmem:[#allocation11 + $0x20] sm:$0xff]
    %v4921 = vld [vmem:[#allocation11 + $0x28] sm:$0xff]
    %v4922 = vld [vmem:[#allocation11 + $0x30] sm:$0xff]
    %v4923 = vld [vmem:[#allocation11 + $0x38] sm:$0xff]
    %v4924 = vld [vmem:[#allocation11 + $0x40] sm:$0xff]
    %v4925 = vld [vmem:[#allocation11 + $0x48] sm:$0xff]
    %v4926 = vld [vmem:[#allocation11 + $0x50] sm:$0xff]
    %v4927 = vld [vmem:[#allocation11 + $0x58] sm:$0xff]
    %v4928 = vld [vmem:[#allocation11 + $0x60] sm:$0xff]
    %v4929 = vld [vmem:[#allocation11 + $0x68] sm:$0xff]
    %v4930 = vld [vmem:[#allocation11 + $0x70] sm:$0xff]
    %v4931 = vld [vmem:[#allocation11 + $0x78] sm:$0xff]
    %v4932 = vld [vmem:[#allocation11 + $0x80] sm:$0xff]
    %v4933 = vld [vmem:[#allocation11 + $0x88] sm:$0xff]
    %v4934 = vld [vmem:[#allocation11 + $0x90] sm:$0xff]
    %v4935 = vld [vmem:[#allocation11 + $0x98] sm:$0xff]
    %v4936 = vld [vmem:[#allocation11 + $0xa0] sm:$0xff]
    %v4937 = vld [vmem:[#allocation11 + $0xa8] sm:$0xff]
    %v4938 = vld [vmem:[#allocation11 + $0xb0] sm:$0xff]
    %v4939 = vld [vmem:[#allocation11 + $0xb8] sm:$0xff]
    %v4940 = vld [vmem:[#allocation11 + $0xc0] sm:$0xff]
    %v4941 = vld [vmem:[#allocation11 + $0xc8] sm:$0xff]
    %v4942 = vld [vmem:[#allocation11 + $0xd0] sm:$0xff]
    %v4943 = vld [vmem:[#allocation11 + $0xd8] sm:$0xff]
    %v4944 = vld [vmem:[#allocation11 + $0xe0] sm:$0xff]
    %v4945 = vld [vmem:[#allocation11 + $0xe8] sm:$0xff]
    %v4946 = vld [vmem:[#allocation11 + $0xf0] sm:$0xff]
    %v4947 = vld [vmem:[#allocation11 + $0xf8] sm:$0xff]
    %v4948 = vld [vmem:[#allocation11 + $0x100] sm:$0xff]
    %v4949 = vld [vmem:[#allocation11 + $0x108] sm:$0xff]
    %v4950 = vld [vmem:[#allocation11 + $0x110] sm:$0xff]
    %v4951 = vld [vmem:[#allocation11 + $0x118] sm:$0xff]
    %v4952 = vld [vmem:[#allocation11 + $0x120] sm:$0xff]
    %v4953 = vld [vmem:[#allocation11 + $0x128] sm:$0xff]
    %v4954 = vld [vmem:[#allocation11 + $0x130] sm:$0xff]
    %v4955 = vld [vmem:[#allocation11 + $0x138] sm:$0xff]
    %v4956 = vld [vmem:[#allocation11 + $0x140] sm:$0xff]
    %v4957 = vld [vmem:[#allocation11 + $0x148] sm:$0xff]
    %v4958 = vld [vmem:[#allocation11 + $0x150] sm:$0xff]
    %v4959 = vld [vmem:[#allocation11 + $0x158] sm:$0xff]
    %v4960 = vld [vmem:[#allocation11 + $0x160] sm:$0xff]
    %v4961 = vld [vmem:[#allocation11 + $0x168] sm:$0xff]
    %v4962 = vld [vmem:[#allocation11 + $0x170] sm:$0xff]
    %v4963 = vld [vmem:[#allocation11 + $0x178] sm:$0xff]
    %v4964 = vld [vmem:[#allocation11 + $0x180] sm:$0xff]
    %v4965 = vld [vmem:[#allocation11 + $0x188] sm:$0xff]
    %v4966 = vld [vmem:[#allocation11 + $0x190] sm:$0xff]
    %v4967 = vld [vmem:[#allocation11 + $0x198] sm:$0xff]
    %v4968 = vld [vmem:[#allocation11 + $0x1a0] sm:$0xff]
    %v4969 = vld [vmem:[#allocation11 + $0x1a8] sm:$0xff]
    %v4970 = vld [vmem:[#allocation11 + $0x1b0] sm:$0xff]
    %v4971 = vld [vmem:[#allocation11 + $0x1b8] sm:$0xff]
    %v4972 = vld [vmem:[#allocation11 + $0x1c0] sm:$0xff]
    %v4973 = vld [vmem:[#allocation11 + $0x1c8] sm:$0xff]
    %v4974 = vld [vmem:[#allocation11 + $0x1d0] sm:$0xff]
    %v4975 = vld [vmem:[#allocation11 + $0x1d8] sm:$0xff]
    %v4976 = vld [vmem:[#allocation11 + $0x1e0] sm:$0xff]
    %v4977 = vld [vmem:[#allocation11 + $0x1e8] sm:$0xff]
    %v4978 = vld [vmem:[#allocation11 + $0x1f0] sm:$0xff]
    %v4979 = vld [vmem:[#allocation11 + $0x1f8] sm:$0xff]
    %4980 = vmatprep.subr.mxu0 0.0
    %4981 = vmatpush1.msra.mxu0 %v4931
    %4982 = vmatprep.subr.mxu0 0.0
    %4983 = vmatpush1.msra.mxu0 %v4930
    %4984 = vmatprep.subr.mxu0 0.0
    %4985 = vmatpush1.msra.mxu0 %v4929
    %4986 = vmatprep.subr.mxu0 0.0
    %4987 = vmatpush1.msra.mxu0 %v4928
    %4988 = vmatprep.subr.mxu0 0.0
    %4989 = vmatpush1.msra.mxu0 %v4927
    %4990 = vmatprep.subr.mxu0 0.0
    %4991 = vmatpush1.msra.mxu0 %v4926
    %4992 = vmatprep.subr.mxu0 0.0
    %4993 = vmatpush1.msra.mxu0 %v4925
    %4994 = vmatprep.subr.mxu0 0.0
    %4995 = vmatpush1.msra.mxu0 %v4924
    %4996 = vmatprep.subr.mxu0 0.0
    %4997 = vmatpush1.msra.mxu0 %v4923
    %4998 = vmatprep.subr.mxu0 0.0
    %4999 = vmatpush1.msra.mxu0 %v4922
    %5000 = vmatprep.subr.mxu0 0.0
    %5001 = vmatpush1.msra.mxu0 %v4921
    %5002 = vmatprep.subr.mxu0 0.0
    %5003 = vmatpush1.msra.mxu0 %v4920
    %5004 = vmatprep.subr.mxu0 0.0
    %5005 = vmatpush1.msra.mxu0 %v4919
    %5006 = vmatprep.subr.mxu0 0.0
    %5007 = vmatpush1.msra.mxu0 %v4918
    %5008 = vmatprep.subr.mxu0 0.0
    %5009 = vmatpush1.msra.mxu0 %v4917
    %5010 = vmatprep.subr.mxu0 0.0
    %5011 = vmatpush1.msra.mxu0 %v4916
    %5012 = vmatprep.subr.mxu0 0.0
    %5013 = vmatpush2.msra.mxu0 %v4947
    %5014 = vmatprep.subr.mxu0 0.0
    %5015 = vmatpush2.msra.mxu0 %v4946
    %5016 = vmatprep.subr.mxu0 0.0
    %5017 = vmatpush2.msra.mxu0 %v4945
    %5018 = vmatprep.subr.mxu0 0.0
    %5019 = vmatpush2.msra.mxu0 %v4944
    %5020 = vmatprep.subr.mxu0 0.0
    %5021 = vmatpush2.msra.mxu0 %v4943
    %5022 = vmatprep.subr.mxu0 0.0
    %5023 = vmatpush2.msra.mxu0 %v4942
    %5024 = vmatprep.subr.mxu0 0.0
    %5025 = vmatpush2.msra.mxu0 %v4941
    %5026 = vmatprep.subr.mxu0 0.0
    %5027 = vmatpush2.msra.mxu0 %v4940
    %5028 = vmatprep.subr.mxu0 0.0
    %5029 = vmatpush2.msra.mxu0 %v4939
    %5030 = vmatprep.subr.mxu0 0.0
    %5031 = vmatpush2.msra.mxu0 %v4938
    %5032 = vmatprep.subr.mxu0 0.0
    %5033 = vmatpush2.msra.mxu0 %v4937
    %5034 = vmatprep.subr.mxu0 0.0
    %5035 = vmatpush2.msra.mxu0 %v4936
    %5036 = vmatprep.subr.mxu0 0.0
    %5037 = vmatpush2.msra.mxu0 %v4935
    %5038 = vmatprep.subr.mxu0 0.0
    %5039 = vmatpush2.msra.mxu0 %v4934
    %5040 = vmatprep.subr.mxu0 0.0
    %5041 = vmatpush2.msra.mxu0 %v4933
    %5042 = vmatprep.subr.mxu0 0.0
    %5043 = vmatpush2.msra.mxu0 %v4932
    %5044 = vmatprep.mubr.f32.mxu0 %v4843
    %5045 = vmatmul.mubr.f32.gmra.mxu0 %v4841
    %v5046 = vpop.f32.mrf.mxu0
    %v5047 = vadd.f32 0.0, %v5046
    %v5048 = vpop.f32.mrf.mxu0
    %5049 = vdwg.mxu0
    %5050 = vmatprep.subr.mxu0 0.0
    %5051 = vmatpush1.msra.mxu0 %v4963
    %5052 = vmatprep.subr.mxu0 0.0
    %5053 = vmatpush1.msra.mxu0 %v4962
    %5054 = vmatprep.subr.mxu0 0.0
    %5055 = vmatpush1.msra.mxu0 %v4961
    %5056 = vmatprep.subr.mxu0 0.0
    %5057 = vmatpush1.msra.mxu0 %v4960
    %5058 = vmatprep.subr.mxu0 0.0
    %5059 = vmatpush1.msra.mxu0 %v4959
    %5060 = vmatprep.subr.mxu0 0.0
    %5061 = vmatpush1.msra.mxu0 %v4958
    %5062 = vmatprep.subr.mxu0 0.0
    %5063 = vmatpush1.msra.mxu0 %v4957
    %5064 = vmatprep.subr.mxu0 0.0
    %5065 = vmatpush1.msra.mxu0 %v4956
    %5066 = vmatprep.subr.mxu0 0.0
    %5067 = vmatpush1.msra.mxu0 %v4955
    %5068 = vmatprep.subr.mxu0 0.0
    %5069 = vmatpush1.msra.mxu0 %v4954
    %5070 = vmatprep.subr.mxu0 0.0
    %5071 = vmatpush1.msra.mxu0 %v4953
    %5072 = vmatprep.subr.mxu0 0.0
    %5073 = vmatpush1.msra.mxu0 %v4952
    %5074 = vmatprep.subr.mxu0 0.0
    %5075 = vmatpush1.msra.mxu0 %v4951
    %5076 = vmatprep.subr.mxu0 0.0
    %5077 = vmatpush1.msra.mxu0 %v4950
    %5078 = vmatprep.subr.mxu0 0.0
    %5079 = vmatpush1.msra.mxu0 %v4949
    %5080 = vmatprep.subr.mxu0 0.0
    %5081 = vmatpush1.msra.mxu0 %v4948
    %5082 = vmatprep.subr.mxu0 0.0
    %5083 = vmatpush2.msra.mxu0 %v4979
    %5084 = vmatprep.subr.mxu0 0.0
    %5085 = vmatpush2.msra.mxu0 %v4978
    %5086 = vmatprep.subr.mxu0 0.0
    %5087 = vmatpush2.msra.mxu0 %v4977
    %5088 = vmatprep.subr.mxu0 0.0
    %5089 = vmatpush2.msra.mxu0 %v4976
    %5090 = vmatprep.subr.mxu0 0.0
    %5091 = vmatpush2.msra.mxu0 %v4975
    %5092 = vmatprep.subr.mxu0 0.0
    %5093 = vmatpush2.msra.mxu0 %v4974
    %5094 = vmatprep.subr.mxu0 0.0
    %5095 = vmatpush2.msra.mxu0 %v4973
    %5096 = vmatprep.subr.mxu0 0.0
    %5097 = vmatpush2.msra.mxu0 %v4972
    %5098 = vmatprep.subr.mxu0 0.0
    %5099 = vmatpush2.msra.mxu0 %v4971
    %5100 = vmatprep.subr.mxu0 0.0
    %5101 = vmatpush2.msra.mxu0 %v4970
    %5102 = vmatprep.subr.mxu0 0.0
    %5103 = vmatpush2.msra.mxu0 %v4969
    %5104 = vmatprep.subr.mxu0 0.0
    %5105 = vmatpush2.msra.mxu0 %v4968
    %5106 = vmatprep.subr.mxu0 0.0
    %5107 = vmatpush2.msra.mxu0 %v4967
    %5108 = vmatprep.subr.mxu0 0.0
    %5109 = vmatpush2.msra.mxu0 %v4966
    %5110 = vmatprep.subr.mxu0 0.0
    %5111 = vmatpush2.msra.mxu0 %v4965
    %5112 = vmatprep.subr.mxu0 0.0
    %5113 = vmatpush2.msra.mxu0 %v4964
    %5114 = vmatprep.mubr.f32.mxu0 %v4914
    %5115 = vmatmul.mubr.f32.gmra.mxu0 %v4912
    %v5116 = vpop.f32.mrf.mxu0
    %v5117 = vadd.f32 %v5047, %v5116
    %v5118 = vpop.f32.mrf.mxu0
    %5119 = vdwg.mxu0
    %5120 = vst [vmem:[#allocation13] sm:$0x3] %v5117
    // Predicated region
    $region58: #{embedding_forward.1} parent=1 // pred_check
      _
    $region59: #{embedding_forward.1} parent=1 // pred_check_branch
      %5122 = sbr.rel (0) target = $region61
    $region60: #{embedding_forward.1} parent=1 // pred_region
      %s5124 = ssub.s32 32, 32
      %5125 = vsyncadd [#allocation4], %s5124
      %s5127 = sshll.u32 [#allocation13], 4
      %s5128 = int_to_ptr.vmem [resolvable:$true] %s5127
      %5130 = dma.vmem_to_hbm [thread:$0]  %s5128, 32, %s8, [#allocation4]
    $region61: #{embedding_forward.1} parent=1 // pred_fallthru
      _
    // Predicated region
    $region62: #{embedding_forward.1} parent=1 // pred_check
      _
    $region63: #{embedding_forward.1} parent=1 // pred_check_branch
      %5132 = sbr.rel (0) target = $region65
    $region64: #{embedding_forward.1} parent=1 // pred_region
      %5133 = dma.done [#allocation4], 32
    $region65: #{embedding_forward.1} parent=1 // pred_fallthru
      _
    %5134 = vsyncpa [#allocation3], 1
    %5135 = vsyncpa [#allocation6], 1
    %5136 = vsyncpa [#allocation9], 1
    %5137 = vsyncpa [#allocation12], 1
    %5138 = vsyncpa [#allocation4], 1

</llo_original>
